<compile_context>
chip_gen: v7x
topology: tpu7x:2x2x1
jax: 0.10.0
libtpu: 0.0.40
codegen_flags: <defaults>
</compile_context>

<pallas_src>
import functools
import math

import jax
import jax.numpy as jnp
from jax.experimental import pallas as pl
from jax.experimental.pallas import tpu as pltpu


# ---------------------------------------------------------------------------
# In-kernel helpers
# ---------------------------------------------------------------------------

def _layernorm_padded(v, g, b, d_true, eps=1e-5):
    """LayerNorm over the last (padded) dim, normalizing over the true d_model.

    Relies on padded columns of `v` being exactly zero, so sums over the padded
    width equal sums over the true width.  g/b are zero in padded columns, which
    keeps padded columns exactly zero in the output.
    """
    inv_d = 1.0 / d_true
    s1 = jnp.sum(v, axis=-1, keepdims=True)
    s2 = jnp.sum(v * v, axis=-1, keepdims=True)
    mu = s1 * inv_d
    var = s2 * inv_d - mu * mu
    return (v - mu) * jax.lax.rsqrt(var + eps) * g + b


# ---------------------------------------------------------------------------
# Fused decoder kernel (all layers + final LayerNorm)
# ---------------------------------------------------------------------------

def fused_decoder_kernel(x_ref, enc_ref, sbias_ref, cbias_ref,
                         sw_ref, sb_ref, cw_ref, cb_ref,
                         w1_ref, b1_ref, w2_ref, b2_ref,
                         lng_ref, lnb_ref, fg_ref, fb_ref,
                         o_ref, x_scr,
                         *, num_heads, d_model):
    """One grid step == one decoder layer.

    x_ref:    (BT, Dp)  f32   embedded target (read at layer 0 only)
    enc_ref:  (BS, Dp)  bf16  encoder output (padded)
    sbias:    (BT, BT)  f32   additive self-attn bias (0 / -1e9, block-diag over batch)
    cbias:    (BT, BS)  f32   additive cross-attn bias
    sw/sb:    (1,Dp,4Dp) bf16 / (1,1,4Dp) f32   self-attn [Wq|Wk|Wv|Wo] (+biases),
                                                1/sqrt(hd) folded into Wq,bq
    cw/cb:    same layout, cross-attention
    w1/b1/w2/b2: FFN params (padded)
    lng/lnb:  (1,3,1,Dp)  LayerNorm gamma/beta (zero in padded columns)
    fg/fb:    (1,Dp)      final LayerNorm gamma/beta
    o_ref:    (BT, Dp) f32 output (written at the last layer)
    x_scr:    (BT, Dp) f32 VMEM carry of the activation across layers
    """
    layer = pl.program_id(0)
    Dp = x_ref.shape[-1]
    hd = d_model // num_heads

    @pl.when(layer == 0)
    def _():
        x_scr[...] = x_ref[...]

    x = x_scr[...]                       # (BT, Dp) f32 carry
    enc = enc_ref[...]                   # (BS, Dp) bf16

    def mha(xq_b16, xkv_b16, w_ref, b_ref, bias, fused_qkv):
        # Projections: bf16 operands, f32 MXU accumulation.  W columns are laid out
        # [Wq | Wk | Wv | Wo], so self-attn does a single (BT, Dp) x (Dp, 3*Dp) matmul.
        if fused_qkv:
            qkv = (jnp.dot(xq_b16, w_ref[0, :, :3 * Dp],
                           preferred_element_type=jnp.float32)
                   + b_ref[0, :, :3 * Dp])
            q = qkv[:, :Dp]
            k = qkv[:, Dp:2 * Dp]
            v = qkv[:, 2 * Dp:3 * Dp]
        else:
            q = (jnp.dot(xq_b16, w_ref[0, :, :Dp],
                         preferred_element_type=jnp.float32)
                 + b_ref[0, :, :Dp])
            kv = (jnp.dot(xkv_b16, w_ref[0, :, Dp:3 * Dp],
                          preferred_element_type=jnp.float32)
                  + b_ref[0, :, Dp:3 * Dp])
            k = kv[:, :Dp]
            v = kv[:, Dp:2 * Dp]
        # Head-batched tensors (H, N, hd); only the true d_model columns carry data.
        q_h = jnp.stack([q[:, i * hd:(i + 1) * hd] for i in range(num_heads)]
                        ).astype(jnp.bfloat16)
        k_h = jnp.stack([k[:, i * hd:(i + 1) * hd] for i in range(num_heads)]
                        ).astype(jnp.bfloat16)
        v_h = jnp.stack([v[:, i * hd:(i + 1) * hd] for i in range(num_heads)]
                        ).astype(jnp.bfloat16)
        # (H, Nq, Nk) scores; scale already folded into Wq, mask is an additive bias.
        s = jnp.einsum('hqd,hkd->hqk', q_h, k_h, preferred_element_type=jnp.float32)
        s = s + bias[None, :, :]
        s = s - jnp.max(s, axis=-1, keepdims=True)
        p = jnp.exp(s)
        p = p * pl.reciprocal(jnp.sum(p, axis=-1, keepdims=True), approx=True)
        o_h = jnp.einsum('hqk,hkd->hqd', p.astype(jnp.bfloat16), v_h,
                         preferred_element_type=jnp.float32)      # (H, Nq, hd)
        o = jnp.concatenate([o_h[i] for i in range(num_heads)], axis=-1)  # (Nq, D)
        wo = w_ref[0, :d_model, 3 * Dp:]                           # (D, Dp)
        return (jnp.dot(o.astype(jnp.bfloat16), wo,
                        preferred_element_type=jnp.float32)
                + b_ref[0, :, 3 * Dp:])

    # 1) masked self-attention + residual + LN
    xb = x.astype(jnp.bfloat16)
    x = _layernorm_padded(x + mha(xb, xb, sw_ref, sb_ref, sbias_ref[...], True),
                          lng_ref[0, 0], lnb_ref[0, 0], d_model)
    # 2) cross-attention over the encoder output + residual + LN
    xb = x.astype(jnp.bfloat16)
    x = _layernorm_padded(x + mha(xb, enc, cw_ref, cb_ref, cbias_ref[...], False),
                          lng_ref[0, 1], lnb_ref[0, 1], d_model)
    # 3) position-wise FFN (ReLU) + residual + LN
    xb = x.astype(jnp.bfloat16)
    h = jnp.maximum(
        jnp.dot(xb, w1_ref[0], preferred_element_type=jnp.float32) + b1_ref[0], 0.0)
    ffn = jnp.dot(h.astype(jnp.bfloat16), w2_ref[0],
                  preferred_element_type=jnp.float32) + b2_ref[0]
    x = _layernorm_padded(x + ffn, lng_ref[0, 2], lnb_ref[0, 2], d_model)

    x_scr[...] = x

    @pl.when(layer == pl.num_programs(0) - 1)
    def _():
        o_ref[...] = _layernorm_padded(x, fg_ref[...], fb_ref[...], d_model)


def fused_transformer_decoder(x, enc, sbias, cbias, p, *,
                              num_heads, d_model, num_layers):
    BT, Dp = x.shape
    BS = enc.shape[0]
    Fp = p["w1"].shape[-1]
    Wp = p["sw"].shape[-1]          # 4 * Dp
    kernel = functools.partial(fused_decoder_kernel,
                               num_heads=num_heads, d_model=d_model)
    const2 = lambda l: (0, 0)
    lmap3 = lambda l: (l, 0, 0)
    lmap4 = lambda l: (l, 0, 0, 0)
    return pl.pallas_call(
        kernel,
        out_shape=jax.ShapeDtypeStruct((BT, Dp), jnp.float32),
        grid=(num_layers,),
        in_specs=[
            pl.BlockSpec((BT, Dp), const2),            # x (embedded, padded)  f32
            pl.BlockSpec((BS, Dp), const2),            # enc                  bf16
            pl.BlockSpec((BT, BT), const2),            # self-attn bias        f32
            pl.BlockSpec((BT, BS), const2),            # cross-attn bias       f32
            pl.BlockSpec((1, Dp, Wp), lmap3),          # self-attn [Wq|Wk|Wv|Wo] bf16
            pl.BlockSpec((1, 1, Wp), lmap3),           # self-attn biases      f32
            pl.BlockSpec((1, Dp, Wp), lmap3),          # cross-attn weights   bf16
            pl.BlockSpec((1, 1, Wp), lmap3),           # cross-attn biases     f32
            pl.BlockSpec((1, Dp, Fp), lmap3),          # W1                   bf16
            pl.BlockSpec((1, 1, Fp), lmap3),           # b1                    f32
            pl.BlockSpec((1, Fp, Dp), lmap3),          # W2                   bf16
            pl.BlockSpec((1, 1, Dp), lmap3),           # b2                    f32
            pl.BlockSpec((1, 3, 1, Dp), lmap4),        # LN gamma              f32
            pl.BlockSpec((1, 3, 1, Dp), lmap4),        # LN beta               f32
            pl.BlockSpec((1, Dp), const2),             # final LN gamma        f32
            pl.BlockSpec((1, Dp), const2),             # final LN beta         f32
        ],
        out_specs=pl.BlockSpec((BT, Dp), const2),
        scratch_shapes=[pltpu.VMEM((BT, Dp), jnp.float32)],
        input_output_aliases={0: 0},
        compiler_params=pltpu.CompilerParams(dimension_semantics=("arbitrary",)),
    )(x, enc, sbias, cbias,
      p["sw"], p["sb"], p["cw"], p["cb"],
      p["w1"], p["b1"], p["w2"], p["b2"],
      p["lng"], p["lnb"], p["fg"], p["fb"])


# ---------------------------------------------------------------------------
# Host-side glue: masks -> additive biases, weight packing, embedding
# ---------------------------------------------------------------------------

def build_attn_bias(mask, batch, t_q, t_k):
    """Additive attention bias (0 keep / -1e9 drop) for batch-folded rows.

    Rows index (b, t_q) flattened, columns index (b, t_k) flattened.  Cross-batch
    pairs are always dropped (block-diagonal), so the whole batch can share one
    set of attention matmuls."""
    rq = jnp.arange(batch * t_q)
    rk = jnp.arange(batch * t_k)
    bq, tq = rq // t_q, rq % t_q
    bk, tk = rk // t_k, rk % t_k
    keep = bq[:, None] == bk[None, :]
    if mask is not None:
        m = mask[:, 0]                                    # (B, t_q, t_k)
        keep = keep & (m[bq[:, None], tq[:, None], tk[None, :]] != 0)
    return jnp.where(keep, 0.0, -1e9).astype(jnp.float32)


def pack_params(layer_params, final_g, final_b, *, d_model, num_heads, d_pad, f_pad):
    """Pad/stack per-layer parameters into the fused-kernel layout.

    Weights are zero-padded to lane-dense (multiple-of-128) widths and stored in
    bf16; biases and LayerNorm params stay f32.  LN gamma/beta are padded with
    ZEROS so padded activation columns remain exactly zero.  The 1/sqrt(head_dim)
    attention scale is folded into Wq / bq.  Attention weights are packed
    side-by-side along the lane dim as [Wq | Wk | Wv | Wo] -> (Dp, 4*Dp) so the
    kernel can fuse the Q/K/V projection matmuls."""
    hd = d_model // num_heads
    scale = 1.0 / math.sqrt(hd)

    def pad2(a, rows, cols):
        return jnp.zeros((rows, cols), jnp.float32).at[:a.shape[0], :a.shape[1]].set(a)

    def pack_attn(w, b):
        w = w.at[0].multiply(scale)        # fold scale into Wq
        b = b.at[0].multiply(scale)        # ... and bq
        wp = jnp.concatenate([pad2(w[i], d_pad, d_pad) for i in range(4)], axis=1)
        bp = jnp.concatenate([pad2(b[i][None, :], 1, d_pad) for i in range(4)], axis=1)
        return wp, bp                      # (Dp, 4Dp), (1, 4Dp)

    sw, sb, cw, cb, w1, b1, w2, b2, lng, lnb = ([] for _ in range(10))
    for p in layer_params:
        swp, sbp = pack_attn(p["sw"], p["sb"]); sw.append(swp); sb.append(sbp)
        cwp, cbp = pack_attn(p["cw"], p["cb"]); cw.append(cwp); cb.append(cbp)
        w1.append(pad2(p["w1"], d_pad, f_pad))
        b1.append(pad2(p["b1"], 1, f_pad))
        w2.append(pad2(p["w2"], f_pad, d_pad))
        b2.append(pad2(p["b2"], 1, d_pad))
        lng.append(jnp.stack([pad2(p["lng"][i][None, :], 1, d_pad) for i in range(3)]))
        lnb.append(jnp.stack([pad2(p["lnb"][i][None, :], 1, d_pad) for i in range(3)]))

    return dict(
        sw=jnp.stack(sw).astype(jnp.bfloat16), sb=jnp.stack(sb)[:, None, :, :].squeeze(1),
        cw=jnp.stack(cw).astype(jnp.bfloat16), cb=jnp.stack(cb)[:, None, :, :].squeeze(1),
        w1=jnp.stack(w1).astype(jnp.bfloat16), b1=jnp.stack(b1),
        w2=jnp.stack(w2).astype(jnp.bfloat16), b2=jnp.stack(b2),
        lng=jnp.stack(lng), lnb=jnp.stack(lnb),
        fg=pad2(final_g[None, :], 1, d_pad),
        fb=pad2(final_b[None, :], 1, d_pad),
    )


def make_forward(*, num_heads, d_model, num_layers, d_pad):
    def forward(tgt, enc_output, tgt_mask, memory_mask, emb_pad, pe_pad, packed):
        B, T = tgt.shape
        S = enc_output.shape[1]
        # TransformerEmbedding: token embedding * sqrt(d_model) + positional encoding
        # (dropout identity in eval).  emb/pe are already zero-padded to d_pad lanes.
        x = jnp.take(emb_pad, tgt, axis=0) * math.sqrt(d_model) + pe_pad[:T][None, :, :]
        x = x.reshape(B * T, d_pad).astype(jnp.float32)
        enc = jnp.pad(enc_output, ((0, 0), (0, 0), (0, d_pad - d_model)))
        enc = enc.reshape(B * S, d_pad).astype(jnp.bfloat16)
        sbias = build_attn_bias(tgt_mask, B, T, T)
        cbias = build_attn_bias(memory_mask, B, T, S)
        out = fused_transformer_decoder(
            x, enc, sbias, cbias, packed,
            num_heads=num_heads, d_model=d_model, num_layers=num_layers)
        return out[:, :d_model].reshape(B, T, d_model)
    return jax.jit(forward)


# ---------------------------------------------------------------------------
# Parameter construction (deterministic, synthetic) + sinusoidal PE
# ---------------------------------------------------------------------------

def sinusoidal_pe(max_len, d_model):
    pos = jnp.arange(max_len, dtype=jnp.float32)[:, None]
    i = jnp.arange(0, d_model, 2, dtype=jnp.float32)[None, :]
    angle = pos / jnp.power(10000.0, i / d_model)
    pe = jnp.zeros((max_len, d_model), jnp.float32)
    pe = pe.at[:, 0::2].set(jnp.sin(angle))
    pe = pe.at[:, 1::2].set(jnp.cos(angle))
    return pe


def make_params(key, vocab_size, d_model, d_ffn, num_layers, padding_idx=0):
    keys = jax.random.split(key, 2 + num_layers)
    emb = 0.02 * jax.random.normal(keys[0], (vocab_size, d_model), jnp.float32)
    emb = emb.at[padding_idx].set(0.0)
    layers = []
    for li in range(num_layers):
        ks = jax.random.split(keys[2 + li], 8)
        s = 0.05
        layers.append(dict(
            sw=s * jax.random.normal(ks[0], (4, d_model, d_model), jnp.float32),
            sb=jnp.zeros((4, d_model), jnp.float32),
            cw=s * jax.random.normal(ks[1], (4, d_model, d_model), jnp.float32),
            cb=jnp.zeros((4, d_model), jnp.float32),
            w1=s * jax.random.normal(ks[2], (d_model, d_ffn), jnp.float32),
            b1=jnp.zeros((1, d_ffn), jnp.float32),
            w2=s * jax.random.normal(ks[3], (d_ffn, d_model), jnp.float32),
            b2=jnp.zeros((1, d_model), jnp.float32),
            lng=jnp.ones((3, d_model), jnp.float32),
            lnb=jnp.zeros((3, d_model), jnp.float32),
        ))
    return emb, layers, jnp.ones((d_model,), jnp.float32), jnp.zeros((d_model,), jnp.float32)


# ---------------------------------------------------------------------------
# Pure-JAX reference (original module semantics, f32, unpadded)
# ---------------------------------------------------------------------------

def reference_forward(tgt, enc, tgt_mask, mem_mask, emb, pe, layers, fg, fb,
                      num_heads, d_model):
    def ln(v, g, b, eps=1e-5):
        mu = v.mean(-1, keepdims=True)
        var = ((v - mu) ** 2).mean(-1, keepdims=True)
        return (v - mu) / jnp.sqrt(var + eps) * g + b

    def mha(xq, xkv, w, b, mask):
        q = xq @ w[0] + b[0]
        k = xkv @ w[1] + b[1]
        v = xkv @ w[2] + b[2]
        B, Tq, D = q.shape
        hd = D // num_heads
        qh = q.reshape(B, Tq, num_heads, hd).transpose(0, 2, 1, 3)
        kh = k.reshape(B, -1, num_heads, hd).transpose(0, 2, 1, 3)
        vh = v.reshape(B, -1, num_heads, hd).transpose(0, 2, 1, 3)
        s = jnp.einsum('bhqd,bhkd->bhqk', qh, kh) / math.sqrt(hd)
        s = jnp.where(mask == 0, -1e9, s)
        p = jax.nn.softmax(s, axis=-1)
        o = jnp.einsum('bhqk,bhkd->bhqd', p, vh).transpose(0, 2, 1, 3).reshape(B, Tq, D)
        return o @ w[3] + b[3]

    T = tgt.shape[1]
    x = jnp.take(emb, tgt, axis=0) * math.sqrt(d_model) + pe[:T][None]
    for p in layers:
        x = ln(x + mha(x, x, p["sw"], p["sb"], tgt_mask), p["lng"][0], p["lnb"][0])
        x = ln(x + mha(x, enc, p["cw"], p["cb"], mem_mask), p["lng"][1], p["lnb"][1])
        h = jax.nn.relu(x @ p["w1"] + p["b1"])
        x = ln(x + h @ p["w2"] + p["b2"], p["lng"][2], p["lnb"][2])
    return ln(x, fg, fb)


# ---------------------------------------------------------------------------
# Main
# ---------------------------------------------------------------------------

if __name__ == "__main__":
    vocab_size, d_model, num_heads, d_ffn, num_layers = 50, 32, 4, 64, 2
    B, T, S, max_len, padding_idx = 2, 8, 8, 64, 0
    D_PAD = ((d_model + 127) // 128) * 128      # 128
    F_PAD = ((d_ffn + 127) // 128) * 128        # 128

    key = jax.random.PRNGKey(0)
    k_tgt, k_enc, k_par = jax.random.split(key, 3)

    tgt = jax.random.randint(k_tgt, (B, T), 0, vocab_size)
    enc_output = jax.random.normal(k_enc, (B, S, d_model), jnp.float32)

    # causal self-attention mask (1 = keep, 0 = masked), full memory mask
    causal = jnp.tril(jnp.ones((T, T), jnp.float32))
    tgt_mask = jnp.broadcast_to(causal, (B, 1, T, T))
    memory_mask = jnp.ones((B, 1, T, S), jnp.float32)

    emb_table, layer_params, final_g, final_b = make_params(
        k_par, vocab_size, d_model, d_ffn, num_layers, padding_idx)
    pe = sinusoidal_pe(max_len, d_model)

    # host-side padding of embedding table / PE to the lane-dense width
    emb_pad = jnp.zeros((vocab_size, D_PAD), jnp.float32).at[:, :d_model].set(emb_table)
    pe_pad = jnp.zeros((max_len, D_PAD), jnp.float32).at[:, :d_model].set(pe)
    packed = pack_params(layer_params, final_g, final_b,
                         d_model=d_model, num_heads=num_heads,
                         d_pad=D_PAD, f_pad=F_PAD)

    forward = make_forward(num_heads=num_heads, d_model=d_model,
                           num_layers=num_layers, d_pad=D_PAD)
    out = forward(tgt, enc_output, tgt_mask, memory_mask, emb_pad, pe_pad, packed)
    out = jax.block_until_ready(out)

    assert out.shape == (B, T, d_model)
    assert jnp.all(jnp.isfinite(out))

    # correctness check against a pure-JAX f32 reference (kernel uses bf16 matmul
    # operands + approx reciprocal, so allow a generous tolerance)
    ref = reference_forward(tgt, enc_output, tgt_mask, memory_mask,
                            emb_table, pe, layer_params, final_g, final_b,
                            num_heads, d_model)
    err = float(jnp.max(jnp.abs(out - ref)))
    assert err < 0.15, f"max abs error vs reference: {err}"

    print("KERNEL_OK")
</pallas_src>

<mosaic_0001>
module attributes {stable_mosaic.version = 11 : i64} {
  func.func @fused_decoder_kernel(%arg0: i32, %arg1: memref<16x128xf32, #tpu.memory_space<vmem>>, %arg2: memref<16x128xbf16, #tpu.memory_space<vmem>>, %arg3: memref<16x16xf32, #tpu.memory_space<vmem>>, %arg4: memref<16x16xf32, #tpu.memory_space<vmem>>, %arg5: memref<1x128x512xbf16, #tpu.memory_space<vmem>>, %arg6: memref<1x1x512xf32, #tpu.memory_space<vmem>>, %arg7: memref<1x128x512xbf16, #tpu.memory_space<vmem>>, %arg8: memref<1x1x512xf32, #tpu.memory_space<vmem>>, %arg9: memref<1x128x128xbf16, #tpu.memory_space<vmem>>, %arg10: memref<1x1x128xf32, #tpu.memory_space<vmem>>, %arg11: memref<1x128x128xbf16, #tpu.memory_space<vmem>>, %arg12: memref<1x1x128xf32, #tpu.memory_space<vmem>>, %arg13: memref<1x3x1x128xf32, #tpu.memory_space<vmem>>, %arg14: memref<1x3x1x128xf32, #tpu.memory_space<vmem>>, %arg15: memref<1x128xf32, #tpu.memory_space<vmem>>, %arg16: memref<1x128xf32, #tpu.memory_space<vmem>>, %arg17: memref<16x128xf32, #tpu.memory_space<vmem>>, %arg18: memref<16x128xf32, #tpu.memory_space<vmem>>) attributes {dimension_semantics = [#tpu.dimension_semantics<arbitrary>], iteration_bounds = array<i64: 2>, scalar_prefetch = 0 : i64, scratch_operands = 1 : i64, tpu.core_type = #tpu.core_type<tc>, window_params = [{pipeline_mode = #tpu.pipeline_mode<synchronous>, transform_indices = @transform_0, window_bounds = array<i64: 16, 128>}, {pipeline_mode = #tpu.pipeline_mode<synchronous>, transform_indices = @transform_1, window_bounds = array<i64: 16, 128>}, {pipeline_mode = #tpu.pipeline_mode<synchronous>, transform_indices = @transform_2, window_bounds = array<i64: 16, 16>}, {pipeline_mode = #tpu.pipeline_mode<synchronous>, transform_indices = @transform_3, window_bounds = array<i64: 16, 16>}, {transform_indices = @transform_4, window_bounds = array<i64: 1, 128, 512>}, {transform_indices = @transform_5, window_bounds = array<i64: 1, 1, 512>}, {transform_indices = @transform_6, window_bounds = array<i64: 1, 128, 512>}, {transform_indices = @transform_7, window_bounds = array<i64: 1, 1, 512>}, {transform_indices = @transform_8, window_bounds = array<i64: 1, 128, 128>}, {transform_indices = @transform_9, window_bounds = array<i64: 1, 1, 128>}, {transform_indices = @transform_10, window_bounds = array<i64: 1, 128, 128>}, {transform_indices = @transform_11, window_bounds = array<i64: 1, 1, 128>}, {transform_indices = @transform_12, window_bounds = array<i64: 1, 3, 1, 128>}, {transform_indices = @transform_13, window_bounds = array<i64: 1, 3, 1, 128>}, {pipeline_mode = #tpu.pipeline_mode<synchronous>, transform_indices = @transform_14, window_bounds = array<i64: 1, 128>}, {pipeline_mode = #tpu.pipeline_mode<synchronous>, transform_indices = @transform_15, window_bounds = array<i64: 1, 128>}, {pipeline_mode = #tpu.pipeline_mode<synchronous>, transform_indices = @transform_16, window_bounds = array<i64: 16, 128>}]} {
    %c0_i32 = arith.constant 0 : i32
    %0 = arith.cmpi eq, %arg0, %c0_i32 : i32
    %1 = arith.extui %0 : i1 to i32
    %c0_i32_0 = arith.constant 0 : i32
    %2 = arith.cmpi ne, %1, %c0_i32_0 : i32
    scf.if %2 {
      %c0_103 = arith.constant 0 : index
      %c0_104 = arith.constant 0 : index
      %264 = vector.load %arg1[%c0_103, %c0_104] : memref<16x128xf32, #tpu.memory_space<vmem>>, vector<16x128xf32>
      %c0_105 = arith.constant 0 : index
      %c0_106 = arith.constant 0 : index
      %265 = vector.load %arg18[%c0_105, %c0_106] : memref<16x128xf32, #tpu.memory_space<vmem>>, vector<16x128xf32>
      tpu.vector_store %arg18[%c0_105, %c0_106], %264 {strides = array<i32>} : memref<16x128xf32, #tpu.memory_space<vmem>>, vector<16x128xf32>,
    } else {
    }
    %c0 = arith.constant 0 : index
    %c0_1 = arith.constant 0 : index
    %3 = vector.load %arg18[%c0, %c0_1] : memref<16x128xf32, #tpu.memory_space<vmem>>, vector<16x128xf32>
    %c0_2 = arith.constant 0 : index
    %c0_3 = arith.constant 0 : index
    %4 = vector.load %arg2[%c0_2, %c0_3] : memref<16x128xbf16, #tpu.memory_space<vmem>>, vector<16x128xbf16>
    %5 = arith.truncf %3 : vector<16x128xf32> to vector<16x128xbf16>
    %c0_4 = arith.constant 0 : index
    %c0_5 = arith.constant 0 : index
    %6 = vector.load %arg3[%c0_4, %c0_5] : memref<16x16xf32, #tpu.memory_space<vmem>>, vector<16x16xf32>
    %c0_6 = arith.constant 0 : index
    %c0_7 = arith.constant 0 : index
    %c0_8 = arith.constant 0 : index
    %7 = vector.load %arg5[%c0_6, %c0_7, %c0_8] : memref<1x128x512xbf16, #tpu.memory_space<vmem>>, vector<1x128x384xbf16>
    %8 = vector.shape_cast %7 : vector<1x128x384xbf16> to vector<128x384xbf16>
    %cst = arith.constant dense<0.000000e+00> : vector<16x384xf32>
    %9 = tpu.matmul %5, %8, %cst {dimension_numbers = #tpu.dot_dimension_numbers<[1], [0], [0], [1], [0, 0, 1, 1], [], []>} : vector<16x128xbf16>, vector<128x384xbf16>, vector<16x384xf32> -> vector<16x384xf32>
    %c0_9 = arith.constant 0 : index
    %c0_10 = arith.constant 0 : index
    %c0_11 = arith.constant 0 : index
    %10 = vector.load %arg6[%c0_9, %c0_10, %c0_11] : memref<1x1x512xf32, #tpu.memory_space<vmem>>, vector<1x1x384xf32>
    %11 = vector.shape_cast %10 : vector<1x1x384xf32> to vector<1x384xf32>
    %12 = vector.broadcast %11 : vector<1x384xf32> to vector<16x384xf32>
    %13 = arith.addf %9, %12 : vector<16x384xf32>
    %14 = vector.extract_strided_slice %13 {offsets = [0, 0], sizes = [16, 128], strides = [1, 1]} : vector<16x384xf32> to vector<16x128xf32>
    %15 = vector.extract_strided_slice %13 {offsets = [0, 128], sizes = [16, 128], strides = [1, 1]} : vector<16x384xf32> to vector<16x128xf32>
    %16 = vector.extract_strided_slice %13 {offsets = [0, 256], sizes = [16, 128], strides = [1, 1]} : vector<16x384xf32> to vector<16x128xf32>
    %17 = vector.extract_strided_slice %14 {offsets = [0, 0], sizes = [16, 8], strides = [1, 1]} : vector<16x128xf32> to vector<16x8xf32>
    %18 = vector.extract_strided_slice %14 {offsets = [0, 8], sizes = [16, 8], strides = [1, 1]} : vector<16x128xf32> to vector<16x8xf32>
    %19 = vector.extract_strided_slice %14 {offsets = [0, 16], sizes = [16, 8], strides = [1, 1]} : vector<16x128xf32> to vector<16x8xf32>
    %20 = vector.extract_strided_slice %14 {offsets = [0, 24], sizes = [16, 8], strides = [1, 1]} : vector<16x128xf32> to vector<16x8xf32>
    %21 = vector.shape_cast %17 : vector<16x8xf32> to vector<1x16x8xf32>
    %22 = vector.shape_cast %18 : vector<16x8xf32> to vector<1x16x8xf32>
    %23 = vector.shape_cast %19 : vector<16x8xf32> to vector<1x16x8xf32>
    %24 = vector.shape_cast %20 : vector<16x8xf32> to vector<1x16x8xf32>
    %25 = tpu.concatenate %21, %22, %23, %24 in 0 : vector<1x16x8xf32>, vector<1x16x8xf32>, vector<1x16x8xf32>, vector<1x16x8xf32> -> vector<4x16x8xf32>
    %26 = arith.truncf %25 : vector<4x16x8xf32> to vector<4x16x8xbf16>
    %27 = vector.extract_strided_slice %15 {offsets = [0, 0], sizes = [16, 8], strides = [1, 1]} : vector<16x128xf32> to vector<16x8xf32>
    %28 = vector.extract_strided_slice %15 {offsets = [0, 8], sizes = [16, 8], strides = [1, 1]} : vector<16x128xf32> to vector<16x8xf32>
    %29 = vector.extract_strided_slice %15 {offsets = [0, 16], sizes = [16, 8], strides = [1, 1]} : vector<16x128xf32> to vector<16x8xf32>
    %30 = vector.extract_strided_slice %15 {offsets = [0, 24], sizes = [16, 8], strides = [1, 1]} : vector<16x128xf32> to vector<16x8xf32>
    %31 = vector.shape_cast %27 : vector<16x8xf32> to vector<1x16x8xf32>
    %32 = vector.shape_cast %28 : vector<16x8xf32> to vector<1x16x8xf32>
    %33 = vector.shape_cast %29 : vector<16x8xf32> to vector<1x16x8xf32>
    %34 = vector.shape_cast %30 : vector<16x8xf32> to vector<1x16x8xf32>
    %35 = tpu.concatenate %31, %32, %33, %34 in 0 : vector<1x16x8xf32>, vector<1x16x8xf32>, vector<1x16x8xf32>, vector<1x16x8xf32> -> vector<4x16x8xf32>
    %36 = arith.truncf %35 : vector<4x16x8xf32> to vector<4x16x8xbf16>
    %37 = vector.extract_strided_slice %16 {offsets = [0, 0], sizes = [16, 8], strides = [1, 1]} : vector<16x128xf32> to vector<16x8xf32>
    %38 = vector.extract_strided_slice %16 {offsets = [0, 8], sizes = [16, 8], strides = [1, 1]} : vector<16x128xf32> to vector<16x8xf32>
    %39 = vector.extract_strided_slice %16 {offsets = [0, 16], sizes = [16, 8], strides = [1, 1]} : vector<16x128xf32> to vector<16x8xf32>
    %40 = vector.extract_strided_slice %16 {offsets = [0, 24], sizes = [16, 8], strides = [1, 1]} : vector<16x128xf32> to vector<16x8xf32>
    %41 = vector.shape_cast %37 : vector<16x8xf32> to vector<1x16x8xf32>
    %42 = vector.shape_cast %38 : vector<16x8xf32> to vector<1x16x8xf32>
    %43 = vector.shape_cast %39 : vector<16x8xf32> to vector<1x16x8xf32>
    %44 = vector.shape_cast %40 : vector<16x8xf32> to vector<1x16x8xf32>
    %45 = tpu.concatenate %41, %42, %43, %44 in 0 : vector<1x16x8xf32>, vector<1x16x8xf32>, vector<1x16x8xf32>, vector<1x16x8xf32> -> vector<4x16x8xf32>
    %46 = arith.truncf %45 : vector<4x16x8xf32> to vector<4x16x8xbf16>
    "tpu.trace_start"() <{level = 10 : i32, message = "hqd,hkd->hqk"}> : () -> ()
    %cst_12 = arith.constant dense<0.000000e+00> : vector<4x16x16xf32>
    %47 = tpu.matmul %26, %36, %cst_12 {dimension_numbers = #tpu.dot_dimension_numbers<[2], [2], [1], [1], [0, 0, 0, 1, 1, 1], [0], [0]>} : vector<4x16x8xbf16>, vector<4x16x8xbf16>, vector<4x16x16xf32> -> vector<4x16x16xf32>
    "tpu.trace_stop"() : () -> ()
    %48 = vector.shape_cast %6 : vector<16x16xf32> to vector<1x16x16xf32>
    %49 = vector.broadcast %48 : vector<1x16x16xf32> to vector<4x16x16xf32>
    %50 = arith.addf %47, %49 : vector<4x16x16xf32>
    %cst_13 = arith.constant dense<0xFF800000> : vector<4x16xf32>
    %51 = vector.multi_reduction <maximumf>, %50, %cst_13 [2] : vector<4x16x16xf32> to vector<4x16xf32>
    %52 = vector.shape_cast %51 : vector<4x16xf32> to vector<4x16x1xf32>
    %53 = vector.broadcast %52 : vector<4x16x1xf32> to vector<4x16x16xf32>
    %54 = arith.subf %50, %53 : vector<4x16x16xf32>
    %55 = math.exp %54 : vector<4x16x16xf32>
    %cst_14 = arith.constant dense<0.000000e+00> : vector<4x16xf32>
    %56 = vector.multi_reduction <add>, %55, %cst_14 [2] : vector<4x16x16xf32> to vector<4x16xf32>
    %57 = vector.shape_cast %56 : vector<4x16xf32> to vector<4x16x1xf32>
    %58 = tpu.reciprocal %57 {approx = true} : vector<4x16x1xf32> -> vector<4x16x1xf32>
    %59 = vector.broadcast %58 : vector<4x16x1xf32> to vector<4x16x16xf32>
    %60 = arith.mulf %55, %59 : vector<4x16x16xf32>
    %61 = arith.truncf %60 : vector<4x16x16xf32> to vector<4x16x16xbf16>
    "tpu.trace_start"() <{level = 10 : i32, message = "hqk,hkd->hqd"}> : () -> ()
    %cst_15 = arith.constant dense<0.000000e+00> : vector<4x16x8xf32>
    %62 = tpu.matmul %61, %46, %cst_15 {dimension_numbers = #tpu.dot_dimension_numbers<[2], [1], [1], [2], [0, 0, 0, 1, 1, 2], [0], [0]>} : vector<4x16x16xbf16>, vector<4x16x8xbf16>, vector<4x16x8xf32> -> vector<4x16x8xf32>
    "tpu.trace_stop"() : () -> ()
    %63 = vector.extract_strided_slice %62 {offsets = [0, 0, 0], sizes = [1, 16, 8], strides = [1, 1, 1]} : vector<4x16x8xf32> to vector<1x16x8xf32>
    %64 = vector.shape_cast %63 : vector<1x16x8xf32> to vector<16x8xf32>
    %65 = vector.extract_strided_slice %62 {offsets = [1, 0, 0], sizes = [1, 16, 8], strides = [1, 1, 1]} : vector<4x16x8xf32> to vector<1x16x8xf32>
    %66 = vector.shape_cast %65 : vector<1x16x8xf32> to vector<16x8xf32>
    %67 = vector.extract_strided_slice %62 {offsets = [2, 0, 0], sizes = [1, 16, 8], strides = [1, 1, 1]} : vector<4x16x8xf32> to vector<1x16x8xf32>
    %68 = vector.shape_cast %67 : vector<1x16x8xf32> to vector<16x8xf32>
    %69 = vector.extract_strided_slice %62 {offsets = [3, 0, 0], sizes = [1, 16, 8], strides = [1, 1, 1]} : vector<4x16x8xf32> to vector<1x16x8xf32>
    %70 = vector.shape_cast %69 : vector<1x16x8xf32> to vector<16x8xf32>
    %71 = tpu.concatenate %64, %66, %68, %70 in 1 : vector<16x8xf32>, vector<16x8xf32>, vector<16x8xf32>, vector<16x8xf32> -> vector<16x32xf32>
    %c0_16 = arith.constant 0 : index
    %c0_17 = arith.constant 0 : index
    %c384 = arith.constant 384 : index
    %72 = vector.load %arg5[%c0_16, %c0_17, %c384] : memref<1x128x512xbf16, #tpu.memory_space<vmem>>, vector<1x32x128xbf16>
    %73 = vector.shape_cast %72 : vector<1x32x128xbf16> to vector<32x128xbf16>
    %74 = arith.truncf %71 : vector<16x32xf32> to vector<16x32xbf16>
    %cst_18 = arith.constant dense<0.000000e+00> : vector<16x128xf32>
    %75 = tpu.matmul %74, %73, %cst_18 {dimension_numbers = #tpu.dot_dimension_numbers<[1], [0], [0], [1], [0, 0, 1, 1], [], []>} : vector<16x32xbf16>, vector<32x128xbf16>, vector<16x128xf32> -> vector<16x128xf32>
    %c0_19 = arith.constant 0 : index
    %c0_20 = arith.constant 0 : index
    %c384_21 = arith.constant 384 : index
    %76 = vector.load %arg6[%c0_19, %c0_20, %c384_21] : memref<1x1x512xf32, #tpu.memory_space<vmem>>, vector<1x1x128xf32>
    %77 = vector.shape_cast %76 : vector<1x1x128xf32> to vector<1x128xf32>
    %78 = vector.broadcast %77 : vector<1x128xf32> to vector<16x128xf32>
    %79 = arith.addf %75, %78 : vector<16x128xf32>
    %80 = arith.addf %3, %79 : vector<16x128xf32>
    %c0_22 = arith.constant 0 : index
    %c0_23 = arith.constant 0 : index
    %c0_24 = arith.constant 0 : index
    %c0_25 = arith.constant 0 : index
    %81 = vector.load %arg13[%c0_22, %c0_23, %c0_24, %c0_25] : memref<1x3x1x128xf32, #tpu.memory_space<vmem>>, vector<1x1x1x128xf32>
    %82 = vector.shape_cast %81 : vector<1x1x1x128xf32> to vector<1x128xf32>
    %c0_26 = arith.constant 0 : index
    %c0_27 = arith.constant 0 : index
    %c0_28 = arith.constant 0 : index
    %c0_29 = arith.constant 0 : index
    %83 = vector.load %arg14[%c0_26, %c0_27, %c0_28, %c0_29] : memref<1x3x1x128xf32, #tpu.memory_space<vmem>>, vector<1x1x1x128xf32>
    %84 = vector.shape_cast %83 : vector<1x1x1x128xf32> to vector<1x128xf32>
    %cst_30 = arith.constant dense<0.000000e+00> : vector<16xf32>
    %85 = vector.multi_reduction <add>, %80, %cst_30 [1] : vector<16x128xf32> to vector<16xf32>
    %86 = vector.shape_cast %85 : vector<16xf32> to vector<16x1xf32>
    %87 = arith.mulf %80, %80 : vector<16x128xf32>
    %cst_31 = arith.constant dense<0.000000e+00> : vector<16xf32>
    %88 = vector.multi_reduction <add>, %87, %cst_31 [1] : vector<16x128xf32> to vector<16xf32>
    %89 = vector.shape_cast %88 : vector<16xf32> to vector<16x1xf32>
    %cst_32 = arith.constant 3.125000e-02 : f32
    %90 = vector.broadcast %cst_32 : f32 to vector<16x1xf32>
    %91 = arith.mulf %86, %90 : vector<16x1xf32>
    %cst_33 = arith.constant 3.125000e-02 : f32
    %92 = vector.broadcast %cst_33 : f32 to vector<16x1xf32>
    %93 = arith.mulf %89, %92 : vector<16x1xf32>
    %94 = arith.mulf %91, %91 : vector<16x1xf32>
    %95 = arith.subf %93, %94 : vector<16x1xf32>
    %96 = vector.broadcast %91 : vector<16x1xf32> to vector<16x128xf32>
    %97 = arith.subf %80, %96 : vector<16x128xf32>
    %cst_34 = arith.constant 9.99999974E-6 : f32
    %98 = vector.broadcast %cst_34 : f32 to vector<16x1xf32>
    %99 = arith.addf %95, %98 : vector<16x1xf32>
    %100 = math.rsqrt %99 : vector<16x1xf32>
    %101 = vector.broadcast %100 : vector<16x1xf32> to vector<16x128xf32>
    %102 = arith.mulf %97, %101 : vector<16x128xf32>
    %103 = vector.broadcast %82 : vector<1x128xf32> to vector<16x128xf32>
    %104 = arith.mulf %102, %103 : vector<16x128xf32>
    %105 = vector.broadcast %84 : vector<1x128xf32> to vector<16x128xf32>
    %106 = arith.addf %104, %105 : vector<16x128xf32>
    %107 = arith.truncf %106 : vector<16x128xf32> to vector<16x128xbf16>
    %c0_35 = arith.constant 0 : index
    %c0_36 = arith.constant 0 : index
    %108 = vector.load %arg4[%c0_35, %c0_36] : memref<16x16xf32, #tpu.memory_space<vmem>>, vector<16x16xf32>
    %c0_37 = arith.constant 0 : index
    %c0_38 = arith.constant 0 : index
    %c0_39 = arith.constant 0 : index
    %109 = vector.load %arg7[%c0_37, %c0_38, %c0_39] : memref<1x128x512xbf16, #tpu.memory_space<vmem>>, vector<1x128x128xbf16>
    %110 = vector.shape_cast %109 : vector<1x128x128xbf16> to vector<128x128xbf16>
    %cst_40 = arith.constant dense<0.000000e+00> : vector<16x128xf32>
    %111 = tpu.matmul %107, %110, %cst_40 {dimension_numbers = #tpu.dot_dimension_numbers<[1], [0], [0], [1], [0, 0, 1, 1], [], []>} : vector<16x128xbf16>, vector<128x128xbf16>, vector<16x128xf32> -> vector<16x128xf32>
    %c0_41 = arith.constant 0 : index
    %c0_42 = arith.constant 0 : index
    %c0_43 = arith.constant 0 : index
    %112 = vector.load %arg8[%c0_41, %c0_42, %c0_43] : memref<1x1x512xf32, #tpu.memory_space<vmem>>, vector<1x1x128xf32>
    %113 = vector.shape_cast %112 : vector<1x1x128xf32> to vector<1x128xf32>
    %114 = vector.broadcast %113 : vector<1x128xf32> to vector<16x128xf32>
    %115 = arith.addf %111, %114 : vector<16x128xf32>
    %c0_44 = arith.constant 0 : index
    %c0_45 = arith.constant 0 : index
    %c128 = arith.constant 128 : index
    %116 = vector.load %arg7[%c0_44, %c0_45, %c128] : memref<1x128x512xbf16, #tpu.memory_space<vmem>>, vector<1x128x256xbf16>
    %117 = vector.shape_cast %116 : vector<1x128x256xbf16> to vector<128x256xbf16>
    %cst_46 = arith.constant dense<0.000000e+00> : vector<16x256xf32>
    %118 = tpu.matmul %4, %117, %cst_46 {dimension_numbers = #tpu.dot_dimension_numbers<[1], [0], [0], [1], [0, 0, 1, 1], [], []>} : vector<16x128xbf16>, vector<128x256xbf16>, vector<16x256xf32> -> vector<16x256xf32>
    %c0_47 = arith.constant 0 : index
    %c0_48 = arith.constant 0 : index
    %c128_49 = arith.constant 128 : index
    %119 = vector.load %arg8[%c0_47, %c0_48, %c128_49] : memref<1x1x512xf32, #tpu.memory_space<vmem>>, vector<1x1x256xf32>
    %120 = vector.shape_cast %119 : vector<1x1x256xf32> to vector<1x256xf32>
    %121 = vector.broadcast %120 : vector<1x256xf32> to vector<16x256xf32>
    %122 = arith.addf %118, %121 : vector<16x256xf32>
    %123 = vector.extract_strided_slice %122 {offsets = [0, 0], sizes = [16, 128], strides = [1, 1]} : vector<16x256xf32> to vector<16x128xf32>
    %124 = vector.extract_strided_slice %122 {offsets = [0, 128], sizes = [16, 128], strides = [1, 1]} : vector<16x256xf32> to vector<16x128xf32>
    %125 = vector.extract_strided_slice %115 {offsets = [0, 0], sizes = [16, 8], strides = [1, 1]} : vector<16x128xf32> to vector<16x8xf32>
    %126 = vector.extract_strided_slice %115 {offsets = [0, 8], sizes = [16, 8], strides = [1, 1]} : vector<16x128xf32> to vector<16x8xf32>
    %127 = vector.extract_strided_slice %115 {offsets = [0, 16], sizes = [16, 8], strides = [1, 1]} : vector<16x128xf32> to vector<16x8xf32>
    %128 = vector.extract_strided_slice %115 {offsets = [0, 24], sizes = [16, 8], strides = [1, 1]} : vector<16x128xf32> to vector<16x8xf32>
    %129 = vector.shape_cast %125 : vector<16x8xf32> to vector<1x16x8xf32>
    %130 = vector.shape_cast %126 : vector<16x8xf32> to vector<1x16x8xf32>
    %131 = vector.shape_cast %127 : vector<16x8xf32> to vector<1x16x8xf32>
    %132 = vector.shape_cast %128 : vector<16x8xf32> to vector<1x16x8xf32>
    %133 = tpu.concatenate %129, %130, %131, %132 in 0 : vector<1x16x8xf32>, vector<1x16x8xf32>, vector<1x16x8xf32>, vector<1x16x8xf32> -> vector<4x16x8xf32>
    %134 = arith.truncf %133 : vector<4x16x8xf32> to vector<4x16x8xbf16>
    %135 = vector.extract_strided_slice %123 {offsets = [0, 0], sizes = [16, 8], strides = [1, 1]} : vector<16x128xf32> to vector<16x8xf32>
    %136 = vector.extract_strided_slice %123 {offsets = [0, 8], sizes = [16, 8], strides = [1, 1]} : vector<16x128xf32> to vector<16x8xf32>
    %137 = vector.extract_strided_slice %123 {offsets = [0, 16], sizes = [16, 8], strides = [1, 1]} : vector<16x128xf32> to vector<16x8xf32>
    %138 = vector.extract_strided_slice %123 {offsets = [0, 24], sizes = [16, 8], strides = [1, 1]} : vector<16x128xf32> to vector<16x8xf32>
    %139 = vector.shape_cast %135 : vector<16x8xf32> to vector<1x16x8xf32>
    %140 = vector.shape_cast %136 : vector<16x8xf32> to vector<1x16x8xf32>
    %141 = vector.shape_cast %137 : vector<16x8xf32> to vector<1x16x8xf32>
    %142 = vector.shape_cast %138 : vector<16x8xf32> to vector<1x16x8xf32>
    %143 = tpu.concatenate %139, %140, %141, %142 in 0 : vector<1x16x8xf32>, vector<1x16x8xf32>, vector<1x16x8xf32>, vector<1x16x8xf32> -> vector<4x16x8xf32>
    %144 = arith.truncf %143 : vector<4x16x8xf32> to vector<4x16x8xbf16>
    %145 = vector.extract_strided_slice %124 {offsets = [0, 0], sizes = [16, 8], strides = [1, 1]} : vector<16x128xf32> to vector<16x8xf32>
    %146 = vector.extract_strided_slice %124 {offsets = [0, 8], sizes = [16, 8], strides = [1, 1]} : vector<16x128xf32> to vector<16x8xf32>
    %147 = vector.extract_strided_slice %124 {offsets = [0, 16], sizes = [16, 8], strides = [1, 1]} : vector<16x128xf32> to vector<16x8xf32>
    %148 = vector.extract_strided_slice %124 {offsets = [0, 24], sizes = [16, 8], strides = [1, 1]} : vector<16x128xf32> to vector<16x8xf32>
    %149 = vector.shape_cast %145 : vector<16x8xf32> to vector<1x16x8xf32>
    %150 = vector.shape_cast %146 : vector<16x8xf32> to vector<1x16x8xf32>
    %151 = vector.shape_cast %147 : vector<16x8xf32> to vector<1x16x8xf32>
    %152 = vector.shape_cast %148 : vector<16x8xf32> to vector<1x16x8xf32>
    %153 = tpu.concatenate %149, %150, %151, %152 in 0 : vector<1x16x8xf32>, vector<1x16x8xf32>, vector<1x16x8xf32>, vector<1x16x8xf32> -> vector<4x16x8xf32>
    %154 = arith.truncf %153 : vector<4x16x8xf32> to vector<4x16x8xbf16>
    "tpu.trace_start"() <{level = 10 : i32, message = "hqd,hkd->hqk"}> : () -> ()
    %cst_50 = arith.constant dense<0.000000e+00> : vector<4x16x16xf32>
    %155 = tpu.matmul %134, %144, %cst_50 {dimension_numbers = #tpu.dot_dimension_numbers<[2], [2], [1], [1], [0, 0, 0, 1, 1, 1], [0], [0]>} : vector<4x16x8xbf16>, vector<4x16x8xbf16>, vector<4x16x16xf32> -> vector<4x16x16xf32>
    "tpu.trace_stop"() : () -> ()
    %156 = vector.shape_cast %108 : vector<16x16xf32> to vector<1x16x16xf32>
    %157 = vector.broadcast %156 : vector<1x16x16xf32> to vector<4x16x16xf32>
    %158 = arith.addf %155, %157 : vector<4x16x16xf32>
    %cst_51 = arith.constant dense<0xFF800000> : vector<4x16xf32>
    %159 = vector.multi_reduction <maximumf>, %158, %cst_51 [2] : vector<4x16x16xf32> to vector<4x16xf32>
    %160 = vector.shape_cast %159 : vector<4x16xf32> to vector<4x16x1xf32>
    %161 = vector.broadcast %160 : vector<4x16x1xf32> to vector<4x16x16xf32>
    %162 = arith.subf %158, %161 : vector<4x16x16xf32>
    %163 = math.exp %162 : vector<4x16x16xf32>
    %cst_52 = arith.constant dense<0.000000e+00> : vector<4x16xf32>
    %164 = vector.multi_reduction <add>, %163, %cst_52 [2] : vector<4x16x16xf32> to vector<4x16xf32>
    %165 = vector.shape_cast %164 : vector<4x16xf32> to vector<4x16x1xf32>
    %166 = tpu.reciprocal %165 {approx = true} : vector<4x16x1xf32> -> vector<4x16x1xf32>
    %167 = vector.broadcast %166 : vector<4x16x1xf32> to vector<4x16x16xf32>
    %168 = arith.mulf %163, %167 : vector<4x16x16xf32>
    %169 = arith.truncf %168 : vector<4x16x16xf32> to vector<4x16x16xbf16>
    "tpu.trace_start"() <{level = 10 : i32, message = "hqk,hkd->hqd"}> : () -> ()
    %cst_53 = arith.constant dense<0.000000e+00> : vector<4x16x8xf32>
    %170 = tpu.matmul %169, %154, %cst_53 {dimension_numbers = #tpu.dot_dimension_numbers<[2], [1], [1], [2], [0, 0, 0, 1, 1, 2], [0], [0]>} : vector<4x16x16xbf16>, vector<4x16x8xbf16>, vector<4x16x8xf32> -> vector<4x16x8xf32>
    "tpu.trace_stop"() : () -> ()
    %171 = vector.extract_strided_slice %170 {offsets = [0, 0, 0], sizes = [1, 16, 8], strides = [1, 1, 1]} : vector<4x16x8xf32> to vector<1x16x8xf32>
    %172 = vector.shape_cast %171 : vector<1x16x8xf32> to vector<16x8xf32>
    %173 = vector.extract_strided_slice %170 {offsets = [1, 0, 0], sizes = [1, 16, 8], strides = [1, 1, 1]} : vector<4x16x8xf32> to vector<1x16x8xf32>
    %174 = vector.shape_cast %173 : vector<1x16x8xf32> to vector<16x8xf32>
    %175 = vector.extract_strided_slice %170 {offsets = [2, 0, 0], sizes = [1, 16, 8], strides = [1, 1, 1]} : vector<4x16x8xf32> to vector<1x16x8xf32>
    %176 = vector.shape_cast %175 : vector<1x16x8xf32> to vector<16x8xf32>
    %177 = vector.extract_strided_slice %170 {offsets = [3, 0, 0], sizes = [1, 16, 8], strides = [1, 1, 1]} : vector<4x16x8xf32> to vector<1x16x8xf32>
    %178 = vector.shape_cast %177 : vector<1x16x8xf32> to vector<16x8xf32>
    %179 = tpu.concatenate %172, %174, %176, %178 in 1 : vector<16x8xf32>, vector<16x8xf32>, vector<16x8xf32>, vector<16x8xf32> -> vector<16x32xf32>
    %c0_54 = arith.constant 0 : index
    %c0_55 = arith.constant 0 : index
    %c384_56 = arith.constant 384 : index
    %180 = vector.load %arg7[%c0_54, %c0_55, %c384_56] : memref<1x128x512xbf16, #tpu.memory_space<vmem>>, vector<1x32x128xbf16>
    %181 = vector.shape_cast %180 : vector<1x32x128xbf16> to vector<32x128xbf16>
    %182 = arith.truncf %179 : vector<16x32xf32> to vector<16x32xbf16>
    %cst_57 = arith.constant dense<0.000000e+00> : vector<16x128xf32>
    %183 = tpu.matmul %182, %181, %cst_57 {dimension_numbers = #tpu.dot_dimension_numbers<[1], [0], [0], [1], [0, 0, 1, 1], [], []>} : vector<16x32xbf16>, vector<32x128xbf16>, vector<16x128xf32> -> vector<16x128xf32>
    %c0_58 = arith.constant 0 : index
    %c0_59 = arith.constant 0 : index
    %c384_60 = arith.constant 384 : index
    %184 = vector.load %arg8[%c0_58, %c0_59, %c384_60] : memref<1x1x512xf32, #tpu.memory_space<vmem>>, vector<1x1x128xf32>
    %185 = vector.shape_cast %184 : vector<1x1x128xf32> to vector<1x128xf32>
    %186 = vector.broadcast %185 : vector<1x128xf32> to vector<16x128xf32>
    %187 = arith.addf %183, %186 : vector<16x128xf32>
    %188 = arith.addf %106, %187 : vector<16x128xf32>
    %c0_61 = arith.constant 0 : index
    %c1 = arith.constant 1 : index
    %c0_62 = arith.constant 0 : index
    %c0_63 = arith.constant 0 : index
    %189 = vector.load %arg13[%c0_61, %c1, %c0_62, %c0_63] : memref<1x3x1x128xf32, #tpu.memory_space<vmem>>, vector<1x1x1x128xf32>
    %190 = vector.shape_cast %189 : vector<1x1x1x128xf32> to vector<1x128xf32>
    %c0_64 = arith.constant 0 : index
    %c1_65 = arith.constant 1 : index
    %c0_66 = arith.constant 0 : index
    %c0_67 = arith.constant 0 : index
    %191 = vector.load %arg14[%c0_64, %c1_65, %c0_66, %c0_67] : memref<1x3x1x128xf32, #tpu.memory_space<vmem>>, vector<1x1x1x128xf32>
    %192 = vector.shape_cast %191 : vector<1x1x1x128xf32> to vector<1x128xf32>
    %cst_68 = arith.constant dense<0.000000e+00> : vector<16xf32>
    %193 = vector.multi_reduction <add>, %188, %cst_68 [1] : vector<16x128xf32> to vector<16xf32>
    %194 = vector.shape_cast %193 : vector<16xf32> to vector<16x1xf32>
    %195 = arith.mulf %188, %188 : vector<16x128xf32>
    %cst_69 = arith.constant dense<0.000000e+00> : vector<16xf32>
    %196 = vector.multi_reduction <add>, %195, %cst_69 [1] : vector<16x128xf32> to vector<16xf32>
    %197 = vector.shape_cast %196 : vector<16xf32> to vector<16x1xf32>
    %cst_70 = arith.constant 3.125000e-02 : f32
    %198 = vector.broadcast %cst_70 : f32 to vector<16x1xf32>
    %199 = arith.mulf %194, %198 : vector<16x1xf32>
    %cst_71 = arith.constant 3.125000e-02 : f32
    %200 = vector.broadcast %cst_71 : f32 to vector<16x1xf32>
    %201 = arith.mulf %197, %200 : vector<16x1xf32>
    %202 = arith.mulf %199, %199 : vector<16x1xf32>
    %203 = arith.subf %201, %202 : vector<16x1xf32>
    %204 = vector.broadcast %199 : vector<16x1xf32> to vector<16x128xf32>
    %205 = arith.subf %188, %204 : vector<16x128xf32>
    %cst_72 = arith.constant 9.99999974E-6 : f32
    %206 = vector.broadcast %cst_72 : f32 to vector<16x1xf32>
    %207 = arith.addf %203, %206 : vector<16x1xf32>
    %208 = math.rsqrt %207 : vector<16x1xf32>
    %209 = vector.broadcast %208 : vector<16x1xf32> to vector<16x128xf32>
    %210 = arith.mulf %205, %209 : vector<16x128xf32>
    %211 = vector.broadcast %190 : vector<1x128xf32> to vector<16x128xf32>
    %212 = arith.mulf %210, %211 : vector<16x128xf32>
    %213 = vector.broadcast %192 : vector<1x128xf32> to vector<16x128xf32>
    %214 = arith.addf %212, %213 : vector<16x128xf32>
    %215 = arith.truncf %214 : vector<16x128xf32> to vector<16x128xbf16>
    %c0_73 = arith.constant 0 : index
    %c0_74 = arith.constant 0 : index
    %c0_75 = arith.constant 0 : index
    %216 = vector.load %arg9[%c0_73, %c0_74, %c0_75] : memref<1x128x128xbf16, #tpu.memory_space<vmem>>, vector<1x128x128xbf16>
    %217 = vector.shape_cast %216 : vector<1x128x128xbf16> to vector<128x128xbf16>
    %cst_76 = arith.constant dense<0.000000e+00> : vector<16x128xf32>
    %218 = tpu.matmul %215, %217, %cst_76 {dimension_numbers = #tpu.dot_dimension_numbers<[1], [0], [0], [1], [0, 0, 1, 1], [], []>} : vector<16x128xbf16>, vector<128x128xbf16>, vector<16x128xf32> -> vector<16x128xf32>
    %c0_77 = arith.constant 0 : index
    %c0_78 = arith.constant 0 : index
    %c0_79 = arith.constant 0 : index
    %219 = vector.load %arg10[%c0_77, %c0_78, %c0_79] : memref<1x1x128xf32, #tpu.memory_space<vmem>>, vector<1x1x128xf32>
    %220 = vector.shape_cast %219 : vector<1x1x128xf32> to vector<1x128xf32>
    %221 = vector.broadcast %220 : vector<1x128xf32> to vector<16x128xf32>
    %222 = arith.addf %218, %221 : vector<16x128xf32>
    %cst_80 = arith.constant 0.000000e+00 : f32
    %223 = vector.broadcast %cst_80 : f32 to vector<16x128xf32>
    %224 = arith.maximumf %222, %223 : vector<16x128xf32>
    %225 = arith.truncf %224 : vector<16x128xf32> to vector<16x128xbf16>
    %c0_81 = arith.constant 0 : index
    %c0_82 = arith.constant 0 : index
    %c0_83 = arith.constant 0 : index
    %226 = vector.load %arg11[%c0_81, %c0_82, %c0_83] : memref<1x128x128xbf16, #tpu.memory_space<vmem>>, vector<1x128x128xbf16>
    %227 = vector.shape_cast %226 : vector<1x128x128xbf16> to vector<128x128xbf16>
    %cst_84 = arith.constant dense<0.000000e+00> : vector<16x128xf32>
    %228 = tpu.matmul %225, %227, %cst_84 {dimension_numbers = #tpu.dot_dimension_numbers<[1], [0], [0], [1], [0, 0, 1, 1], [], []>} : vector<16x128xbf16>, vector<128x128xbf16>, vector<16x128xf32> -> vector<16x128xf32>
    %c0_85 = arith.constant 0 : index
    %c0_86 = arith.constant 0 : index
    %c0_87 = arith.constant 0 : index
    %229 = vector.load %arg12[%c0_85, %c0_86, %c0_87] : memref<1x1x128xf32, #tpu.memory_space<vmem>>, vector<1x1x128xf32>
    %230 = vector.shape_cast %229 : vector<1x1x128xf32> to vector<1x128xf32>
    %231 = vector.broadcast %230 : vector<1x128xf32> to vector<16x128xf32>
    %232 = arith.addf %228, %231 : vector<16x128xf32>
    %233 = arith.addf %214, %232 : vector<16x128xf32>
    %c0_88 = arith.constant 0 : index
    %c2 = arith.constant 2 : index
    %c0_89 = arith.constant 0 : index
    %c0_90 = arith.constant 0 : index
    %234 = vector.load %arg13[%c0_88, %c2, %c0_89, %c0_90] : memref<1x3x1x128xf32, #tpu.memory_space<vmem>>, vector<1x1x1x128xf32>
    %235 = vector.shape_cast %234 : vector<1x1x1x128xf32> to vector<1x128xf32>
    %c0_91 = arith.constant 0 : index
    %c2_92 = arith.constant 2 : index
    %c0_93 = arith.constant 0 : index
    %c0_94 = arith.constant 0 : index
    %236 = vector.load %arg14[%c0_91, %c2_92, %c0_93, %c0_94] : memref<1x3x1x128xf32, #tpu.memory_space<vmem>>, vector<1x1x1x128xf32>
    %237 = vector.shape_cast %236 : vector<1x1x1x128xf32> to vector<1x128xf32>
    %cst_95 = arith.constant dense<0.000000e+00> : vector<16xf32>
    %238 = vector.multi_reduction <add>, %233, %cst_95 [1] : vector<16x128xf32> to vector<16xf32>
    %239 = vector.shape_cast %238 : vector<16xf32> to vector<16x1xf32>
    %240 = arith.mulf %233, %233 : vector<16x128xf32>
    %cst_96 = arith.constant dense<0.000000e+00> : vector<16xf32>
    %241 = vector.multi_reduction <add>, %240, %cst_96 [1] : vector<16x128xf32> to vector<16xf32>
    %242 = vector.shape_cast %241 : vector<16xf32> to vector<16x1xf32>
    %cst_97 = arith.constant 3.125000e-02 : f32
    %243 = vector.broadcast %cst_97 : f32 to vector<16x1xf32>
    %244 = arith.mulf %239, %243 : vector<16x1xf32>
    %cst_98 = arith.constant 3.125000e-02 : f32
    %245 = vector.broadcast %cst_98 : f32 to vector<16x1xf32>
    %246 = arith.mulf %242, %245 : vector<16x1xf32>
    %247 = arith.mulf %244, %244 : vector<16x1xf32>
    %248 = arith.subf %246, %247 : vector<16x1xf32>
    %249 = vector.broadcast %244 : vector<16x1xf32> to vector<16x128xf32>
    %250 = arith.subf %233, %249 : vector<16x128xf32>
    %cst_99 = arith.constant 9.99999974E-6 : f32
    %251 = vector.broadcast %cst_99 : f32 to vector<16x1xf32>
    %252 = arith.addf %248, %251 : vector<16x1xf32>
    %253 = math.rsqrt %252 : vector<16x1xf32>
    %254 = vector.broadcast %253 : vector<16x1xf32> to vector<16x128xf32>
    %255 = arith.mulf %250, %254 : vector<16x128xf32>
    %256 = vector.broadcast %235 : vector<1x128xf32> to vector<16x128xf32>
    %257 = arith.mulf %255, %256 : vector<16x128xf32>
    %258 = vector.broadcast %237 : vector<1x128xf32> to vector<16x128xf32>
    %259 = arith.addf %257, %258 : vector<16x128xf32>
    %c0_100 = arith.constant 0 : index
    %c0_101 = arith.constant 0 : index
    %260 = vector.load %arg18[%c0_100, %c0_101] : memref<16x128xf32, #tpu.memory_space<vmem>>, vector<16x128xf32>
    tpu.vector_store %arg18[%c0_100, %c0_101], %259 {strides = array<i32>} : memref<16x128xf32, #tpu.memory_space<vmem>>, vector<16x128xf32>,
    %c1_i32 = arith.constant 1 : i32
    %261 = arith.cmpi eq, %arg0, %c1_i32 : i32
    %262 = arith.extui %261 : i1 to i32
    %c0_i32_102 = arith.constant 0 : i32
    %263 = arith.cmpi ne, %262, %c0_i32_102 : i32
    scf.if %263 {
      %c0_103 = arith.constant 0 : index
      %c0_104 = arith.constant 0 : index
      %264 = vector.load %arg15[%c0_103, %c0_104] : memref<1x128xf32, #tpu.memory_space<vmem>>, vector<1x128xf32>
      %c0_105 = arith.constant 0 : index
      %c0_106 = arith.constant 0 : index
      %265 = vector.load %arg16[%c0_105, %c0_106] : memref<1x128xf32, #tpu.memory_space<vmem>>, vector<1x128xf32>
      %cst_107 = arith.constant dense<0.000000e+00> : vector<16xf32>
      %266 = vector.multi_reduction <add>, %259, %cst_107 [1] : vector<16x128xf32> to vector<16xf32>
      %267 = vector.shape_cast %266 : vector<16xf32> to vector<16x1xf32>
      %268 = arith.mulf %259, %259 : vector<16x128xf32>
      %cst_108 = arith.constant dense<0.000000e+00> : vector<16xf32>
      %269 = vector.multi_reduction <add>, %268, %cst_108 [1] : vector<16x128xf32> to vector<16xf32>
      %270 = vector.shape_cast %269 : vector<16xf32> to vector<16x1xf32>
      %cst_109 = arith.constant 3.125000e-02 : f32
      %271 = vector.broadcast %cst_109 : f32 to vector<16x1xf32>
      %272 = arith.mulf %267, %271 : vector<16x1xf32>
      %cst_110 = arith.constant 3.125000e-02 : f32
      %273 = vector.broadcast %cst_110 : f32 to vector<16x1xf32>
      %274 = arith.mulf %270, %273 : vector<16x1xf32>
      %275 = arith.mulf %272, %272 : vector<16x1xf32>
      %276 = arith.subf %274, %275 : vector<16x1xf32>
      %277 = vector.broadcast %272 : vector<16x1xf32> to vector<16x128xf32>
      %278 = arith.subf %259, %277 : vector<16x128xf32>
      %cst_111 = arith.constant 9.99999974E-6 : f32
      %279 = vector.broadcast %cst_111 : f32 to vector<16x1xf32>
      %280 = arith.addf %276, %279 : vector<16x1xf32>
      %281 = math.rsqrt %280 : vector<16x1xf32>
      %282 = vector.broadcast %281 : vector<16x1xf32> to vector<16x128xf32>
      %283 = arith.mulf %278, %282 : vector<16x128xf32>
      %284 = vector.broadcast %264 : vector<1x128xf32> to vector<16x128xf32>
      %285 = arith.mulf %283, %284 : vector<16x128xf32>
      %286 = vector.broadcast %265 : vector<1x128xf32> to vector<16x128xf32>
      %287 = arith.addf %285, %286 : vector<16x128xf32>
      %c0_112 = arith.constant 0 : index
      %c0_113 = arith.constant 0 : index
      %288 = vector.load %arg17[%c0_112, %c0_113] : memref<16x128xf32, #tpu.memory_space<vmem>>, vector<16x128xf32>
      tpu.vector_store %arg17[%c0_112, %c0_113], %287 {strides = array<i32>} : memref<16x128xf32, #tpu.memory_space<vmem>>, vector<16x128xf32>,
    } else {
    }
    return
  }
  func.func @transform_0(%arg0: i32) -> (i32, i32) {
    %c0_i32 = arith.constant 0 : i32
    %c0_i32_0 = arith.constant 0 : i32
    %c0_i32_1 = arith.constant 0 : i32
    return %c0_i32, %c0_i32_0 : i32, i32
  }
  func.func @transform_1(%arg0: i32) -> (i32, i32) {
    %c0_i32 = arith.constant 0 : i32
    %c0_i32_0 = arith.constant 0 : i32
    %c0_i32_1 = arith.constant 0 : i32
    return %c0_i32, %c0_i32_0 : i32, i32
  }
  func.func @transform_2(%arg0: i32) -> (i32, i32) {
    %c0_i32 = arith.constant 0 : i32
    %c0_i32_0 = arith.constant 0 : i32
    %c0_i32_1 = arith.constant 0 : i32
    return %c0_i32, %c0_i32_0 : i32, i32
  }
  func.func @transform_3(%arg0: i32) -> (i32, i32) {
    %c0_i32 = arith.constant 0 : i32
    %c0_i32_0 = arith.constant 0 : i32
    %c0_i32_1 = arith.constant 0 : i32
    return %c0_i32, %c0_i32_0 : i32, i32
  }
  func.func @transform_4(%arg0: i32) -> (i32, i32, i32) {
    %c0_i32 = arith.constant 0 : i32
    %c0_i32_0 = arith.constant 0 : i32
    %c0_i32_1 = arith.constant 0 : i32
    return %arg0, %c0_i32, %c0_i32_0 : i32, i32, i32
  }
  func.func @transform_5(%arg0: i32) -> (i32, i32, i32) {
    %c0_i32 = arith.constant 0 : i32
    %c0_i32_0 = arith.constant 0 : i32
    %c0_i32_1 = arith.constant 0 : i32
    return %arg0, %c0_i32, %c0_i32_0 : i32, i32, i32
  }
  func.func @transform_6(%arg0: i32) -> (i32, i32, i32) {
    %c0_i32 = arith.constant 0 : i32
    %c0_i32_0 = arith.constant 0 : i32
    %c0_i32_1 = arith.constant 0 : i32
    return %arg0, %c0_i32, %c0_i32_0 : i32, i32, i32
  }
  func.func @transform_7(%arg0: i32) -> (i32, i32, i32) {
    %c0_i32 = arith.constant 0 : i32
    %c0_i32_0 = arith.constant 0 : i32
    %c0_i32_1 = arith.constant 0 : i32
    return %arg0, %c0_i32, %c0_i32_0 : i32, i32, i32
  }
  func.func @transform_8(%arg0: i32) -> (i32, i32, i32) {
    %c0_i32 = arith.constant 0 : i32
    %c0_i32_0 = arith.constant 0 : i32
    %c0_i32_1 = arith.constant 0 : i32
    return %arg0, %c0_i32, %c0_i32_0 : i32, i32, i32
  }
  func.func @transform_9(%arg0: i32) -> (i32, i32, i32) {
    %c0_i32 = arith.constant 0 : i32
    %c0_i32_0 = arith.constant 0 : i32
    %c0_i32_1 = arith.constant 0 : i32
    return %arg0, %c0_i32, %c0_i32_0 : i32, i32, i32
  }
  func.func @transform_10(%arg0: i32) -> (i32, i32, i32) {
    %c0_i32 = arith.constant 0 : i32
    %c0_i32_0 = arith.constant 0 : i32
    %c0_i32_1 = arith.constant 0 : i32
    return %arg0, %c0_i32, %c0_i32_0 : i32, i32, i32
  }
  func.func @transform_11(%arg0: i32) -> (i32, i32, i32) {
    %c0_i32 = arith.constant 0 : i32
    %c0_i32_0 = arith.constant 0 : i32
    %c0_i32_1 = arith.constant 0 : i32
    return %arg0, %c0_i32, %c0_i32_0 : i32, i32, i32
  }
  func.func @transform_12(%arg0: i32) -> (i32, i32, i32, i32) {
    %c0_i32 = arith.constant 0 : i32
    %c0_i32_0 = arith.constant 0 : i32
    %c0_i32_1 = arith.constant 0 : i32
    %c0_i32_2 = arith.constant 0 : i32
    return %arg0, %c0_i32, %c0_i32_0, %c0_i32_1 : i32, i32, i32, i32
  }
  func.func @transform_13(%arg0: i32) -> (i32, i32, i32, i32) {
    %c0_i32 = arith.constant 0 : i32
    %c0_i32_0 = arith.constant 0 : i32
    %c0_i32_1 = arith.constant 0 : i32
    %c0_i32_2 = arith.constant 0 : i32
    return %arg0, %c0_i32, %c0_i32_0, %c0_i32_1 : i32, i32, i32, i32
  }
  func.func @transform_14(%arg0: i32) -> (i32, i32) {
    %c0_i32 = arith.constant 0 : i32
    %c0_i32_0 = arith.constant 0 : i32
    %c0_i32_1 = arith.constant 0 : i32
    return %c0_i32, %c0_i32_0 : i32, i32
  }
  func.func @transform_15(%arg0: i32) -> (i32, i32) {
    %c0_i32 = arith.constant 0 : i32
    %c0_i32_0 = arith.constant 0 : i32
    %c0_i32_1 = arith.constant 0 : i32
    return %c0_i32, %c0_i32_0 : i32, i32
  }
  func.func @transform_16(%arg0: i32) -> (i32, i32) {
    %c0_i32 = arith.constant 0 : i32
    %c0_i32_0 = arith.constant 0 : i32
    %c0_i32_1 = arith.constant 0 : i32
    return %c0_i32, %c0_i32_0 : i32, i32
  }
}

</mosaic_0001>

<llo_original>
// kernel: forward.1
$region0: #{forward.1}
  #allocation0 [shape = 'u32[]', space=smem, size = 0x4, offset = 0x4, fixed_abs, tag = 'smem constant byte address 0x4 - core index']
  #allocation1 [shape = 'u32[144,128]{1,0:T(1,128)}', space=vmem, size = 0x12000, scoped, tag = 'internal scratch']
  #allocation2 [shape = 'f32[16,128]{1,0:T(8,128)}', space=vmem, size = 0x2000, scoped, tag = 'scratch operand']
  %s0 = inlined_call_operand.vmem [shape: f32[16,128], index: 0, kind: input, shape index: {}, may-alias: {0,16}]
  %s1 = inlined_call_operand.vmem [shape: bf16[16,128], index: 1, kind: input, shape index: {}]
  %s2 = inlined_call_operand.vmem [shape: f32[16,16], index: 2, kind: input, shape index: {}]
  %s3 = inlined_call_operand.vmem [shape: f32[16,16], index: 3, kind: input, shape index: {}]
  %s4 = inlined_call_operand.vmem [shape: bf16[2,128,512], index: 4, kind: input, shape index: {}]
  %s5 = inlined_call_operand.vmem [shape: f32[2,1,512], index: 5, kind: input, shape index: {}]
  %s6 = inlined_call_operand.vmem [shape: bf16[2,128,512], index: 6, kind: input, shape index: {}]
  %s7 = inlined_call_operand.vmem [shape: f32[2,1,512], index: 7, kind: input, shape index: {}]
  %s8 = inlined_call_operand.vmem [shape: bf16[2,128,128], index: 8, kind: input, shape index: {}]
  %s9 = inlined_call_operand.vmem [shape: f32[2,1,128], index: 9, kind: input, shape index: {}]
  %s10 = inlined_call_operand.vmem [shape: bf16[2,128,128], index: 10, kind: input, shape index: {}]
  %s11 = inlined_call_operand.vmem [shape: f32[2,1,128], index: 11, kind: input, shape index: {}]
  %s12 = inlined_call_operand.vmem [shape: f32[2,3,1,128], index: 12, kind: input, shape index: {}]
  %s13 = inlined_call_operand.vmem [shape: f32[2,3,1,128], index: 13, kind: input, shape index: {}]
  %s14 = inlined_call_operand.vmem [shape: f32[1,128], index: 14, kind: input, shape index: {}]
  %s15 = inlined_call_operand.vmem [shape: f32[1,128], index: 15, kind: input, shape index: {}]
  %s16 = inlined_call_operand.vmem [shape: f32[16,128], index: 16, kind: output, shape index: {}, may-alias: {0,16}]
  %s17 = sld [smem:[#allocation0]]
  $region105: #{forward.1} parent=0
    _
  %s19 = ssub.s32 1, %s17
  %s20 = scalar_select 0, %s19, %s17
  loop: start=0, step=1, limit=4
  $region2: #{forward.1} parent=0 // loop_pre_header
    _
  $region3: #{forward.1} parent=0 // loop_header
    %s22 = sphi 0, %s26
    %p23 = scmp.ge.s32.totalorder %s22, 4
    %s30 = sphi 0, %s30
    %s32 = sphi 0, %s30
    %s33 = sphi 0, %s32
    %s47 = sphi 0, %s33
    %s51 = sphi 0, %s51
    %s53 = sphi 0, %s51
    %s54 = sphi 0, %s53
    %s68 = sphi 0, %s54
    %s72 = sphi 0, %s72
    %s74 = sphi 0, %s72
    %s75 = sphi 0, %s74
    %s89 = sphi 0, %s75
    %s93 = sphi 0, %s93
    %s95 = sphi 0, %s93
    %s96 = sphi 0, %s95
    %s110 = sphi 0, %s96
    %s116 = sphi 0, %s118
    %s119 = sphi 0, %s116
    %s120 = sphi 0, %s119
    %s136 = sphi 0, %s120
    %s142 = sphi 0, %s144
    %s145 = sphi 0, %s142
    %s146 = sphi 0, %s145
    %s162 = sphi 0, %s146
    %s168 = sphi 0, %s170
    %s171 = sphi 0, %s168
    %s172 = sphi 0, %s171
    %s188 = sphi 0, %s172
    %s194 = sphi 0, %s196
    %s197 = sphi 0, %s194
    %s198 = sphi 0, %s197
    %s214 = sphi 0, %s198
    %s220 = sphi 0, %s222
    %s223 = sphi 0, %s220
    %s224 = sphi 0, %s223
    %s240 = sphi 0, %s224
    %s246 = sphi 0, %s248
    %s249 = sphi 0, %s246
    %s250 = sphi 0, %s249
    %s266 = sphi 0, %s250
    %s272 = sphi 0, %s274
    %s275 = sphi 0, %s272
    %s276 = sphi 0, %s275
    %s292 = sphi 0, %s276
    %s298 = sphi 0, %s300
    %s301 = sphi 0, %s298
    %s302 = sphi 0, %s301
    %s318 = sphi 0, %s302
    %s324 = sphi 0, %s326
    %s327 = sphi 0, %s324
    %s328 = sphi 0, %s327
    %s344 = sphi 0, %s328
    %s350 = sphi 0, %s352
    %s353 = sphi 0, %s350
    %s354 = sphi 0, %s353
    %s370 = sphi 0, %s354
    %s374 = sphi 0, %s374
    %s376 = sphi 0, %s374
    %s377 = sphi 0, %s376
    %s391 = sphi 0, %s377
    %s395 = sphi 0, %s395
    %s397 = sphi 0, %s395
    %s398 = sphi 0, %s397
    %s412 = sphi 0, %s398
    %s416 = sphi 0, %s416
    %s418 = sphi 0, %s416
    %s419 = sphi 0, %s418
    %s433 = sphi 0, %s419
  $region4: #{forward.1} parent=0 // loop_header_branch
    %25 = sbr.rel (%p23) target = $region8
  $region5: #{forward.1} parent=0 // loop_body
    %s27 = ssub.s32 %s22, 1
    %s28 = ssub.s32 %s22, 2
    %s29 = sadd.s32 %s22, 1
    %s31 = sadd.s32 %s30, 1
    %p34 = scmp.eq.s32.totalorder %s22, 1
    %p35 = scmp.ne.s32.totalorder %s30, %s32
    %p36 = scmp.eq.s32.totalorder %s22, 0
    %p37 = por %p35, %p36
    %p38 = scmp.ne.s32.totalorder %s30, %s32
    %p39 = scmp.eq.s32.totalorder %s27, 1
    %p40 = por %p38, %p39
    %p41 = scmp.ne.s32.totalorder %s32, %s33
    %p42 = scmp.eq.s32.totalorder %s27, 0
    %p43 = por %p41, %p42
    %p44 = scmp.ne.s32.totalorder %s32, %s33
    %p45 = scmp.eq.s32.totalorder %s28, 1
    %p46 = por %p44, %p45
    %p48 = scmp.ne.s32.totalorder %s33, %s47
    %p49 = scmp.eq.s32.totalorder %s28, 0
    %p50 = por %p48, %p49
    %s52 = sadd.s32 %s51, 1
    %p55 = scmp.eq.s32.totalorder %s22, 1
    %p56 = scmp.ne.s32.totalorder %s51, %s53
    %p57 = scmp.eq.s32.totalorder %s22, 0
    %p58 = por %p56, %p57
    %p59 = scmp.ne.s32.totalorder %s51, %s53
    %p60 = scmp.eq.s32.totalorder %s27, 1
    %p61 = por %p59, %p60
    %p62 = scmp.ne.s32.totalorder %s53, %s54
    %p63 = scmp.eq.s32.totalorder %s27, 0
    %p64 = por %p62, %p63
    %p65 = scmp.ne.s32.totalorder %s53, %s54
    %p66 = scmp.eq.s32.totalorder %s28, 1
    %p67 = por %p65, %p66
    %p69 = scmp.ne.s32.totalorder %s54, %s68
    %p70 = scmp.eq.s32.totalorder %s28, 0
    %p71 = por %p69, %p70
    %s73 = sadd.s32 %s72, 1
    %p76 = scmp.eq.s32.totalorder %s22, 1
    %p77 = scmp.ne.s32.totalorder %s72, %s74
    %p78 = scmp.eq.s32.totalorder %s22, 0
    %p79 = por %p77, %p78
    %p80 = scmp.ne.s32.totalorder %s72, %s74
    %p81 = scmp.eq.s32.totalorder %s27, 1
    %p82 = por %p80, %p81
    %p83 = scmp.ne.s32.totalorder %s74, %s75
    %p84 = scmp.eq.s32.totalorder %s27, 0
    %p85 = por %p83, %p84
    %p86 = scmp.ne.s32.totalorder %s74, %s75
    %p87 = scmp.eq.s32.totalorder %s28, 1
    %p88 = por %p86, %p87
    %p90 = scmp.ne.s32.totalorder %s75, %s89
    %p91 = scmp.eq.s32.totalorder %s28, 0
    %p92 = por %p90, %p91
    %s94 = sadd.s32 %s93, 1
    %p97 = scmp.eq.s32.totalorder %s22, 1
    %p98 = scmp.ne.s32.totalorder %s93, %s95
    %p99 = scmp.eq.s32.totalorder %s22, 0
    %p100 = por %p98, %p99
    %p101 = scmp.ne.s32.totalorder %s93, %s95
    %p102 = scmp.eq.s32.totalorder %s27, 1
    %p103 = por %p101, %p102
    %p104 = scmp.ne.s32.totalorder %s95, %s96
    %p105 = scmp.eq.s32.totalorder %s27, 0
    %p106 = por %p104, %p105
    %p107 = scmp.ne.s32.totalorder %s95, %s96
    %p108 = scmp.eq.s32.totalorder %s28, 1
    %p109 = por %p107, %p108
    %p111 = scmp.ne.s32.totalorder %s96, %s110
    %p112 = scmp.eq.s32.totalorder %s28, 0
    %p113 = por %p111, %p112
    %s114 = ssub.s32 %s22, %s29
    %p115 = scmp.eq.s32.totalorder %s114, 0
    %s117 = sadd.s32 %s116, 1
    %s118 = scalar_select %p115, %s116, %s117
    %p121 = pneg %p115
    %p122 = scmp.eq.s32.totalorder %s22, 1
    %p123 = por %p121, %p122
    %p124 = scmp.ne.s32.totalorder %s116, %s119
    %p125 = scmp.eq.s32.totalorder %s22, 0
    %p126 = por %p124, %p125
    %p127 = scmp.ne.s32.totalorder %s116, %s119
    %p128 = scmp.eq.s32.totalorder %s27, 1
    %p129 = por %p127, %p128
    %p130 = scmp.ne.s32.totalorder %s119, %s120
    %p131 = scmp.eq.s32.totalorder %s27, 0
    %p132 = por %p130, %p131
    %p133 = scmp.ne.s32.totalorder %s119, %s120
    %p134 = scmp.eq.s32.totalorder %s28, 1
    %p135 = por %p133, %p134
    %p137 = scmp.ne.s32.totalorder %s120, %s136
    %p138 = scmp.eq.s32.totalorder %s28, 0
    %p139 = por %p137, %p138
    %s140 = ssub.s32 %s22, %s29
    %p141 = scmp.eq.s32.totalorder %s140, 0
    %s143 = sadd.s32 %s142, 1
    %s144 = scalar_select %p141, %s142, %s143
    %p147 = pneg %p141
    %p148 = scmp.eq.s32.totalorder %s22, 1
    %p149 = por %p147, %p148
    %p150 = scmp.ne.s32.totalorder %s142, %s145
    %p151 = scmp.eq.s32.totalorder %s22, 0
    %p152 = por %p150, %p151
    %p153 = scmp.ne.s32.totalorder %s142, %s145
    %p154 = scmp.eq.s32.totalorder %s27, 1
    %p155 = por %p153, %p154
    %p156 = scmp.ne.s32.totalorder %s145, %s146
    %p157 = scmp.eq.s32.totalorder %s27, 0
    %p158 = por %p156, %p157
    %p159 = scmp.ne.s32.totalorder %s145, %s146
    %p160 = scmp.eq.s32.totalorder %s28, 1
    %p161 = por %p159, %p160
    %p163 = scmp.ne.s32.totalorder %s146, %s162
    %p164 = scmp.eq.s32.totalorder %s28, 0
    %p165 = por %p163, %p164
    %s166 = ssub.s32 %s22, %s29
    %p167 = scmp.eq.s32.totalorder %s166, 0
    %s169 = sadd.s32 %s168, 1
    %s170 = scalar_select %p167, %s168, %s169
    %p173 = pneg %p167
    %p174 = scmp.eq.s32.totalorder %s22, 1
    %p175 = por %p173, %p174
    %p176 = scmp.ne.s32.totalorder %s168, %s171
    %p177 = scmp.eq.s32.totalorder %s22, 0
    %p178 = por %p176, %p177
    %p179 = scmp.ne.s32.totalorder %s168, %s171
    %p180 = scmp.eq.s32.totalorder %s27, 1
    %p181 = por %p179, %p180
    %p182 = scmp.ne.s32.totalorder %s171, %s172
    %p183 = scmp.eq.s32.totalorder %s27, 0
    %p184 = por %p182, %p183
    %p185 = scmp.ne.s32.totalorder %s171, %s172
    %p186 = scmp.eq.s32.totalorder %s28, 1
    %p187 = por %p185, %p186
    %p189 = scmp.ne.s32.totalorder %s172, %s188
    %p190 = scmp.eq.s32.totalorder %s28, 0
    %p191 = por %p189, %p190
    %s192 = ssub.s32 %s22, %s29
    %p193 = scmp.eq.s32.totalorder %s192, 0
    %s195 = sadd.s32 %s194, 1
    %s196 = scalar_select %p193, %s194, %s195
    %p199 = pneg %p193
    %p200 = scmp.eq.s32.totalorder %s22, 1
    %p201 = por %p199, %p200
    %p202 = scmp.ne.s32.totalorder %s194, %s197
    %p203 = scmp.eq.s32.totalorder %s22, 0
    %p204 = por %p202, %p203
    %p205 = scmp.ne.s32.totalorder %s194, %s197
    %p206 = scmp.eq.s32.totalorder %s27, 1
    %p207 = por %p205, %p206
    %p208 = scmp.ne.s32.totalorder %s197, %s198
    %p209 = scmp.eq.s32.totalorder %s27, 0
    %p210 = por %p208, %p209
    %p211 = scmp.ne.s32.totalorder %s197, %s198
    %p212 = scmp.eq.s32.totalorder %s28, 1
    %p213 = por %p211, %p212
    %p215 = scmp.ne.s32.totalorder %s198, %s214
    %p216 = scmp.eq.s32.totalorder %s28, 0
    %p217 = por %p215, %p216
    %s218 = ssub.s32 %s22, %s29
    %p219 = scmp.eq.s32.totalorder %s218, 0
    %s221 = sadd.s32 %s220, 1
    %s222 = scalar_select %p219, %s220, %s221
    %p225 = pneg %p219
    %p226 = scmp.eq.s32.totalorder %s22, 1
    %p227 = por %p225, %p226
    %p228 = scmp.ne.s32.totalorder %s220, %s223
    %p229 = scmp.eq.s32.totalorder %s22, 0
    %p230 = por %p228, %p229
    %p231 = scmp.ne.s32.totalorder %s220, %s223
    %p232 = scmp.eq.s32.totalorder %s27, 1
    %p233 = por %p231, %p232
    %p234 = scmp.ne.s32.totalorder %s223, %s224
    %p235 = scmp.eq.s32.totalorder %s27, 0
    %p236 = por %p234, %p235
    %p237 = scmp.ne.s32.totalorder %s223, %s224
    %p238 = scmp.eq.s32.totalorder %s28, 1
    %p239 = por %p237, %p238
    %p241 = scmp.ne.s32.totalorder %s224, %s240
    %p242 = scmp.eq.s32.totalorder %s28, 0
    %p243 = por %p241, %p242
    %s244 = ssub.s32 %s22, %s29
    %p245 = scmp.eq.s32.totalorder %s244, 0
    %s247 = sadd.s32 %s246, 1
    %s248 = scalar_select %p245, %s246, %s247
    %p251 = pneg %p245
    %p252 = scmp.eq.s32.totalorder %s22, 1
    %p253 = por %p251, %p252
    %p254 = scmp.ne.s32.totalorder %s246, %s249
    %p255 = scmp.eq.s32.totalorder %s22, 0
    %p256 = por %p254, %p255
    %p257 = scmp.ne.s32.totalorder %s246, %s249
    %p258 = scmp.eq.s32.totalorder %s27, 1
    %p259 = por %p257, %p258
    %p260 = scmp.ne.s32.totalorder %s249, %s250
    %p261 = scmp.eq.s32.totalorder %s27, 0
    %p262 = por %p260, %p261
    %p263 = scmp.ne.s32.totalorder %s249, %s250
    %p264 = scmp.eq.s32.totalorder %s28, 1
    %p265 = por %p263, %p264
    %p267 = scmp.ne.s32.totalorder %s250, %s266
    %p268 = scmp.eq.s32.totalorder %s28, 0
    %p269 = por %p267, %p268
    %s270 = ssub.s32 %s22, %s29
    %p271 = scmp.eq.s32.totalorder %s270, 0
    %s273 = sadd.s32 %s272, 1
    %s274 = scalar_select %p271, %s272, %s273
    %p277 = pneg %p271
    %p278 = scmp.eq.s32.totalorder %s22, 1
    %p279 = por %p277, %p278
    %p280 = scmp.ne.s32.totalorder %s272, %s275
    %p281 = scmp.eq.s32.totalorder %s22, 0
    %p282 = por %p280, %p281
    %p283 = scmp.ne.s32.totalorder %s272, %s275
    %p284 = scmp.eq.s32.totalorder %s27, 1
    %p285 = por %p283, %p284
    %p286 = scmp.ne.s32.totalorder %s275, %s276
    %p287 = scmp.eq.s32.totalorder %s27, 0
    %p288 = por %p286, %p287
    %p289 = scmp.ne.s32.totalorder %s275, %s276
    %p290 = scmp.eq.s32.totalorder %s28, 1
    %p291 = por %p289, %p290
    %p293 = scmp.ne.s32.totalorder %s276, %s292
    %p294 = scmp.eq.s32.totalorder %s28, 0
    %p295 = por %p293, %p294
    %s296 = ssub.s32 %s22, %s29
    %p297 = scmp.eq.s32.totalorder %s296, 0
    %s299 = sadd.s32 %s298, 1
    %s300 = scalar_select %p297, %s298, %s299
    %p303 = pneg %p297
    %p304 = scmp.eq.s32.totalorder %s22, 1
    %p305 = por %p303, %p304
    %p306 = scmp.ne.s32.totalorder %s298, %s301
    %p307 = scmp.eq.s32.totalorder %s22, 0
    %p308 = por %p306, %p307
    %p309 = scmp.ne.s32.totalorder %s298, %s301
    %p310 = scmp.eq.s32.totalorder %s27, 1
    %p311 = por %p309, %p310
    %p312 = scmp.ne.s32.totalorder %s301, %s302
    %p313 = scmp.eq.s32.totalorder %s27, 0
    %p314 = por %p312, %p313
    %p315 = scmp.ne.s32.totalorder %s301, %s302
    %p316 = scmp.eq.s32.totalorder %s28, 1
    %p317 = por %p315, %p316
    %p319 = scmp.ne.s32.totalorder %s302, %s318
    %p320 = scmp.eq.s32.totalorder %s28, 0
    %p321 = por %p319, %p320
    %s322 = ssub.s32 %s22, %s29
    %p323 = scmp.eq.s32.totalorder %s322, 0
    %s325 = sadd.s32 %s324, 1
    %s326 = scalar_select %p323, %s324, %s325
    %p329 = pneg %p323
    %p330 = scmp.eq.s32.totalorder %s22, 1
    %p331 = por %p329, %p330
    %p332 = scmp.ne.s32.totalorder %s324, %s327
    %p333 = scmp.eq.s32.totalorder %s22, 0
    %p334 = por %p332, %p333
    %p335 = scmp.ne.s32.totalorder %s324, %s327
    %p336 = scmp.eq.s32.totalorder %s27, 1
    %p337 = por %p335, %p336
    %p338 = scmp.ne.s32.totalorder %s327, %s328
    %p339 = scmp.eq.s32.totalorder %s27, 0
    %p340 = por %p338, %p339
    %p341 = scmp.ne.s32.totalorder %s327, %s328
    %p342 = scmp.eq.s32.totalorder %s28, 1
    %p343 = por %p341, %p342
    %p345 = scmp.ne.s32.totalorder %s328, %s344
    %p346 = scmp.eq.s32.totalorder %s28, 0
    %p347 = por %p345, %p346
    %s348 = ssub.s32 %s22, %s29
    %p349 = scmp.eq.s32.totalorder %s348, 0
    %s351 = sadd.s32 %s350, 1
    %s352 = scalar_select %p349, %s350, %s351
    %p355 = pneg %p349
    %p356 = scmp.eq.s32.totalorder %s22, 1
    %p357 = por %p355, %p356
    %p358 = scmp.ne.s32.totalorder %s350, %s353
    %p359 = scmp.eq.s32.totalorder %s22, 0
    %p360 = por %p358, %p359
    %p361 = scmp.ne.s32.totalorder %s350, %s353
    %p362 = scmp.eq.s32.totalorder %s27, 1
    %p363 = por %p361, %p362
    %p364 = scmp.ne.s32.totalorder %s353, %s354
    %p365 = scmp.eq.s32.totalorder %s27, 0
    %p366 = por %p364, %p365
    %p367 = scmp.ne.s32.totalorder %s353, %s354
    %p368 = scmp.eq.s32.totalorder %s28, 1
    %p369 = por %p367, %p368
    %p371 = scmp.ne.s32.totalorder %s354, %s370
    %p372 = scmp.eq.s32.totalorder %s28, 0
    %p373 = por %p371, %p372
    %s375 = sadd.s32 %s374, 1
    %p378 = scmp.eq.s32.totalorder %s22, 1
    %p379 = scmp.ne.s32.totalorder %s374, %s376
    %p380 = scmp.eq.s32.totalorder %s22, 0
    %p381 = por %p379, %p380
    %p382 = scmp.ne.s32.totalorder %s374, %s376
    %p383 = scmp.eq.s32.totalorder %s27, 1
    %p384 = por %p382, %p383
    %p385 = scmp.ne.s32.totalorder %s376, %s377
    %p386 = scmp.eq.s32.totalorder %s27, 0
    %p387 = por %p385, %p386
    %p388 = scmp.ne.s32.totalorder %s376, %s377
    %p389 = scmp.eq.s32.totalorder %s28, 1
    %p390 = por %p388, %p389
    %p392 = scmp.ne.s32.totalorder %s377, %s391
    %p393 = scmp.eq.s32.totalorder %s28, 0
    %p394 = por %p392, %p393
    %s396 = sadd.s32 %s395, 1
    %p399 = scmp.eq.s32.totalorder %s22, 1
    %p400 = scmp.ne.s32.totalorder %s395, %s397
    %p401 = scmp.eq.s32.totalorder %s22, 0
    %p402 = por %p400, %p401
    %p403 = scmp.ne.s32.totalorder %s395, %s397
    %p404 = scmp.eq.s32.totalorder %s27, 1
    %p405 = por %p403, %p404
    %p406 = scmp.ne.s32.totalorder %s397, %s398
    %p407 = scmp.eq.s32.totalorder %s27, 0
    %p408 = por %p406, %p407
    %p409 = scmp.ne.s32.totalorder %s397, %s398
    %p410 = scmp.eq.s32.totalorder %s28, 1
    %p411 = por %p409, %p410
    %p413 = scmp.ne.s32.totalorder %s398, %s412
    %p414 = scmp.eq.s32.totalorder %s28, 0
    %p415 = por %p413, %p414
    %s417 = sadd.s32 %s416, 1
    %p420 = scmp.eq.s32.totalorder %s22, 1
    %p421 = scmp.ne.s32.totalorder %s416, %s418
    %p422 = scmp.eq.s32.totalorder %s22, 0
    %p423 = por %p421, %p422
    %p424 = scmp.ne.s32.totalorder %s416, %s418
    %p425 = scmp.eq.s32.totalorder %s27, 1
    %p426 = por %p424, %p425
    %p427 = scmp.ne.s32.totalorder %s418, %s419
    %p428 = scmp.eq.s32.totalorder %s27, 0
    %p429 = por %p427, %p428
    %p430 = scmp.ne.s32.totalorder %s418, %s419
    %p431 = scmp.eq.s32.totalorder %s28, 1
    %p432 = por %p430, %p431
    %p434 = scmp.ne.s32.totalorder %s419, %s433
    %p435 = scmp.eq.s32.totalorder %s28, 0
    %p436 = por %p434, %p435
    %p437 = scmp.le.s32.totalorder 1, %s22
    %p438 = scmp.lt.s32.totalorder %s22, 3
    %p439 = pnand %p437, %p438
    %p440 = pneg %p439
    // Predicated region
    $region9: #{forward.1} parent=5 // pred_check
      _
    $region10: #{forward.1} parent=5 // pred_check_branch
      %442 = sbr.rel (%p439) target = $region12
    $region11: #{forward.1} parent=5 // pred_region
      %s443 = ssub.s32 %s22, 1
      // Predicated region
      $region13: #{forward.1} parent=11 // pred_check
        %p444 = pneg %p43
      $region14: #{forward.1} parent=11 // pred_check_branch
        %446 = sbr.rel (%p444) target = $region16
      $region15: #{forward.1} parent=11 // pred_region
        _
      $region16: #{forward.1} parent=11 // pred_fallthru
        _
      // Predicated region
      $region17: #{forward.1} parent=11 // pred_check
        %p447 = pneg %p64
      $region18: #{forward.1} parent=11 // pred_check_branch
        %449 = sbr.rel (%p447) target = $region20
      $region19: #{forward.1} parent=11 // pred_region
        _
      $region20: #{forward.1} parent=11 // pred_fallthru
        _
      // Predicated region
      $region21: #{forward.1} parent=11 // pred_check
        %p450 = pneg %p85
      $region22: #{forward.1} parent=11 // pred_check_branch
        %452 = sbr.rel (%p450) target = $region24
      $region23: #{forward.1} parent=11 // pred_region
        _
      $region24: #{forward.1} parent=11 // pred_fallthru
        _
      // Predicated region
      $region25: #{forward.1} parent=11 // pred_check
        %p453 = pneg %p106
      $region26: #{forward.1} parent=11 // pred_check_branch
        %455 = sbr.rel (%p453) target = $region28
      $region27: #{forward.1} parent=11 // pred_region
        _
      $region28: #{forward.1} parent=11 // pred_fallthru
        _
      // Predicated region
      $region29: #{forward.1} parent=11 // pred_check
        %p456 = pneg %p387
      $region30: #{forward.1} parent=11 // pred_check_branch
        %458 = sbr.rel (%p456) target = $region32
      $region31: #{forward.1} parent=11 // pred_region
        _
      $region32: #{forward.1} parent=11 // pred_fallthru
        _
      // Predicated region
      $region33: #{forward.1} parent=11 // pred_check
        %p459 = pneg %p408
      $region34: #{forward.1} parent=11 // pred_check_branch
        %461 = sbr.rel (%p459) target = $region36
      $region35: #{forward.1} parent=11 // pred_region
        _
      $region36: #{forward.1} parent=11 // pred_fallthru
        _
    $region12: #{forward.1} parent=5 // pred_fallthru
      _
    %p462 = scmp.lt.s32.totalorder %s22, 2
    // Predicated region
    $region37: #{forward.1} parent=5 // pred_check
      %p463 = pneg %p462
    $region38: #{forward.1} parent=5 // pred_check_branch
      %465 = sbr.rel (%p463) target = $region40
    $region39: #{forward.1} parent=5 // pred_region
      // Predicated region
      $region41: #{forward.1} parent=39 // pred_check
        %p466 = pneg %p126
      $region42: #{forward.1} parent=39 // pred_check_branch
        %468 = sbr.rel (%p466) target = $region44
      $region43: #{forward.1} parent=39 // pred_region
        %p469 = scmp.lt.s32.totalorder %s22, 1
        %s470 = scalar_select %p469, %s22, 1
        %s471 = smul.addr %s470, 64
        %s472 = smul.addr %s471, 4
        %s473 = scalar_lea.vmem %s4, %s472
      $region44: #{forward.1} parent=39 // pred_fallthru
        _
      // Predicated region
      $region45: #{forward.1} parent=39 // pred_check
        %p474 = pneg %p152
      $region46: #{forward.1} parent=39 // pred_check_branch
        %476 = sbr.rel (%p474) target = $region48
      $region47: #{forward.1} parent=39 // pred_region
        %p477 = scmp.lt.s32.totalorder %s22, 1
        %s478 = scalar_select %p477, %s22, 1
        %s479 = smul.addr %s478, 4
        %s480 = scalar_lea.vmem %s5, %s479
      $region48: #{forward.1} parent=39 // pred_fallthru
        _
      // Predicated region
      $region49: #{forward.1} parent=39 // pred_check
        %p481 = pneg %p178
      $region50: #{forward.1} parent=39 // pred_check_branch
        %483 = sbr.rel (%p481) target = $region52
      $region51: #{forward.1} parent=39 // pred_region
        %p484 = scmp.lt.s32.totalorder %s22, 1
        %s485 = scalar_select %p484, %s22, 1
        %s486 = smul.addr %s485, 64
        %s487 = smul.addr %s486, 4
        %s488 = scalar_lea.vmem %s6, %s487
      $region52: #{forward.1} parent=39 // pred_fallthru
        _
      // Predicated region
      $region53: #{forward.1} parent=39 // pred_check
        %p489 = pneg %p204
      $region54: #{forward.1} parent=39 // pred_check_branch
        %491 = sbr.rel (%p489) target = $region56
      $region55: #{forward.1} parent=39 // pred_region
        %p492 = scmp.lt.s32.totalorder %s22, 1
        %s493 = scalar_select %p492, %s22, 1
        %s494 = smul.addr %s493, 4
        %s495 = scalar_lea.vmem %s7, %s494
      $region56: #{forward.1} parent=39 // pred_fallthru
        _
      // Predicated region
      $region57: #{forward.1} parent=39 // pred_check
        %p496 = pneg %p230
      $region58: #{forward.1} parent=39 // pred_check_branch
        %498 = sbr.rel (%p496) target = $region60
      $region59: #{forward.1} parent=39 // pred_region
        %p499 = scmp.lt.s32.totalorder %s22, 1
        %s500 = scalar_select %p499, %s22, 1
        %s501 = smul.addr %s500, 16
        %s502 = smul.addr %s501, 4
        %s503 = scalar_lea.vmem %s8, %s502
      $region60: #{forward.1} parent=39 // pred_fallthru
        _
      // Predicated region
      $region61: #{forward.1} parent=39 // pred_check
        %p504 = pneg %p256
      $region62: #{forward.1} parent=39 // pred_check_branch
        %506 = sbr.rel (%p504) target = $region64
      $region63: #{forward.1} parent=39 // pred_region
        %p507 = scmp.lt.s32.totalorder %s22, 1
        %s508 = scalar_select %p507, %s22, 1
        %s509 = scalar_lea.vmem %s9, %s508
      $region64: #{forward.1} parent=39 // pred_fallthru
        _
      // Predicated region
      $region65: #{forward.1} parent=39 // pred_check
        %p510 = pneg %p282
      $region66: #{forward.1} parent=39 // pred_check_branch
        %512 = sbr.rel (%p510) target = $region68
      $region67: #{forward.1} parent=39 // pred_region
        %p513 = scmp.lt.s32.totalorder %s22, 1
        %s514 = scalar_select %p513, %s22, 1
        %s515 = smul.addr %s514, 16
        %s516 = smul.addr %s515, 4
        %s517 = scalar_lea.vmem %s10, %s516
      $region68: #{forward.1} parent=39 // pred_fallthru
        _
      // Predicated region
      $region69: #{forward.1} parent=39 // pred_check
        %p518 = pneg %p308
      $region70: #{forward.1} parent=39 // pred_check_branch
        %520 = sbr.rel (%p518) target = $region72
      $region71: #{forward.1} parent=39 // pred_region
        %p521 = scmp.lt.s32.totalorder %s22, 1
        %s522 = scalar_select %p521, %s22, 1
        %s523 = scalar_lea.vmem %s11, %s522
      $region72: #{forward.1} parent=39 // pred_fallthru
        _
      // Predicated region
      $region73: #{forward.1} parent=39 // pred_check
        %p524 = pneg %p334
      $region74: #{forward.1} parent=39 // pred_check_branch
        %526 = sbr.rel (%p524) target = $region76
      $region75: #{forward.1} parent=39 // pred_region
        %p527 = scmp.lt.s32.totalorder %s22, 1
        %s528 = scalar_select %p527, %s22, 1
        %s529 = smul.addr %s528, 3
        %s530 = scalar_lea.vmem %s12, %s529
      $region76: #{forward.1} parent=39 // pred_fallthru
        _
      // Predicated region
      $region77: #{forward.1} parent=39 // pred_check
        %p531 = pneg %p360
      $region78: #{forward.1} parent=39 // pred_check_branch
        %533 = sbr.rel (%p531) target = $region80
      $region79: #{forward.1} parent=39 // pred_region
        %p534 = scmp.lt.s32.totalorder %s22, 1
        %s535 = scalar_select %p534, %s22, 1
        %s536 = smul.addr %s535, 3
        %s537 = scalar_lea.vmem %s13, %s536
      $region80: #{forward.1} parent=39 // pred_fallthru
        _
    $region40: #{forward.1} parent=5 // pred_fallthru
      _
    %p538 = scmp.le.s32.totalorder 1, %s22
    %p539 = scmp.lt.s32.totalorder %s22, 3
    %p540 = pnand %p538, %p539
    %p541 = pneg %p540
    // Predicated region
    $region81: #{forward.1} parent=5 // pred_check
      _
    $region82: #{forward.1} parent=5 // pred_check_branch
      %543 = sbr.rel (%p540) target = $region84
    $region83: #{forward.1} parent=5 // pred_region
      %s544 = ssub.s32 %s22, 1
      %p545 = pneg %p43
      %p546 = pneg %p40
      %p547 = pneg %p64
      %p548 = pneg %p61
      %p549 = pneg %p85
      %p550 = pneg %p82
      %p551 = pneg %p106
      %p552 = pneg %p103
      %p553 = scmp.lt.s32.totalorder %s27, 1
      %s554 = scalar_select %p553, %s27, 1
      %s555 = smul.addr %s554, 64
      %s556 = smul.addr %s555, 4
      %s557 = scalar_lea.vmem %s4, %s556
      %p558 = pneg %p132
      %p559 = pneg %p129
      %p560 = scmp.lt.s32.totalorder %s27, 1
      %s561 = scalar_select %p560, %s27, 1
      %s562 = smul.addr %s561, 4
      %s563 = scalar_lea.vmem %s5, %s562
      %p564 = pneg %p158
      %p565 = pneg %p155
      %p566 = scmp.lt.s32.totalorder %s27, 1
      %s567 = scalar_select %p566, %s27, 1
      %s568 = smul.addr %s567, 64
      %s569 = smul.addr %s568, 4
      %s570 = scalar_lea.vmem %s6, %s569
      %p571 = pneg %p184
      %p572 = pneg %p181
      %p573 = scmp.lt.s32.totalorder %s27, 1
      %s574 = scalar_select %p573, %s27, 1
      %s575 = smul.addr %s574, 4
      %s576 = scalar_lea.vmem %s7, %s575
      %p577 = pneg %p210
      %p578 = pneg %p207
      %p579 = scmp.lt.s32.totalorder %s27, 1
      %s580 = scalar_select %p579, %s27, 1
      %s581 = smul.addr %s580, 16
      %s582 = smul.addr %s581, 4
      %s583 = scalar_lea.vmem %s8, %s582
      %p584 = pneg %p236
      %p585 = pneg %p233
      %p586 = scmp.lt.s32.totalorder %s27, 1
      %s587 = scalar_select %p586, %s27, 1
      %s588 = scalar_lea.vmem %s9, %s587
      %p589 = pneg %p262
      %p590 = pneg %p259
      %p591 = scmp.lt.s32.totalorder %s27, 1
      %s592 = scalar_select %p591, %s27, 1
      %s593 = smul.addr %s592, 16
      %s594 = smul.addr %s593, 4
      %s595 = scalar_lea.vmem %s10, %s594
      %p596 = pneg %p288
      %p597 = pneg %p285
      %p598 = scmp.lt.s32.totalorder %s27, 1
      %s599 = scalar_select %p598, %s27, 1
      %s600 = scalar_lea.vmem %s11, %s599
      %p601 = pneg %p314
      %p602 = pneg %p311
      %p603 = scmp.lt.s32.totalorder %s27, 1
      %s604 = scalar_select %p603, %s27, 1
      %s605 = smul.addr %s604, 3
      %s606 = scalar_lea.vmem %s12, %s605
      %p607 = pneg %p340
      %p608 = pneg %p337
      %p609 = scmp.lt.s32.totalorder %s27, 1
      %s610 = scalar_select %p609, %s27, 1
      %s611 = smul.addr %s610, 3
      %s612 = scalar_lea.vmem %s13, %s611
      %p613 = pneg %p366
      %p614 = pneg %p363
      %p615 = pneg %p387
      %p616 = pneg %p384
      %p617 = pneg %p408
      %p618 = pneg %p405
      %p619 = pneg %p429
      %p620 = pneg %p426
      %p621 = scmp.lt.s32.totalorder %s27, 1
      %s622 = scalar_select %p621, %s27, 1
      %s623 = smul.addr %s622, 64
      %s624 = smul.addr %s623, 4
      %s625 = scalar_lea.vmem %s4, %s624
      %p626 = scmp.lt.s32.totalorder %s27, 1
      %s627 = scalar_select %p626, %s27, 1
      %s628 = smul.addr %s627, 4
      %s629 = scalar_lea.vmem %s5, %s628
      %p630 = scmp.lt.s32.totalorder %s27, 1
      %s631 = scalar_select %p630, %s27, 1
      %s632 = smul.addr %s631, 64
      %s633 = smul.addr %s632, 4
      %s634 = scalar_lea.vmem %s6, %s633
      %p635 = scmp.lt.s32.totalorder %s27, 1
      %s636 = scalar_select %p635, %s27, 1
      %s637 = smul.addr %s636, 4
      %s638 = scalar_lea.vmem %s7, %s637
      %p639 = scmp.lt.s32.totalorder %s27, 1
      %s640 = scalar_select %p639, %s27, 1
      %s641 = smul.addr %s640, 16
      %s642 = smul.addr %s641, 4
      %s643 = scalar_lea.vmem %s8, %s642
      %p644 = scmp.lt.s32.totalorder %s27, 1
      %s645 = scalar_select %p644, %s27, 1
      %s646 = scalar_lea.vmem %s9, %s645
      %p647 = scmp.lt.s32.totalorder %s27, 1
      %s648 = scalar_select %p647, %s27, 1
      %s649 = smul.addr %s648, 16
      %s650 = smul.addr %s649, 4
      %s651 = scalar_lea.vmem %s10, %s650
      %p652 = scmp.lt.s32.totalorder %s27, 1
      %s653 = scalar_select %p652, %s27, 1
      %s654 = scalar_lea.vmem %s11, %s653
      %p655 = scmp.lt.s32.totalorder %s27, 1
      %s656 = scalar_select %p655, %s27, 1
      %s657 = smul.addr %s656, 3
      %s658 = scalar_lea.vmem %s12, %s657
      %p659 = scmp.lt.s32.totalorder %s27, 1
      %s660 = scalar_select %p659, %s27, 1
      %s661 = smul.addr %s660, 3
      %s662 = scalar_lea.vmem %s13, %s661
      %p664 = scmp.eq.s32.totalorder %s27, 0
      // Predicated region
      $region85: #{forward.1} parent=83 // pred_check
        %p665 = pneg %p664
      $region86: #{forward.1} parent=83 // pred_check_branch
        %667 = sbr.rel (%p665) target = $region88
      $region87: #{forward.1} parent=83 // pred_region
        %v668 = vld [vmem:[%s0] sm:$0xff]
        %v669 = vld [vmem:[%s0 + $0x8] sm:$0xff]
        %670 = vst [vmem:[#allocation2] sm:$0xff] %v668
        %671 = vst [vmem:[#allocation2 + $0x8] sm:$0xff] %v669
      $region88: #{forward.1} parent=83 // pred_fallthru
        _
      %v672 = vld [vmem:[#allocation2] sm:$0xff]
      %v673 = vld [vmem:[#allocation2 + $0x8] sm:$0xff]
      %v674 = vld [vmem:[%s1] sm:$0xf]
      %v675 = vld [vmem:[%s1 + $0x4] sm:$0xf]
      %v676 = vpack.c.bf16 %v673, %v672
      %v677 = vld [vmem:[%s2] sm:$0xff]
      %v678 = vld [vmem:[%s2 + $0x8] sm:$0xff]
      %v679 = vld [vmem:[%s625] sm:$0xff]
      %v680 = vld [vmem:[%s625 + $0x8] sm:$0xf]
      %v681 = vld [vmem:[%s625 + $0x10] sm:$0xff]
      %v682 = vld [vmem:[%s625 + $0x18] sm:$0xf]
      %v683 = vld [vmem:[%s625 + $0x20] sm:$0xff]
      %v684 = vld [vmem:[%s625 + $0x28] sm:$0xf]
      %v685 = vld [vmem:[%s625 + $0x30] sm:$0xff]
      %v686 = vld [vmem:[%s625 + $0x38] sm:$0xf]
      %v687 = vld [vmem:[%s625 + $0x40] sm:$0xff]
      %v688 = vld [vmem:[%s625 + $0x48] sm:$0xf]
      %v689 = vld [vmem:[%s625 + $0x50] sm:$0xff]
      %v690 = vld [vmem:[%s625 + $0x58] sm:$0xf]
      %v691 = vld [vmem:[%s625 + $0x60] sm:$0xff]
      %v692 = vld [vmem:[%s625 + $0x68] sm:$0xf]
      %v693 = vld [vmem:[%s625 + $0x70] sm:$0xff]
      %v694 = vld [vmem:[%s625 + $0x78] sm:$0xf]
      %v695 = vld [vmem:[%s625 + $0x80] sm:$0xff]
      %v696 = vld [vmem:[%s625 + $0x88] sm:$0xf]
      %v697 = vld [vmem:[%s625 + $0x90] sm:$0xff]
      %v698 = vld [vmem:[%s625 + $0x98] sm:$0xf]
      %v699 = vld [vmem:[%s625 + $0xa0] sm:$0xff]
      %v700 = vld [vmem:[%s625 + $0xa8] sm:$0xf]
      %v701 = vld [vmem:[%s625 + $0xb0] sm:$0xff]
      %v702 = vld [vmem:[%s625 + $0xb8] sm:$0xf]
      %v703 = vld [vmem:[%s625 + $0xc0] sm:$0xff]
      %v704 = vld [vmem:[%s625 + $0xc8] sm:$0xf]
      %v705 = vld [vmem:[%s625 + $0xd0] sm:$0xff]
      %v706 = vld [vmem:[%s625 + $0xd8] sm:$0xf]
      %v707 = vld [vmem:[%s625 + $0xe0] sm:$0xff]
      %v708 = vld [vmem:[%s625 + $0xe8] sm:$0xf]
      %v709 = vld [vmem:[%s625 + $0xf0] sm:$0xff]
      %v710 = vld [vmem:[%s625 + $0xf8] sm:$0xf]
      %v711 = vld [vmem:[%s629] sm:$0x7]
      %v713 = vlaneseq
      %v714 = vshrl.u32 %v713, 7
      %v715 = vsub.s32 0, %v714
      %v716 = vrot.slane %v711, %v715
      %v717 = vlaneseq
      %v718 = vshrl.u32 %v717, 7
      %v719 = vsub.s32 1, %v718
      %v720 = vrot.slane %v711, %v719
      %v721 = vlaneseq
      %v722 = vshrl.u32 %v721, 7
      %v723 = vsub.s32 2, %v722
      %v724 = vrot.slane %v711, %v723
      %v760 = vunpack.c.l.b16 %v679
      %v761 = vunpack.c.h.b16 %v679
      %v762 = vunpack.c.l.b16 %v680
      %v763 = vunpack.c.l.b16 %v681
      %v764 = vunpack.c.h.b16 %v681
      %v765 = vunpack.c.l.b16 %v682
      %v766 = vunpack.c.l.b16 %v683
      %v767 = vunpack.c.h.b16 %v683
      %v768 = vunpack.c.l.b16 %v684
      %v769 = vunpack.c.l.b16 %v685
      %v770 = vunpack.c.h.b16 %v685
      %v771 = vunpack.c.l.b16 %v686
      %v772 = vunpack.c.l.b16 %v687
      %v773 = vunpack.c.h.b16 %v687
      %v774 = vunpack.c.l.b16 %v688
      %v775 = vunpack.c.l.b16 %v689
      %v776 = vunpack.c.h.b16 %v689
      %v777 = vunpack.c.l.b16 %v690
      %v778 = vunpack.c.l.b16 %v691
      %v779 = vunpack.c.h.b16 %v691
      %v780 = vunpack.c.l.b16 %v692
      %v781 = vunpack.c.l.b16 %v693
      %v782 = vunpack.c.h.b16 %v693
      %v783 = vunpack.c.l.b16 %v694
      %v784 = vunpack.c.l.b16 %v695
      %v785 = vunpack.c.h.b16 %v695
      %v786 = vunpack.c.l.b16 %v696
      %v787 = vunpack.c.l.b16 %v697
      %v788 = vunpack.c.h.b16 %v697
      %v789 = vunpack.c.l.b16 %v698
      %v790 = vunpack.c.l.b16 %v699
      %v791 = vunpack.c.h.b16 %v699
      %v792 = vunpack.c.l.b16 %v700
      %v793 = vunpack.c.l.b16 %v701
      %v794 = vunpack.c.h.b16 %v701
      %v795 = vunpack.c.l.b16 %v702
      %v796 = vunpack.c.l.b16 %v703
      %v797 = vunpack.c.h.b16 %v703
      %v798 = vunpack.c.l.b16 %v704
      %v799 = vunpack.c.l.b16 %v705
      %v800 = vunpack.c.h.b16 %v705
      %v801 = vunpack.c.l.b16 %v706
      %v802 = vunpack.c.l.b16 %v707
      %v803 = vunpack.c.h.b16 %v707
      %v804 = vunpack.c.l.b16 %v708
      %v805 = vunpack.c.l.b16 %v709
      %v806 = vunpack.c.h.b16 %v709
      %v807 = vunpack.c.l.b16 %v710
      %v808 = vpack.c.b16 %v763, %v760
      %v809 = vpack.c.b16 %v764, %v761
      %v810 = vpack.c.b16 %v765, %v762
      %v811 = vpack.c.b16 %v769, %v766
      %v812 = vpack.c.b16 %v770, %v767
      %v813 = vpack.c.b16 %v771, %v768
      %v814 = vpack.c.b16 %v775, %v772
      %v815 = vpack.c.b16 %v776, %v773
      %v816 = vpack.c.b16 %v777, %v774
      %v817 = vpack.c.b16 %v781, %v778
      %v818 = vpack.c.b16 %v782, %v779
      %v819 = vpack.c.b16 %v783, %v780
      %v820 = vpack.c.b16 %v787, %v784
      %v821 = vpack.c.b16 %v788, %v785
      %v822 = vpack.c.b16 %v789, %v786
      %v823 = vpack.c.b16 %v793, %v790
      %v824 = vpack.c.b16 %v794, %v791
      %v825 = vpack.c.b16 %v795, %v792
      %v826 = vpack.c.b16 %v799, %v796
      %v827 = vpack.c.b16 %v800, %v797
      %v828 = vpack.c.b16 %v801, %v798
      %v829 = vpack.c.b16 %v805, %v802
      %v830 = vpack.c.b16 %v806, %v803
      %v831 = vpack.c.b16 %v807, %v804
      %856 = vmatprep.subr.bf16.mxu0 %v809
      %857 = vmatpush1.bf16.msra.mxu0 %v808
      %858 = vmatprep.subr.bf16.mxu0 %v812
      %859 = vmatpush1.bf16.msra.mxu0 %v811
      %860 = vmatprep.subr.bf16.mxu0 %v815
      %861 = vmatpush1.bf16.msra.mxu0 %v814
      %862 = vmatprep.subr.bf16.mxu0 %v818
      %863 = vmatpush1.bf16.msra.mxu0 %v817
      %864 = vmatprep.subr.bf16.mxu0 %v821
      %865 = vmatpush1.bf16.msra.mxu0 %v820
      %866 = vmatprep.subr.bf16.mxu0 %v824
      %867 = vmatpush1.bf16.msra.mxu0 %v823
      %868 = vmatprep.subr.bf16.mxu0 %v827
      %869 = vmatpush1.bf16.msra.mxu0 %v826
      %870 = vmatprep.subr.bf16.mxu0 %v830
      %871 = vmatpush1.bf16.msra.mxu0 %v829
      %872 = vmatprep.subr.bf16.mxu0 0
      %873 = vmatpush1.bf16.msra.mxu0 0
      %874 = vmatprep.subr.bf16.mxu0 0
      %875 = vmatpush1.bf16.msra.mxu0 0
      %876 = vmatprep.subr.bf16.mxu0 0
      %877 = vmatpush1.bf16.msra.mxu0 0
      %878 = vmatprep.subr.bf16.mxu0 0
      %879 = vmatpush1.bf16.msra.mxu0 0
      %880 = vmatprep.subr.bf16.mxu0 0
      %881 = vmatpush1.bf16.msra.mxu0 0
      %882 = vmatprep.subr.bf16.mxu0 0
      %883 = vmatpush1.bf16.msra.mxu0 0
      %884 = vmatprep.subr.bf16.mxu0 0
      %885 = vmatpush1.bf16.msra.mxu0 0
      %886 = vmatprep.subr.bf16.mxu0 0
      %887 = vmatpush1.bf16.msra.mxu0 0
      %888 = vmatprep.mubr.bf16.mxu0 0
      %889 = vmatmul.mubr.bf16.gmra.mrb[0].mxu0 %v676
      %v890 = vpop.f32.mrb[0].mxu0
      %v891 = vadd.f32 %v716, %v890
      %v892 = vpop.f32.mrb[0].mxu0
      %v893 = vadd.f32 %v720, %v892
      %v894 = vpop.f32.mrb[0].mxu0
      %v895 = vadd.f32 %v716, %v894
      %v896 = vpop.f32.mrb[0].mxu0
      %v897 = vadd.f32 %v720, %v896
      %898 = vdwg.mxu0
      %899 = vmatprep.subr.bf16.mxu0 0
      %900 = vmatpush1.bf16.msra.mxu0 %v810
      %901 = vmatprep.subr.bf16.mxu0 0
      %902 = vmatpush1.bf16.msra.mxu0 %v813
      %903 = vmatprep.subr.bf16.mxu0 0
      %904 = vmatpush1.bf16.msra.mxu0 %v816
      %905 = vmatprep.subr.bf16.mxu0 0
      %906 = vmatpush1.bf16.msra.mxu0 %v819
      %907 = vmatprep.subr.bf16.mxu0 0
      %908 = vmatpush1.bf16.msra.mxu0 %v822
      %909 = vmatprep.subr.bf16.mxu0 0
      %910 = vmatpush1.bf16.msra.mxu0 %v825
      %911 = vmatprep.subr.bf16.mxu0 0
      %912 = vmatpush1.bf16.msra.mxu0 %v828
      %913 = vmatprep.subr.bf16.mxu0 0
      %914 = vmatpush1.bf16.msra.mxu0 %v831
      %915 = vmatprep.subr.bf16.mxu0 0
      %916 = vmatpush1.bf16.msra.mxu0 0
      %917 = vmatprep.subr.bf16.mxu0 0
      %918 = vmatpush1.bf16.msra.mxu0 0
      %919 = vmatprep.subr.bf16.mxu0 0
      %920 = vmatpush1.bf16.msra.mxu0 0
      %921 = vmatprep.subr.bf16.mxu0 0
      %922 = vmatpush1.bf16.msra.mxu0 0
      %923 = vmatprep.subr.bf16.mxu0 0
      %924 = vmatpush1.bf16.msra.mxu0 0
      %925 = vmatprep.subr.bf16.mxu0 0
      %926 = vmatpush1.bf16.msra.mxu0 0
      %927 = vmatprep.subr.bf16.mxu0 0
      %928 = vmatpush1.bf16.msra.mxu0 0
      %929 = vmatprep.subr.bf16.mxu0 0
      %930 = vmatpush1.bf16.msra.mxu0 0
      %931 = vmatprep.mubr.bf16.mxu0 0
      %932 = vmatmul.mubr.bf16.gmra.mrb[0].mxu0 %v676
      %v933 = vpop.f32.mrb[0].mxu0
      %v934 = vadd.f32 %v724, %v933
      %v935 = vpop.f32.mrb[0].mxu0
      %v936 = vpop.f32.mrb[0].mxu0
      %v937 = vadd.f32 %v724, %v936
      %v938 = vpop.f32.mrb[0].mxu0
      %939 = vdwg.mxu0
      %942 = vrot.lane.b32.xlu0 %v891, 120
      %v943 = vpop.permute.xlu0 %942
      %944 = vrot.lane.b32.xlu0 %v895, 120
      %v945 = vpop.permute.xlu0 %944
      %948 = vrot.lane.b32.xlu0 %v891, 112
      %v949 = vpop.permute.xlu0 %948
      %950 = vrot.lane.b32.xlu0 %v895, 112
      %v951 = vpop.permute.xlu0 %950
      %954 = vrot.lane.b32.xlu0 %v891, 104
      %v955 = vpop.permute.xlu0 %954
      %956 = vrot.lane.b32.xlu0 %v895, 104
      %v957 = vpop.permute.xlu0 %956
      %v960 = vpack.c.bf16 %v895, %v891
      %v961 = vpack.c.bf16 %v945, %v943
      %v962 = vpack.c.bf16 %v951, %v949
      %v963 = vpack.c.bf16 %v957, %v955
      %966 = vrot.lane.b32.xlu0 %v893, 120
      %v967 = vpop.permute.xlu0 %966
      %968 = vrot.lane.b32.xlu0 %v897, 120
      %v969 = vpop.permute.xlu0 %968
      %972 = vrot.lane.b32.xlu0 %v893, 112
      %v973 = vpop.permute.xlu0 %972
      %974 = vrot.lane.b32.xlu0 %v897, 112
      %v975 = vpop.permute.xlu0 %974
      %978 = vrot.lane.b32.xlu0 %v893, 104
      %v979 = vpop.permute.xlu0 %978
      %980 = vrot.lane.b32.xlu0 %v897, 104
      %v981 = vpop.permute.xlu0 %980
      %v984 = vpack.c.bf16 %v897, %v893
      %v985 = vpack.c.bf16 %v969, %v967
      %v986 = vpack.c.bf16 %v975, %v973
      %v987 = vpack.c.bf16 %v981, %v979
      %990 = vrot.lane.b32.xlu0 %v934, 120
      %v991 = vpop.permute.xlu0 %990
      %992 = vrot.lane.b32.xlu0 %v937, 120
      %v993 = vpop.permute.xlu0 %992
      %996 = vrot.lane.b32.xlu0 %v934, 112
      %v997 = vpop.permute.xlu0 %996
      %998 = vrot.lane.b32.xlu0 %v937, 112
      %v999 = vpop.permute.xlu0 %998
      %1002 = vrot.lane.b32.xlu0 %v934, 104
      %v1003 = vpop.permute.xlu0 %1002
      %1004 = vrot.lane.b32.xlu0 %v937, 104
      %v1005 = vpop.permute.xlu0 %1004
      %v1008 = vpack.c.bf16 %v937, %v934
      %v1009 = vpack.c.bf16 %v993, %v991
      %v1010 = vpack.c.bf16 %v999, %v997
      %v1011 = vpack.c.bf16 %v1005, %v1003
      %vm1012 = vcmask 64512
      %v1014 = vsel %vm1012, %v960, 0
      %v1017 = vsel %vm1012, %v984, 0
      %1019 = vmatprep.subr.bf16.mxu0 0
      %1020 = vmatpush1.bf16.xpose.msra.mxu0 %v1017
      %1021 = vmatprep.subr.bf16.mxu0 0
      %1022 = vmatpush1.bf16.xpose.msra.mxu0 0
      %1023 = vmatprep.subr.bf16.mxu0 0
      %1024 = vmatpush1.bf16.xpose.msra.mxu0 0
      %1025 = vmatprep.subr.bf16.mxu0 0
      %1026 = vmatpush1.bf16.xpose.msra.mxu0 0
      %1027 = vmatprep.subr.bf16.mxu0 0
      %1028 = vmatpush1.bf16.xpose.msra.mxu0 0
      %1029 = vmatprep.subr.bf16.mxu0 0
      %1030 = vmatpush1.bf16.xpose.msra.mxu0 0
      %1031 = vmatprep.subr.bf16.mxu0 0
      %1032 = vmatpush1.bf16.xpose.msra.mxu0 0
      %1033 = vmatprep.subr.bf16.mxu0 0
      %1034 = vmatpush1.bf16.xpose.msra.mxu0 0
      %1035 = vmatprep.subr.bf16.mxu0 0
      %1036 = vmatpush1.bf16.xpose.msra.mxu0 0
      %1037 = vmatprep.subr.bf16.mxu0 0
      %1038 = vmatpush1.bf16.xpose.msra.mxu0 0
      %1039 = vmatprep.subr.bf16.mxu0 0
      %1040 = vmatpush1.bf16.xpose.msra.mxu0 0
      %1041 = vmatprep.subr.bf16.mxu0 0
      %1042 = vmatpush1.bf16.xpose.msra.mxu0 0
      %1043 = vmatprep.subr.bf16.mxu0 0
      %1044 = vmatpush1.bf16.xpose.msra.mxu0 0
      %1045 = vmatprep.subr.bf16.mxu0 0
      %1046 = vmatpush1.bf16.xpose.msra.mxu0 0
      %1047 = vmatprep.subr.bf16.mxu0 0
      %1048 = vmatpush1.bf16.xpose.msra.mxu0 0
      %1049 = vmatprep.subr.bf16.mxu0 0
      %1050 = vmatpush1.bf16.xpose.msra.mxu0 0
      %1051 = vmatprep.mubr.bf16.mxu0 0
      %1052 = vmatmul.mubr.bf16.gmra.mrb[0].mxu0 %v1014
      %v1053 = vpop.f32.mrb[0].mxu0
      %v1054 = vadd.f32 %v677, %v1053
      %v1055 = vpop.f32.mrb[0].mxu0
      %v1056 = vpop.f32.mrb[0].mxu0
      %v1057 = vadd.f32 %v678, %v1056
      %v1058 = vpop.f32.mrb[0].mxu0
      %1059 = vdwg.mxu0
      %v1061 = vsel %vm1012, %v961, 0
      %v1064 = vsel %vm1012, %v985, 0
      %1066 = vmatprep.subr.bf16.mxu0 0
      %1067 = vmatpush1.bf16.xpose.msra.mxu0 %v1064
      %1068 = vmatprep.subr.bf16.mxu0 0
      %1069 = vmatpush1.bf16.xpose.msra.mxu0 0
      %1070 = vmatprep.subr.bf16.mxu0 0
      %1071 = vmatpush1.bf16.xpose.msra.mxu0 0
      %1072 = vmatprep.subr.bf16.mxu0 0
      %1073 = vmatpush1.bf16.xpose.msra.mxu0 0
      %1074 = vmatprep.subr.bf16.mxu0 0
      %1075 = vmatpush1.bf16.xpose.msra.mxu0 0
      %1076 = vmatprep.subr.bf16.mxu0 0
      %1077 = vmatpush1.bf16.xpose.msra.mxu0 0
      %1078 = vmatprep.subr.bf16.mxu0 0
      %1079 = vmatpush1.bf16.xpose.msra.mxu0 0
      %1080 = vmatprep.subr.bf16.mxu0 0
      %1081 = vmatpush1.bf16.xpose.msra.mxu0 0
      %1082 = vmatprep.subr.bf16.mxu0 0
      %1083 = vmatpush1.bf16.xpose.msra.mxu0 0
      %1084 = vmatprep.subr.bf16.mxu0 0
      %1085 = vmatpush1.bf16.xpose.msra.mxu0 0
      %1086 = vmatprep.subr.bf16.mxu0 0
      %1087 = vmatpush1.bf16.xpose.msra.mxu0 0
      %1088 = vmatprep.subr.bf16.mxu0 0
      %1089 = vmatpush1.bf16.xpose.msra.mxu0 0
      %1090 = vmatprep.subr.bf16.mxu0 0
      %1091 = vmatpush1.bf16.xpose.msra.mxu0 0
      %1092 = vmatprep.subr.bf16.mxu0 0
      %1093 = vmatpush1.bf16.xpose.msra.mxu0 0
      %1094 = vmatprep.subr.bf16.mxu0 0
      %1095 = vmatpush1.bf16.xpose.msra.mxu0 0
      %1096 = vmatprep.subr.bf16.mxu0 0
      %1097 = vmatpush1.bf16.xpose.msra.mxu0 0
      %1098 = vmatprep.mubr.bf16.mxu0 0
      %1099 = vmatmul.mubr.bf16.gmra.mrb[0].mxu0 %v1061
      %v1100 = vpop.f32.mrb[0].mxu0
      %v1101 = vadd.f32 %v677, %v1100
      %v1102 = vpop.f32.mrb[0].mxu0
      %v1103 = vpop.f32.mrb[0].mxu0
      %v1104 = vadd.f32 %v678, %v1103
      %v1105 = vpop.f32.mrb[0].mxu0
      %1106 = vdwg.mxu0
      %v1108 = vsel %vm1012, %v962, 0
      %v1111 = vsel %vm1012, %v986, 0
      %1113 = vmatprep.subr.bf16.mxu0 0
      %1114 = vmatpush1.bf16.xpose.msra.mxu0 %v1111
      %1115 = vmatprep.subr.bf16.mxu0 0
      %1116 = vmatpush1.bf16.xpose.msra.mxu0 0
      %1117 = vmatprep.subr.bf16.mxu0 0
      %1118 = vmatpush1.bf16.xpose.msra.mxu0 0
      %1119 = vmatprep.subr.bf16.mxu0 0
      %1120 = vmatpush1.bf16.xpose.msra.mxu0 0
      %1121 = vmatprep.subr.bf16.mxu0 0
      %1122 = vmatpush1.bf16.xpose.msra.mxu0 0
      %1123 = vmatprep.subr.bf16.mxu0 0
      %1124 = vmatpush1.bf16.xpose.msra.mxu0 0
      %1125 = vmatprep.subr.bf16.mxu0 0
      %1126 = vmatpush1.bf16.xpose.msra.mxu0 0
      %1127 = vmatprep.subr.bf16.mxu0 0
      %1128 = vmatpush1.bf16.xpose.msra.mxu0 0
      %1129 = vmatprep.subr.bf16.mxu0 0
      %1130 = vmatpush1.bf16.xpose.msra.mxu0 0
      %1131 = vmatprep.subr.bf16.mxu0 0
      %1132 = vmatpush1.bf16.xpose.msra.mxu0 0
      %1133 = vmatprep.subr.bf16.mxu0 0
      %1134 = vmatpush1.bf16.xpose.msra.mxu0 0
      %1135 = vmatprep.subr.bf16.mxu0 0
      %1136 = vmatpush1.bf16.xpose.msra.mxu0 0
      %1137 = vmatprep.subr.bf16.mxu0 0
      %1138 = vmatpush1.bf16.xpose.msra.mxu0 0
      %1139 = vmatprep.subr.bf16.mxu0 0
      %1140 = vmatpush1.bf16.xpose.msra.mxu0 0
      %1141 = vmatprep.subr.bf16.mxu0 0
      %1142 = vmatpush1.bf16.xpose.msra.mxu0 0
      %1143 = vmatprep.subr.bf16.mxu0 0
      %1144 = vmatpush1.bf16.xpose.msra.mxu0 0
      %1145 = vmatprep.mubr.bf16.mxu0 0
      %1146 = vmatmul.mubr.bf16.gmra.mrb[0].mxu0 %v1108
      %v1147 = vpop.f32.mrb[0].mxu0
      %v1148 = vadd.f32 %v677, %v1147
      %v1149 = vpop.f32.mrb[0].mxu0
      %v1150 = vpop.f32.mrb[0].mxu0
      %v1151 = vadd.f32 %v678, %v1150
      %v1152 = vpop.f32.mrb[0].mxu0
      %1153 = vdwg.mxu0
      %v1155 = vsel %vm1012, %v963, 0
      %v1158 = vsel %vm1012, %v987, 0
      %1160 = vmatprep.subr.bf16.mxu0 0
      %1161 = vmatpush1.bf16.xpose.msra.mxu0 %v1158
      %1162 = vmatprep.subr.bf16.mxu0 0
      %1163 = vmatpush1.bf16.xpose.msra.mxu0 0
      %1164 = vmatprep.subr.bf16.mxu0 0
      %1165 = vmatpush1.bf16.xpose.msra.mxu0 0
      %1166 = vmatprep.subr.bf16.mxu0 0
      %1167 = vmatpush1.bf16.xpose.msra.mxu0 0
      %1168 = vmatprep.subr.bf16.mxu0 0
      %1169 = vmatpush1.bf16.xpose.msra.mxu0 0
      %1170 = vmatprep.subr.bf16.mxu0 0
      %1171 = vmatpush1.bf16.xpose.msra.mxu0 0
      %1172 = vmatprep.subr.bf16.mxu0 0
      %1173 = vmatpush1.bf16.xpose.msra.mxu0 0
      %1174 = vmatprep.subr.bf16.mxu0 0
      %1175 = vmatpush1.bf16.xpose.msra.mxu0 0
      %1176 = vmatprep.subr.bf16.mxu0 0
      %1177 = vmatpush1.bf16.xpose.msra.mxu0 0
      %1178 = vmatprep.subr.bf16.mxu0 0
      %1179 = vmatpush1.bf16.xpose.msra.mxu0 0
      %1180 = vmatprep.subr.bf16.mxu0 0
      %1181 = vmatpush1.bf16.xpose.msra.mxu0 0
      %1182 = vmatprep.subr.bf16.mxu0 0
      %1183 = vmatpush1.bf16.xpose.msra.mxu0 0
      %1184 = vmatprep.subr.bf16.mxu0 0
      %1185 = vmatpush1.bf16.xpose.msra.mxu0 0
      %1186 = vmatprep.subr.bf16.mxu0 0
      %1187 = vmatpush1.bf16.xpose.msra.mxu0 0
      %1188 = vmatprep.subr.bf16.mxu0 0
      %1189 = vmatpush1.bf16.xpose.msra.mxu0 0
      %1190 = vmatprep.subr.bf16.mxu0 0
      %1191 = vmatpush1.bf16.xpose.msra.mxu0 0
      %1192 = vmatprep.mubr.bf16.mxu0 0
      %1193 = vmatmul.mubr.bf16.gmra.mrb[0].mxu0 %v1155
      %v1194 = vpop.f32.mrb[0].mxu0
      %v1195 = vadd.f32 %v677, %v1194
      %v1196 = vpop.f32.mrb[0].mxu0
      %v1197 = vpop.f32.mrb[0].mxu0
      %v1198 = vadd.f32 %v678, %v1197
      %v1199 = vpop.f32.mrb[0].mxu0
      %1200 = vdwg.mxu0
      %vm1201 = vcmask 130048
      %v1202 = vsel %vm1201, %v1054, -inf
      %1203 = vmax.xlane.f32.xlu0 %v1202
      %v1204 = vpop.xlane.xlu0 %1203
      %v1205 = vsel %vm1201, %v1057, -inf
      %1206 = vmax.xlane.f32.xlu0 %v1205
      %v1207 = vpop.xlane.xlu0 %1206
      %v1208 = vsel %vm1201, %v1101, -inf
      %1209 = vmax.xlane.f32.xlu0 %v1208
      %v1210 = vpop.xlane.xlu0 %1209
      %v1211 = vsel %vm1201, %v1104, -inf
      %1212 = vmax.xlane.f32.xlu0 %v1211
      %v1213 = vpop.xlane.xlu0 %1212
      %v1214 = vsel %vm1201, %v1148, -inf
      %1215 = vmax.xlane.f32.xlu0 %v1214
      %v1216 = vpop.xlane.xlu0 %1215
      %v1217 = vsel %vm1201, %v1151, -inf
      %1218 = vmax.xlane.f32.xlu0 %v1217
      %v1219 = vpop.xlane.xlu0 %1218
      %v1220 = vsel %vm1201, %v1195, -inf
      %1221 = vmax.xlane.f32.xlu0 %v1220
      %v1222 = vpop.xlane.xlu0 %1221
      %v1223 = vsel %vm1201, %v1198, -inf
      %1224 = vmax.xlane.f32.xlu0 %v1223
      %v1225 = vpop.xlane.xlu0 %1224
      %v1226 = vsub.f32 %v1054, %v1204
      %v1227 = vsub.f32 %v1057, %v1207
      %v1228 = vsub.f32 %v1101, %v1210
      %v1229 = vsub.f32 %v1104, %v1213
      %v1230 = vsub.f32 %v1148, %v1216
      %v1231 = vsub.f32 %v1151, %v1219
      %v1232 = vsub.f32 %v1195, %v1222
      %v1233 = vsub.f32 %v1198, %v1225
      %v1234 = vmul.f32 %v1226, 1.442695
      %v1235 = vpow.pop %v1234
      %v1236 = vmul.f32 %v1227, 1.442695
      %v1237 = vpow.pop %v1236
      %v1238 = vmul.f32 %v1228, 1.442695
      %v1239 = vpow.pop %v1238
      %v1240 = vmul.f32 %v1229, 1.442695
      %v1241 = vpow.pop %v1240
      %v1242 = vmul.f32 %v1230, 1.442695
      %v1243 = vpow.pop %v1242
      %v1244 = vmul.f32 %v1231, 1.442695
      %v1245 = vpow.pop %v1244
      %v1246 = vmul.f32 %v1232, 1.442695
      %v1247 = vpow.pop %v1246
      %v1248 = vmul.f32 %v1233, 1.442695
      %v1249 = vpow.pop %v1248
      %v1250 = vsel %vm1201, %v1235, 0.0
      %1251 = vadd.xlane.f32.xlu0 %v1250
      %v1252 = vpop.xlane.xlu0 %1251
      %v1253 = vsel %vm1201, %v1237, 0.0
      %1254 = vadd.xlane.f32.xlu0 %v1253
      %v1255 = vpop.xlane.xlu0 %1254
      %v1256 = vsel %vm1201, %v1239, 0.0
      %1257 = vadd.xlane.f32.xlu0 %v1256
      %v1258 = vpop.xlane.xlu0 %1257
      %v1259 = vsel %vm1201, %v1241, 0.0
      %1260 = vadd.xlane.f32.xlu0 %v1259
      %v1261 = vpop.xlane.xlu0 %1260
      %v1262 = vsel %vm1201, %v1243, 0.0
      %1263 = vadd.xlane.f32.xlu0 %v1262
      %v1264 = vpop.xlane.xlu0 %1263
      %v1265 = vsel %vm1201, %v1245, 0.0
      %1266 = vadd.xlane.f32.xlu0 %v1265
      %v1267 = vpop.xlane.xlu0 %1266
      %v1268 = vsel %vm1201, %v1247, 0.0
      %1269 = vadd.xlane.f32.xlu0 %v1268
      %v1270 = vpop.xlane.xlu0 %1269
      %v1271 = vsel %vm1201, %v1249, 0.0
      %1272 = vadd.xlane.f32.xlu0 %v1271
      %v1273 = vpop.xlane.xlu0 %1272
      %v1274 = vrcp.pop %v1252
      %v1275 = vrcp.pop %v1255
      %v1276 = vrcp.pop %v1258
      %v1277 = vrcp.pop %v1261
      %v1278 = vrcp.pop %v1264
      %v1279 = vrcp.pop %v1267
      %v1280 = vrcp.pop %v1270
      %v1281 = vrcp.pop %v1273
      %v1282 = vmul.f32 %v1235, %v1274
      %v1283 = vmul.f32 %v1237, %v1275
      %v1284 = vmul.f32 %v1239, %v1276
      %v1285 = vmul.f32 %v1241, %v1277
      %v1286 = vmul.f32 %v1243, %v1278
      %v1287 = vmul.f32 %v1245, %v1279
      %v1288 = vmul.f32 %v1247, %v1280
      %v1289 = vmul.f32 %v1249, %v1281
      %v1290 = vpack.c.bf16 %v1283, %v1282
      %v1291 = vpack.c.bf16 %v1285, %v1284
      %v1292 = vpack.c.bf16 %v1287, %v1286
      %v1293 = vpack.c.bf16 %v1289, %v1288
      %v1295 = vsel %vm1201, %v1290, 0
      %1297 = vmatprep.subr.bf16.mxu0 0
      %1298 = vmatpush1.bf16.msra.mxu0 %v1008
      %1299 = vmatprep.subr.bf16.mxu0 0
      %1300 = vmatpush1.bf16.msra.mxu0 0
      %1301 = vmatprep.subr.bf16.mxu0 0
      %1302 = vmatpush1.bf16.msra.mxu0 0
      %1303 = vmatprep.subr.bf16.mxu0 0
      %1304 = vmatpush1.bf16.msra.mxu0 0
      %1305 = vmatprep.subr.bf16.mxu0 0
      %1306 = vmatpush1.bf16.msra.mxu0 0
      %1307 = vmatprep.subr.bf16.mxu0 0
      %1308 = vmatpush1.bf16.msra.mxu0 0
      %1309 = vmatprep.subr.bf16.mxu0 0
      %1310 = vmatpush1.bf16.msra.mxu0 0
      %1311 = vmatprep.subr.bf16.mxu0 0
      %1312 = vmatpush1.bf16.msra.mxu0 0
      %1313 = vmatprep.subr.bf16.mxu0 0
      %1314 = vmatpush1.bf16.msra.mxu0 0
      %1315 = vmatprep.subr.bf16.mxu0 0
      %1316 = vmatpush1.bf16.msra.mxu0 0
      %1317 = vmatprep.subr.bf16.mxu0 0
      %1318 = vmatpush1.bf16.msra.mxu0 0
      %1319 = vmatprep.subr.bf16.mxu0 0
      %1320 = vmatpush1.bf16.msra.mxu0 0
      %1321 = vmatprep.subr.bf16.mxu0 0
      %1322 = vmatpush1.bf16.msra.mxu0 0
      %1323 = vmatprep.subr.bf16.mxu0 0
      %1324 = vmatpush1.bf16.msra.mxu0 0
      %1325 = vmatprep.subr.bf16.mxu0 0
      %1326 = vmatpush1.bf16.msra.mxu0 0
      %1327 = vmatprep.subr.bf16.mxu0 0
      %1328 = vmatpush1.bf16.msra.mxu0 0
      %1329 = vmatprep.mubr.bf16.mxu0 0
      %1330 = vmatmul.mubr.bf16.gmra.mrb[0].mxu0 %v1295
      %v1331 = vpop.f32.mrb[0].mxu0
      %v1332 = vadd.f32 0.0, %v1331
      %v1333 = vpop.f32.mrb[0].mxu0
      %v1334 = vpop.f32.mrb[0].mxu0
      %v1335 = vadd.f32 0.0, %v1334
      %v1336 = vpop.f32.mrb[0].mxu0
      %1337 = vdwg.mxu0
      %v1339 = vsel %vm1201, %v1291, 0
      %1341 = vmatprep.subr.bf16.mxu0 0
      %1342 = vmatpush1.bf16.msra.mxu0 %v1009
      %1343 = vmatprep.subr.bf16.mxu0 0
      %1344 = vmatpush1.bf16.msra.mxu0 0
      %1345 = vmatprep.subr.bf16.mxu0 0
      %1346 = vmatpush1.bf16.msra.mxu0 0
      %1347 = vmatprep.subr.bf16.mxu0 0
      %1348 = vmatpush1.bf16.msra.mxu0 0
      %1349 = vmatprep.subr.bf16.mxu0 0
      %1350 = vmatpush1.bf16.msra.mxu0 0
      %1351 = vmatprep.subr.bf16.mxu0 0
      %1352 = vmatpush1.bf16.msra.mxu0 0
      %1353 = vmatprep.subr.bf16.mxu0 0
      %1354 = vmatpush1.bf16.msra.mxu0 0
      %1355 = vmatprep.subr.bf16.mxu0 0
      %1356 = vmatpush1.bf16.msra.mxu0 0
      %1357 = vmatprep.subr.bf16.mxu0 0
      %1358 = vmatpush1.bf16.msra.mxu0 0
      %1359 = vmatprep.subr.bf16.mxu0 0
      %1360 = vmatpush1.bf16.msra.mxu0 0
      %1361 = vmatprep.subr.bf16.mxu0 0
      %1362 = vmatpush1.bf16.msra.mxu0 0
      %1363 = vmatprep.subr.bf16.mxu0 0
      %1364 = vmatpush1.bf16.msra.mxu0 0
      %1365 = vmatprep.subr.bf16.mxu0 0
      %1366 = vmatpush1.bf16.msra.mxu0 0
      %1367 = vmatprep.subr.bf16.mxu0 0
      %1368 = vmatpush1.bf16.msra.mxu0 0
      %1369 = vmatprep.subr.bf16.mxu0 0
      %1370 = vmatpush1.bf16.msra.mxu0 0
      %1371 = vmatprep.subr.bf16.mxu0 0
      %1372 = vmatpush1.bf16.msra.mxu0 0
      %1373 = vmatprep.mubr.bf16.mxu0 0
      %1374 = vmatmul.mubr.bf16.gmra.mrb[0].mxu0 %v1339
      %v1375 = vpop.f32.mrb[0].mxu0
      %v1376 = vadd.f32 0.0, %v1375
      %v1377 = vpop.f32.mrb[0].mxu0
      %v1378 = vpop.f32.mrb[0].mxu0
      %v1379 = vadd.f32 0.0, %v1378
      %v1380 = vpop.f32.mrb[0].mxu0
      %1381 = vdwg.mxu0
      %v1383 = vsel %vm1201, %v1292, 0
      %1385 = vmatprep.subr.bf16.mxu0 0
      %1386 = vmatpush1.bf16.msra.mxu0 %v1010
      %1387 = vmatprep.subr.bf16.mxu0 0
      %1388 = vmatpush1.bf16.msra.mxu0 0
      %1389 = vmatprep.subr.bf16.mxu0 0
      %1390 = vmatpush1.bf16.msra.mxu0 0
      %1391 = vmatprep.subr.bf16.mxu0 0
      %1392 = vmatpush1.bf16.msra.mxu0 0
      %1393 = vmatprep.subr.bf16.mxu0 0
      %1394 = vmatpush1.bf16.msra.mxu0 0
      %1395 = vmatprep.subr.bf16.mxu0 0
      %1396 = vmatpush1.bf16.msra.mxu0 0
      %1397 = vmatprep.subr.bf16.mxu0 0
      %1398 = vmatpush1.bf16.msra.mxu0 0
      %1399 = vmatprep.subr.bf16.mxu0 0
      %1400 = vmatpush1.bf16.msra.mxu0 0
      %1401 = vmatprep.subr.bf16.mxu0 0
      %1402 = vmatpush1.bf16.msra.mxu0 0
      %1403 = vmatprep.subr.bf16.mxu0 0
      %1404 = vmatpush1.bf16.msra.mxu0 0
      %1405 = vmatprep.subr.bf16.mxu0 0
      %1406 = vmatpush1.bf16.msra.mxu0 0
      %1407 = vmatprep.subr.bf16.mxu0 0
      %1408 = vmatpush1.bf16.msra.mxu0 0
      %1409 = vmatprep.subr.bf16.mxu0 0
      %1410 = vmatpush1.bf16.msra.mxu0 0
      %1411 = vmatprep.subr.bf16.mxu0 0
      %1412 = vmatpush1.bf16.msra.mxu0 0
      %1413 = vmatprep.subr.bf16.mxu0 0
      %1414 = vmatpush1.bf16.msra.mxu0 0
      %1415 = vmatprep.subr.bf16.mxu0 0
      %1416 = vmatpush1.bf16.msra.mxu0 0
      %1417 = vmatprep.mubr.bf16.mxu0 0
      %1418 = vmatmul.mubr.bf16.gmra.mrb[0].mxu0 %v1383
      %v1419 = vpop.f32.mrb[0].mxu0
      %v1420 = vadd.f32 0.0, %v1419
      %v1421 = vpop.f32.mrb[0].mxu0
      %v1422 = vpop.f32.mrb[0].mxu0
      %v1423 = vadd.f32 0.0, %v1422
      %v1424 = vpop.f32.mrb[0].mxu0
      %1425 = vdwg.mxu0
      %v1427 = vsel %vm1201, %v1293, 0
      %1429 = vmatprep.subr.bf16.mxu0 0
      %1430 = vmatpush1.bf16.msra.mxu0 %v1011
      %1431 = vmatprep.subr.bf16.mxu0 0
      %1432 = vmatpush1.bf16.msra.mxu0 0
      %1433 = vmatprep.subr.bf16.mxu0 0
      %1434 = vmatpush1.bf16.msra.mxu0 0
      %1435 = vmatprep.subr.bf16.mxu0 0
      %1436 = vmatpush1.bf16.msra.mxu0 0
      %1437 = vmatprep.subr.bf16.mxu0 0
      %1438 = vmatpush1.bf16.msra.mxu0 0
      %1439 = vmatprep.subr.bf16.mxu0 0
      %1440 = vmatpush1.bf16.msra.mxu0 0
      %1441 = vmatprep.subr.bf16.mxu0 0
      %1442 = vmatpush1.bf16.msra.mxu0 0
      %1443 = vmatprep.subr.bf16.mxu0 0
      %1444 = vmatpush1.bf16.msra.mxu0 0
      %1445 = vmatprep.subr.bf16.mxu0 0
      %1446 = vmatpush1.bf16.msra.mxu0 0
      %1447 = vmatprep.subr.bf16.mxu0 0
      %1448 = vmatpush1.bf16.msra.mxu0 0
      %1449 = vmatprep.subr.bf16.mxu0 0
      %1450 = vmatpush1.bf16.msra.mxu0 0
      %1451 = vmatprep.subr.bf16.mxu0 0
      %1452 = vmatpush1.bf16.msra.mxu0 0
      %1453 = vmatprep.subr.bf16.mxu0 0
      %1454 = vmatpush1.bf16.msra.mxu0 0
      %1455 = vmatprep.subr.bf16.mxu0 0
      %1456 = vmatpush1.bf16.msra.mxu0 0
      %1457 = vmatprep.subr.bf16.mxu0 0
      %1458 = vmatpush1.bf16.msra.mxu0 0
      %1459 = vmatprep.subr.bf16.mxu0 0
      %1460 = vmatpush1.bf16.msra.mxu0 0
      %1461 = vmatprep.mubr.bf16.mxu0 0
      %1462 = vmatmul.mubr.bf16.gmra.mrb[0].mxu0 %v1427
      %v1463 = vpop.f32.mrb[0].mxu0
      %v1464 = vadd.f32 0.0, %v1463
      %v1465 = vpop.f32.mrb[0].mxu0
      %v1466 = vpop.f32.mrb[0].mxu0
      %v1467 = vadd.f32 0.0, %v1466
      %v1468 = vpop.f32.mrb[0].mxu0
      %1469 = vdwg.mxu0
      %1472 = vrot.lane.b32.xlu0 %v1376, 8
      %v1473 = vpop.permute.xlu0 %1472
      %1474 = vrot.lane.b32.xlu0 %v1379, 8
      %v1475 = vpop.permute.xlu0 %1474
      %1480 = vrot.lane.b32.xlu0 %v1420, 16
      %v1481 = vpop.permute.xlu0 %1480
      %1482 = vrot.lane.b32.xlu0 %v1423, 16
      %v1483 = vpop.permute.xlu0 %1482
      %1488 = vrot.lane.b32.xlu0 %v1464, 24
      %v1489 = vpop.permute.xlu0 %1488
      %1490 = vrot.lane.b32.xlu0 %v1467, 24
      %v1491 = vpop.permute.xlu0 %1490
      %v1494 = vsel %vm1012, %v1332, %v1473
      %v1495 = vsel %vm1012, %v1335, %v1475
      %v1496 = vsel %vm1201, %v1494, %v1481
      %v1497 = vsel %vm1201, %v1495, %v1483
      %vm1498 = vcmask 195584
      %v1499 = vsel %vm1498, %v1496, %v1489
      %v1500 = vsel %vm1498, %v1497, %v1491
      %v1501 = vld [vmem:[%s625 + $0xc] sm:$0xf]
      %v1502 = vld [vmem:[%s625 + $0x1c] sm:$0xf]
      %v1503 = vld [vmem:[%s625 + $0x2c] sm:$0xf]
      %v1504 = vld [vmem:[%s625 + $0x3c] sm:$0xf]
      %v1505 = vpack.c.bf16 %v1500, %v1499
      %v1506 = vld [vmem:[%s629 + $0x3] sm:$0x1]
      %v1508 = vlaneseq
      %v1509 = vshrl.u32 %v1508, 7
      %v1510 = vsub.s32 0, %v1509
      %v1511 = vrot.slane %v1506, %v1510
      %v1517 = vunpack.c.l.b16 %v1501
      %v1518 = vunpack.c.l.b16 %v1502
      %v1519 = vunpack.c.l.b16 %v1503
      %v1520 = vunpack.c.l.b16 %v1504
      %v1521 = vpack.c.b16 %v1518, %v1517
      %v1522 = vpack.c.b16 %v1520, %v1519
      %vm1525 = vcmask 261120
      %v1527 = vsel %vm1525, %v1505, 0
      %1529 = vmatprep.subr.bf16.mxu0 0
      %1530 = vmatpush1.bf16.msra.mxu0 %v1521
      %1531 = vmatprep.subr.bf16.mxu0 0
      %1532 = vmatpush1.bf16.msra.mxu0 %v1522
      %1533 = vmatprep.subr.bf16.mxu0 0
      %1534 = vmatpush1.bf16.msra.mxu0 0
      %1535 = vmatprep.subr.bf16.mxu0 0
      %1536 = vmatpush1.bf16.msra.mxu0 0
      %1537 = vmatprep.subr.bf16.mxu0 0
      %1538 = vmatpush1.bf16.msra.mxu0 0
      %1539 = vmatprep.subr.bf16.mxu0 0
      %1540 = vmatpush1.bf16.msra.mxu0 0
      %1541 = vmatprep.subr.bf16.mxu0 0
      %1542 = vmatpush1.bf16.msra.mxu0 0
      %1543 = vmatprep.subr.bf16.mxu0 0
      %1544 = vmatpush1.bf16.msra.mxu0 0
      %1545 = vmatprep.subr.bf16.mxu0 0
      %1546 = vmatpush1.bf16.msra.mxu0 0
      %1547 = vmatprep.subr.bf16.mxu0 0
      %1548 = vmatpush1.bf16.msra.mxu0 0
      %1549 = vmatprep.subr.bf16.mxu0 0
      %1550 = vmatpush1.bf16.msra.mxu0 0
      %1551 = vmatprep.subr.bf16.mxu0 0
      %1552 = vmatpush1.bf16.msra.mxu0 0
      %1553 = vmatprep.subr.bf16.mxu0 0
      %1554 = vmatpush1.bf16.msra.mxu0 0
      %1555 = vmatprep.subr.bf16.mxu0 0
      %1556 = vmatpush1.bf16.msra.mxu0 0
      %1557 = vmatprep.subr.bf16.mxu0 0
      %1558 = vmatpush1.bf16.msra.mxu0 0
      %1559 = vmatprep.subr.bf16.mxu0 0
      %1560 = vmatpush1.bf16.msra.mxu0 0
      %1561 = vmatprep.mubr.bf16.mxu0 0
      %1562 = vmatmul.mubr.bf16.gmra.mrb[0].mxu0 %v1527
      %v1563 = vpop.f32.mrb[0].mxu0
      %v1564 = vadd.f32 %v1511, %v1563
      %v1565 = vpop.f32.mrb[0].mxu0
      %v1566 = vpop.f32.mrb[0].mxu0
      %v1567 = vadd.f32 %v1511, %v1566
      %v1568 = vpop.f32.mrb[0].mxu0
      %1569 = vdwg.mxu0
      %v1570 = vadd.f32 %v672, %v1564
      %v1571 = vadd.f32 %v673, %v1567
      %v1572 = vld [vmem:[%s658] sm:$0x1]
      %v1573 = vld [vmem:[%s662] sm:$0x1]
      %1574 = vadd.xlane.f32.xlu0 %v1570
      %v1575 = vpop.xlane.xlu0 %1574
      %1576 = vadd.xlane.f32.xlu0 %v1571
      %v1577 = vpop.xlane.xlu0 %1576
      %v1578 = vmul.f32 %v1570, %v1570
      %v1579 = vmul.f32 %v1571, %v1571
      %1580 = vadd.xlane.f32.xlu0 %v1578
      %v1581 = vpop.xlane.xlu0 %1580
      %1582 = vadd.xlane.f32.xlu0 %v1579
      %v1583 = vpop.xlane.xlu0 %1582
      %v1584 = vmul.f32 %v1575, 0.03125
      %v1585 = vmul.f32 %v1577, 0.03125
      %v1586 = vmul.f32 %v1581, 0.03125
      %v1587 = vmul.f32 %v1583, 0.03125
      %v1588 = vmul.f32 %v1584, %v1584
      %v1589 = vmul.f32 %v1585, %v1585
      %v1590 = vsub.f32 %v1586, %v1588
      %v1591 = vsub.f32 %v1587, %v1589
      %v1592 = vsub.f32 %v1570, %v1584
      %v1593 = vsub.f32 %v1571, %v1585
      %v1594 = vadd.f32 %v1590, 1e-05
      %v1595 = vadd.f32 %v1591, 1e-05
      %v1596 = vrsqrt.pop %v1594
      %v1597 = vrsqrt.pop %v1595
      %v1598 = vmul.f32 %v1592, %v1596
      %v1599 = vmul.f32 %v1593, %v1597
      %v1601 = vlaneseq
      %v1602 = vshrl.u32 %v1601, 7
      %v1603 = vsub.s32 0, %v1602
      %v1604 = vrot.slane %v1572, %v1603
      %v1606 = vmul.f32 %v1598, %v1604
      %v1607 = vmul.f32 %v1599, %v1604
      %v1609 = vlaneseq
      %v1610 = vshrl.u32 %v1609, 7
      %v1611 = vsub.s32 0, %v1610
      %v1612 = vrot.slane %v1573, %v1611
      %v1614 = vadd.f32 %v1606, %v1612
      %v1615 = vadd.f32 %v1607, %v1612
      %v1616 = vpack.c.bf16 %v1615, %v1614
      %v1617 = vld [vmem:[%s3] sm:$0xff]
      %v1618 = vld [vmem:[%s3 + $0x8] sm:$0xff]
      %v1619 = vld [vmem:[%s634] sm:$0xf]
      %v1620 = vld [vmem:[%s634 + $0x10] sm:$0xf]
      %v1621 = vld [vmem:[%s634 + $0x20] sm:$0xf]
      %v1622 = vld [vmem:[%s634 + $0x30] sm:$0xf]
      %v1623 = vld [vmem:[%s634 + $0x40] sm:$0xf]
      %v1624 = vld [vmem:[%s634 + $0x50] sm:$0xf]
      %v1625 = vld [vmem:[%s634 + $0x60] sm:$0xf]
      %v1626 = vld [vmem:[%s634 + $0x70] sm:$0xf]
      %v1627 = vld [vmem:[%s634 + $0x80] sm:$0xf]
      %v1628 = vld [vmem:[%s634 + $0x90] sm:$0xf]
      %v1629 = vld [vmem:[%s634 + $0xa0] sm:$0xf]
      %v1630 = vld [vmem:[%s634 + $0xb0] sm:$0xf]
      %v1631 = vld [vmem:[%s634 + $0xc0] sm:$0xf]
      %v1632 = vld [vmem:[%s634 + $0xd0] sm:$0xf]
      %v1633 = vld [vmem:[%s634 + $0xe0] sm:$0xf]
      %v1634 = vld [vmem:[%s634 + $0xf0] sm:$0xf]
      %v1635 = vld [vmem:[%s638] sm:$0x1]
      %v1637 = vlaneseq
      %v1638 = vshrl.u32 %v1637, 7
      %v1639 = vsub.s32 0, %v1638
      %v1640 = vrot.slane %v1635, %v1639
      %v1658 = vunpack.c.l.b16 %v1619
      %v1659 = vunpack.c.l.b16 %v1620
      %v1660 = vunpack.c.l.b16 %v1621
      %v1661 = vunpack.c.l.b16 %v1622
      %v1662 = vunpack.c.l.b16 %v1623
      %v1663 = vunpack.c.l.b16 %v1624
      %v1664 = vunpack.c.l.b16 %v1625
      %v1665 = vunpack.c.l.b16 %v1626
      %v1666 = vunpack.c.l.b16 %v1627
      %v1667 = vunpack.c.l.b16 %v1628
      %v1668 = vunpack.c.l.b16 %v1629
      %v1669 = vunpack.c.l.b16 %v1630
      %v1670 = vunpack.c.l.b16 %v1631
      %v1671 = vunpack.c.l.b16 %v1632
      %v1672 = vunpack.c.l.b16 %v1633
      %v1673 = vunpack.c.l.b16 %v1634
      %v1674 = vpack.c.b16 %v1659, %v1658
      %v1675 = vpack.c.b16 %v1661, %v1660
      %v1676 = vpack.c.b16 %v1663, %v1662
      %v1677 = vpack.c.b16 %v1665, %v1664
      %v1678 = vpack.c.b16 %v1667, %v1666
      %v1679 = vpack.c.b16 %v1669, %v1668
      %v1680 = vpack.c.b16 %v1671, %v1670
      %v1681 = vpack.c.b16 %v1673, %v1672
      %1690 = vmatprep.subr.bf16.mxu0 0
      %1691 = vmatpush1.bf16.msra.mxu0 %v1674
      %1692 = vmatprep.subr.bf16.mxu0 0
      %1693 = vmatpush1.bf16.msra.mxu0 %v1675
      %1694 = vmatprep.subr.bf16.mxu0 0
      %1695 = vmatpush1.bf16.msra.mxu0 %v1676
      %1696 = vmatprep.subr.bf16.mxu0 0
      %1697 = vmatpush1.bf16.msra.mxu0 %v1677
      %1698 = vmatprep.subr.bf16.mxu0 0
      %1699 = vmatpush1.bf16.msra.mxu0 %v1678
      %1700 = vmatprep.subr.bf16.mxu0 0
      %1701 = vmatpush1.bf16.msra.mxu0 %v1679
      %1702 = vmatprep.subr.bf16.mxu0 0
      %1703 = vmatpush1.bf16.msra.mxu0 %v1680
      %1704 = vmatprep.subr.bf16.mxu0 0
      %1705 = vmatpush1.bf16.msra.mxu0 %v1681
      %1706 = vmatprep.subr.bf16.mxu0 0
      %1707 = vmatpush1.bf16.msra.mxu0 0
      %1708 = vmatprep.subr.bf16.mxu0 0
      %1709 = vmatpush1.bf16.msra.mxu0 0
      %1710 = vmatprep.subr.bf16.mxu0 0
      %1711 = vmatpush1.bf16.msra.mxu0 0
      %1712 = vmatprep.subr.bf16.mxu0 0
      %1713 = vmatpush1.bf16.msra.mxu0 0
      %1714 = vmatprep.subr.bf16.mxu0 0
      %1715 = vmatpush1.bf16.msra.mxu0 0
      %1716 = vmatprep.subr.bf16.mxu0 0
      %1717 = vmatpush1.bf16.msra.mxu0 0
      %1718 = vmatprep.subr.bf16.mxu0 0
      %1719 = vmatpush1.bf16.msra.mxu0 0
      %1720 = vmatprep.subr.bf16.mxu0 0
      %1721 = vmatpush1.bf16.msra.mxu0 0
      %1722 = vmatprep.mubr.bf16.mxu0 0
      %1723 = vmatmul.mubr.bf16.gmra.mrb[0].mxu0 %v1616
      %v1724 = vpop.f32.mrb[0].mxu0
      %v1725 = vadd.f32 %v1640, %v1724
      %v1726 = vpop.f32.mrb[0].mxu0
      %v1727 = vpop.f32.mrb[0].mxu0
      %v1728 = vadd.f32 %v1640, %v1727
      %v1729 = vpop.f32.mrb[0].mxu0
      %1730 = vdwg.mxu0
      %v1731 = vld [vmem:[%s634 + $0x4] sm:$0xff]
      %v1732 = vld [vmem:[%s634 + $0x14] sm:$0xff]
      %v1733 = vld [vmem:[%s634 + $0x24] sm:$0xff]
      %v1734 = vld [vmem:[%s634 + $0x34] sm:$0xff]
      %v1735 = vld [vmem:[%s634 + $0x44] sm:$0xff]
      %v1736 = vld [vmem:[%s634 + $0x54] sm:$0xff]
      %v1737 = vld [vmem:[%s634 + $0x64] sm:$0xff]
      %v1738 = vld [vmem:[%s634 + $0x74] sm:$0xff]
      %v1739 = vld [vmem:[%s634 + $0x84] sm:$0xff]
      %v1740 = vld [vmem:[%s634 + $0x94] sm:$0xff]
      %v1741 = vld [vmem:[%s634 + $0xa4] sm:$0xff]
      %v1742 = vld [vmem:[%s634 + $0xb4] sm:$0xff]
      %v1743 = vld [vmem:[%s634 + $0xc4] sm:$0xff]
      %v1744 = vld [vmem:[%s634 + $0xd4] sm:$0xff]
      %v1745 = vld [vmem:[%s634 + $0xe4] sm:$0xff]
      %v1746 = vld [vmem:[%s634 + $0xf4] sm:$0xff]
      %v1747 = vld [vmem:[%s638 + $0x1] sm:$0x3]
      %v1749 = vlaneseq
      %v1750 = vshrl.u32 %v1749, 7
      %v1751 = vsub.s32 0, %v1750
      %v1752 = vrot.slane %v1747, %v1751
      %v1753 = vlaneseq
      %v1754 = vshrl.u32 %v1753, 7
      %v1755 = vsub.s32 1, %v1754
      %v1756 = vrot.slane %v1747, %v1755
      %v1761 = vunpack.c.l.b16 %v674
      %v1762 = vunpack.c.l.b16 %v675
      %v1763 = vpack.c.b16 %v1762, %v1761
      %v1781 = vunpack.c.l.b16 %v1731
      %v1782 = vunpack.c.h.b16 %v1731
      %v1783 = vunpack.c.l.b16 %v1732
      %v1784 = vunpack.c.h.b16 %v1732
      %v1785 = vunpack.c.l.b16 %v1733
      %v1786 = vunpack.c.h.b16 %v1733
      %v1787 = vunpack.c.l.b16 %v1734
      %v1788 = vunpack.c.h.b16 %v1734
      %v1789 = vunpack.c.l.b16 %v1735
      %v1790 = vunpack.c.h.b16 %v1735
      %v1791 = vunpack.c.l.b16 %v1736
      %v1792 = vunpack.c.h.b16 %v1736
      %v1793 = vunpack.c.l.b16 %v1737
      %v1794 = vunpack.c.h.b16 %v1737
      %v1795 = vunpack.c.l.b16 %v1738
      %v1796 = vunpack.c.h.b16 %v1738
      %v1797 = vunpack.c.l.b16 %v1739
      %v1798 = vunpack.c.h.b16 %v1739
      %v1799 = vunpack.c.l.b16 %v1740
      %v1800 = vunpack.c.h.b16 %v1740
      %v1801 = vunpack.c.l.b16 %v1741
      %v1802 = vunpack.c.h.b16 %v1741
      %v1803 = vunpack.c.l.b16 %v1742
      %v1804 = vunpack.c.h.b16 %v1742
      %v1805 = vunpack.c.l.b16 %v1743
      %v1806 = vunpack.c.h.b16 %v1743
      %v1807 = vunpack.c.l.b16 %v1744
      %v1808 = vunpack.c.h.b16 %v1744
      %v1809 = vunpack.c.l.b16 %v1745
      %v1810 = vunpack.c.h.b16 %v1745
      %v1811 = vunpack.c.l.b16 %v1746
      %v1812 = vunpack.c.h.b16 %v1746
      %v1813 = vpack.c.b16 %v1783, %v1781
      %v1814 = vpack.c.b16 %v1784, %v1782
      %v1815 = vpack.c.b16 %v1787, %v1785
      %v1816 = vpack.c.b16 %v1788, %v1786
      %v1817 = vpack.c.b16 %v1791, %v1789
      %v1818 = vpack.c.b16 %v1792, %v1790
      %v1819 = vpack.c.b16 %v1795, %v1793
      %v1820 = vpack.c.b16 %v1796, %v1794
      %v1821 = vpack.c.b16 %v1799, %v1797
      %v1822 = vpack.c.b16 %v1800, %v1798
      %v1823 = vpack.c.b16 %v1803, %v1801
      %v1824 = vpack.c.b16 %v1804, %v1802
      %v1825 = vpack.c.b16 %v1807, %v1805
      %v1826 = vpack.c.b16 %v1808, %v1806
      %v1827 = vpack.c.b16 %v1811, %v1809
      %v1828 = vpack.c.b16 %v1812, %v1810
      %1845 = vmatprep.subr.bf16.mxu0 %v1814
      %1846 = vmatpush1.bf16.msra.mxu0 %v1813
      %1847 = vmatprep.subr.bf16.mxu0 %v1816
      %1848 = vmatpush1.bf16.msra.mxu0 %v1815
      %1849 = vmatprep.subr.bf16.mxu0 %v1818
      %1850 = vmatpush1.bf16.msra.mxu0 %v1817
      %1851 = vmatprep.subr.bf16.mxu0 %v1820
      %1852 = vmatpush1.bf16.msra.mxu0 %v1819
      %1853 = vmatprep.subr.bf16.mxu0 %v1822
      %1854 = vmatpush1.bf16.msra.mxu0 %v1821
      %1855 = vmatprep.subr.bf16.mxu0 %v1824
      %1856 = vmatpush1.bf16.msra.mxu0 %v1823
      %1857 = vmatprep.subr.bf16.mxu0 %v1826
      %1858 = vmatpush1.bf16.msra.mxu0 %v1825
      %1859 = vmatprep.subr.bf16.mxu0 %v1828
      %1860 = vmatpush1.bf16.msra.mxu0 %v1827
      %1861 = vmatprep.subr.bf16.mxu0 0
      %1862 = vmatpush1.bf16.msra.mxu0 0
      %1863 = vmatprep.subr.bf16.mxu0 0
      %1864 = vmatpush1.bf16.msra.mxu0 0
      %1865 = vmatprep.subr.bf16.mxu0 0
      %1866 = vmatpush1.bf16.msra.mxu0 0
      %1867 = vmatprep.subr.bf16.mxu0 0
      %1868 = vmatpush1.bf16.msra.mxu0 0
      %1869 = vmatprep.subr.bf16.mxu0 0
      %1870 = vmatpush1.bf16.msra.mxu0 0
      %1871 = vmatprep.subr.bf16.mxu0 0
      %1872 = vmatpush1.bf16.msra.mxu0 0
      %1873 = vmatprep.subr.bf16.mxu0 0
      %1874 = vmatpush1.bf16.msra.mxu0 0
      %1875 = vmatprep.subr.bf16.mxu0 0
      %1876 = vmatpush1.bf16.msra.mxu0 0
      %1877 = vmatprep.mubr.bf16.mxu0 0
      %1878 = vmatmul.mubr.bf16.gmra.mrb[0].mxu0 %v1763
      %v1879 = vpop.f32.mrb[0].mxu0
      %v1880 = vadd.f32 %v1752, %v1879
      %v1881 = vpop.f32.mrb[0].mxu0
      %v1882 = vadd.f32 %v1756, %v1881
      %v1883 = vpop.f32.mrb[0].mxu0
      %v1884 = vadd.f32 %v1752, %v1883
      %v1885 = vpop.f32.mrb[0].mxu0
      %v1886 = vadd.f32 %v1756, %v1885
      %1887 = vdwg.mxu0
      %1890 = vrot.lane.b32.xlu0 %v1725, 120
      %v1891 = vpop.permute.xlu0 %1890
      %1892 = vrot.lane.b32.xlu0 %v1728, 120
      %v1893 = vpop.permute.xlu0 %1892
      %1896 = vrot.lane.b32.xlu0 %v1725, 112
      %v1897 = vpop.permute.xlu0 %1896
      %1898 = vrot.lane.b32.xlu0 %v1728, 112
      %v1899 = vpop.permute.xlu0 %1898
      %1902 = vrot.lane.b32.xlu0 %v1725, 104
      %v1903 = vpop.permute.xlu0 %1902
      %1904 = vrot.lane.b32.xlu0 %v1728, 104
      %v1905 = vpop.permute.xlu0 %1904
      %v1908 = vpack.c.bf16 %v1728, %v1725
      %v1909 = vpack.c.bf16 %v1893, %v1891
      %v1910 = vpack.c.bf16 %v1899, %v1897
      %v1911 = vpack.c.bf16 %v1905, %v1903
      %1914 = vrot.lane.b32.xlu0 %v1880, 120
      %v1915 = vpop.permute.xlu0 %1914
      %1916 = vrot.lane.b32.xlu0 %v1884, 120
      %v1917 = vpop.permute.xlu0 %1916
      %1920 = vrot.lane.b32.xlu0 %v1880, 112
      %v1921 = vpop.permute.xlu0 %1920
      %1922 = vrot.lane.b32.xlu0 %v1884, 112
      %v1923 = vpop.permute.xlu0 %1922
      %1926 = vrot.lane.b32.xlu0 %v1880, 104
      %v1927 = vpop.permute.xlu0 %1926
      %1928 = vrot.lane.b32.xlu0 %v1884, 104
      %v1929 = vpop.permute.xlu0 %1928
      %v1932 = vpack.c.bf16 %v1884, %v1880
      %v1933 = vpack.c.bf16 %v1917, %v1915
      %v1934 = vpack.c.bf16 %v1923, %v1921
      %v1935 = vpack.c.bf16 %v1929, %v1927
      %1938 = vrot.lane.b32.xlu0 %v1882, 120
      %v1939 = vpop.permute.xlu0 %1938
      %1940 = vrot.lane.b32.xlu0 %v1886, 120
      %v1941 = vpop.permute.xlu0 %1940
      %1944 = vrot.lane.b32.xlu0 %v1882, 112
      %v1945 = vpop.permute.xlu0 %1944
      %1946 = vrot.lane.b32.xlu0 %v1886, 112
      %v1947 = vpop.permute.xlu0 %1946
      %1950 = vrot.lane.b32.xlu0 %v1882, 104
      %v1951 = vpop.permute.xlu0 %1950
      %1952 = vrot.lane.b32.xlu0 %v1886, 104
      %v1953 = vpop.permute.xlu0 %1952
      %v1956 = vpack.c.bf16 %v1886, %v1882
      %v1957 = vpack.c.bf16 %v1941, %v1939
      %v1958 = vpack.c.bf16 %v1947, %v1945
      %v1959 = vpack.c.bf16 %v1953, %v1951
      %v1961 = vsel %vm1012, %v1908, 0
      %v1964 = vsel %vm1012, %v1932, 0
      %1966 = vmatprep.subr.bf16.mxu0 0
      %1967 = vmatpush1.bf16.xpose.msra.mxu0 %v1964
      %1968 = vmatprep.subr.bf16.mxu0 0
      %1969 = vmatpush1.bf16.xpose.msra.mxu0 0
      %1970 = vmatprep.subr.bf16.mxu0 0
      %1971 = vmatpush1.bf16.xpose.msra.mxu0 0
      %1972 = vmatprep.subr.bf16.mxu0 0
      %1973 = vmatpush1.bf16.xpose.msra.mxu0 0
      %1974 = vmatprep.subr.bf16.mxu0 0
      %1975 = vmatpush1.bf16.xpose.msra.mxu0 0
      %1976 = vmatprep.subr.bf16.mxu0 0
      %1977 = vmatpush1.bf16.xpose.msra.mxu0 0
      %1978 = vmatprep.subr.bf16.mxu0 0
      %1979 = vmatpush1.bf16.xpose.msra.mxu0 0
      %1980 = vmatprep.subr.bf16.mxu0 0
      %1981 = vmatpush1.bf16.xpose.msra.mxu0 0
      %1982 = vmatprep.subr.bf16.mxu0 0
      %1983 = vmatpush1.bf16.xpose.msra.mxu0 0
      %1984 = vmatprep.subr.bf16.mxu0 0
      %1985 = vmatpush1.bf16.xpose.msra.mxu0 0
      %1986 = vmatprep.subr.bf16.mxu0 0
      %1987 = vmatpush1.bf16.xpose.msra.mxu0 0
      %1988 = vmatprep.subr.bf16.mxu0 0
      %1989 = vmatpush1.bf16.xpose.msra.mxu0 0
      %1990 = vmatprep.subr.bf16.mxu0 0
      %1991 = vmatpush1.bf16.xpose.msra.mxu0 0
      %1992 = vmatprep.subr.bf16.mxu0 0
      %1993 = vmatpush1.bf16.xpose.msra.mxu0 0
      %1994 = vmatprep.subr.bf16.mxu0 0
      %1995 = vmatpush1.bf16.xpose.msra.mxu0 0
      %1996 = vmatprep.subr.bf16.mxu0 0
      %1997 = vmatpush1.bf16.xpose.msra.mxu0 0
      %1998 = vmatprep.mubr.bf16.mxu0 0
      %1999 = vmatmul.mubr.bf16.gmra.mrb[0].mxu0 %v1961
      %v2000 = vpop.f32.mrb[0].mxu0
      %v2001 = vadd.f32 %v1617, %v2000
      %v2002 = vpop.f32.mrb[0].mxu0
      %v2003 = vpop.f32.mrb[0].mxu0
      %v2004 = vadd.f32 %v1618, %v2003
      %v2005 = vpop.f32.mrb[0].mxu0
      %2006 = vdwg.mxu0
      %v2008 = vsel %vm1012, %v1909, 0
      %v2011 = vsel %vm1012, %v1933, 0
      %2013 = vmatprep.subr.bf16.mxu0 0
      %2014 = vmatpush1.bf16.xpose.msra.mxu0 %v2011
      %2015 = vmatprep.subr.bf16.mxu0 0
      %2016 = vmatpush1.bf16.xpose.msra.mxu0 0
      %2017 = vmatprep.subr.bf16.mxu0 0
      %2018 = vmatpush1.bf16.xpose.msra.mxu0 0
      %2019 = vmatprep.subr.bf16.mxu0 0
      %2020 = vmatpush1.bf16.xpose.msra.mxu0 0
      %2021 = vmatprep.subr.bf16.mxu0 0
      %2022 = vmatpush1.bf16.xpose.msra.mxu0 0
      %2023 = vmatprep.subr.bf16.mxu0 0
      %2024 = vmatpush1.bf16.xpose.msra.mxu0 0
      %2025 = vmatprep.subr.bf16.mxu0 0
      %2026 = vmatpush1.bf16.xpose.msra.mxu0 0
      %2027 = vmatprep.subr.bf16.mxu0 0
      %2028 = vmatpush1.bf16.xpose.msra.mxu0 0
      %2029 = vmatprep.subr.bf16.mxu0 0
      %2030 = vmatpush1.bf16.xpose.msra.mxu0 0
      %2031 = vmatprep.subr.bf16.mxu0 0
      %2032 = vmatpush1.bf16.xpose.msra.mxu0 0
      %2033 = vmatprep.subr.bf16.mxu0 0
      %2034 = vmatpush1.bf16.xpose.msra.mxu0 0
      %2035 = vmatprep.subr.bf16.mxu0 0
      %2036 = vmatpush1.bf16.xpose.msra.mxu0 0
      %2037 = vmatprep.subr.bf16.mxu0 0
      %2038 = vmatpush1.bf16.xpose.msra.mxu0 0
      %2039 = vmatprep.subr.bf16.mxu0 0
      %2040 = vmatpush1.bf16.xpose.msra.mxu0 0
      %2041 = vmatprep.subr.bf16.mxu0 0
      %2042 = vmatpush1.bf16.xpose.msra.mxu0 0
      %2043 = vmatprep.subr.bf16.mxu0 0
      %2044 = vmatpush1.bf16.xpose.msra.mxu0 0
      %2045 = vmatprep.mubr.bf16.mxu0 0
      %2046 = vmatmul.mubr.bf16.gmra.mrb[0].mxu0 %v2008
      %v2047 = vpop.f32.mrb[0].mxu0
      %v2048 = vadd.f32 %v1617, %v2047
      %v2049 = vpop.f32.mrb[0].mxu0
      %v2050 = vpop.f32.mrb[0].mxu0
      %v2051 = vadd.f32 %v1618, %v2050
      %v2052 = vpop.f32.mrb[0].mxu0
      %2053 = vdwg.mxu0
      %v2055 = vsel %vm1012, %v1910, 0
      %v2058 = vsel %vm1012, %v1934, 0
      %2060 = vmatprep.subr.bf16.mxu0 0
      %2061 = vmatpush1.bf16.xpose.msra.mxu0 %v2058
      %2062 = vmatprep.subr.bf16.mxu0 0
      %2063 = vmatpush1.bf16.xpose.msra.mxu0 0
      %2064 = vmatprep.subr.bf16.mxu0 0
      %2065 = vmatpush1.bf16.xpose.msra.mxu0 0
      %2066 = vmatprep.subr.bf16.mxu0 0
      %2067 = vmatpush1.bf16.xpose.msra.mxu0 0
      %2068 = vmatprep.subr.bf16.mxu0 0
      %2069 = vmatpush1.bf16.xpose.msra.mxu0 0
      %2070 = vmatprep.subr.bf16.mxu0 0
      %2071 = vmatpush1.bf16.xpose.msra.mxu0 0
      %2072 = vmatprep.subr.bf16.mxu0 0
      %2073 = vmatpush1.bf16.xpose.msra.mxu0 0
      %2074 = vmatprep.subr.bf16.mxu0 0
      %2075 = vmatpush1.bf16.xpose.msra.mxu0 0
      %2076 = vmatprep.subr.bf16.mxu0 0
      %2077 = vmatpush1.bf16.xpose.msra.mxu0 0
      %2078 = vmatprep.subr.bf16.mxu0 0
      %2079 = vmatpush1.bf16.xpose.msra.mxu0 0
      %2080 = vmatprep.subr.bf16.mxu0 0
      %2081 = vmatpush1.bf16.xpose.msra.mxu0 0
      %2082 = vmatprep.subr.bf16.mxu0 0
      %2083 = vmatpush1.bf16.xpose.msra.mxu0 0
      %2084 = vmatprep.subr.bf16.mxu0 0
      %2085 = vmatpush1.bf16.xpose.msra.mxu0 0
      %2086 = vmatprep.subr.bf16.mxu0 0
      %2087 = vmatpush1.bf16.xpose.msra.mxu0 0
      %2088 = vmatprep.subr.bf16.mxu0 0
      %2089 = vmatpush1.bf16.xpose.msra.mxu0 0
      %2090 = vmatprep.subr.bf16.mxu0 0
      %2091 = vmatpush1.bf16.xpose.msra.mxu0 0
      %2092 = vmatprep.mubr.bf16.mxu0 0
      %2093 = vmatmul.mubr.bf16.gmra.mrb[0].mxu0 %v2055
      %v2094 = vpop.f32.mrb[0].mxu0
      %v2095 = vadd.f32 %v1617, %v2094
      %v2096 = vpop.f32.mrb[0].mxu0
      %v2097 = vpop.f32.mrb[0].mxu0
      %v2098 = vadd.f32 %v1618, %v2097
      %v2099 = vpop.f32.mrb[0].mxu0
      %2100 = vdwg.mxu0
      %v2102 = vsel %vm1012, %v1911, 0
      %v2105 = vsel %vm1012, %v1935, 0
      %2107 = vmatprep.subr.bf16.mxu0 0
      %2108 = vmatpush1.bf16.xpose.msra.mxu0 %v2105
      %2109 = vmatprep.subr.bf16.mxu0 0
      %2110 = vmatpush1.bf16.xpose.msra.mxu0 0
      %2111 = vmatprep.subr.bf16.mxu0 0
      %2112 = vmatpush1.bf16.xpose.msra.mxu0 0
      %2113 = vmatprep.subr.bf16.mxu0 0
      %2114 = vmatpush1.bf16.xpose.msra.mxu0 0
      %2115 = vmatprep.subr.bf16.mxu0 0
      %2116 = vmatpush1.bf16.xpose.msra.mxu0 0
      %2117 = vmatprep.subr.bf16.mxu0 0
      %2118 = vmatpush1.bf16.xpose.msra.mxu0 0
      %2119 = vmatprep.subr.bf16.mxu0 0
      %2120 = vmatpush1.bf16.xpose.msra.mxu0 0
      %2121 = vmatprep.subr.bf16.mxu0 0
      %2122 = vmatpush1.bf16.xpose.msra.mxu0 0
      %2123 = vmatprep.subr.bf16.mxu0 0
      %2124 = vmatpush1.bf16.xpose.msra.mxu0 0
      %2125 = vmatprep.subr.bf16.mxu0 0
      %2126 = vmatpush1.bf16.xpose.msra.mxu0 0
      %2127 = vmatprep.subr.bf16.mxu0 0
      %2128 = vmatpush1.bf16.xpose.msra.mxu0 0
      %2129 = vmatprep.subr.bf16.mxu0 0
      %2130 = vmatpush1.bf16.xpose.msra.mxu0 0
      %2131 = vmatprep.subr.bf16.mxu0 0
      %2132 = vmatpush1.bf16.xpose.msra.mxu0 0
      %2133 = vmatprep.subr.bf16.mxu0 0
      %2134 = vmatpush1.bf16.xpose.msra.mxu0 0
      %2135 = vmatprep.subr.bf16.mxu0 0
      %2136 = vmatpush1.bf16.xpose.msra.mxu0 0
      %2137 = vmatprep.subr.bf16.mxu0 0
      %2138 = vmatpush1.bf16.xpose.msra.mxu0 0
      %2139 = vmatprep.mubr.bf16.mxu0 0
      %2140 = vmatmul.mubr.bf16.gmra.mrb[0].mxu0 %v2102
      %v2141 = vpop.f32.mrb[0].mxu0
      %v2142 = vadd.f32 %v1617, %v2141
      %v2143 = vpop.f32.mrb[0].mxu0
      %v2144 = vpop.f32.mrb[0].mxu0
      %v2145 = vadd.f32 %v1618, %v2144
      %v2146 = vpop.f32.mrb[0].mxu0
      %2147 = vdwg.mxu0
      %v2148 = vsel %vm1201, %v2001, -inf
      %2149 = vmax.xlane.f32.xlu0 %v2148
      %v2150 = vpop.xlane.xlu0 %2149
      %v2151 = vsel %vm1201, %v2004, -inf
      %2152 = vmax.xlane.f32.xlu0 %v2151
      %v2153 = vpop.xlane.xlu0 %2152
      %v2154 = vsel %vm1201, %v2048, -inf
      %2155 = vmax.xlane.f32.xlu0 %v2154
      %v2156 = vpop.xlane.xlu0 %2155
      %v2157 = vsel %vm1201, %v2051, -inf
      %2158 = vmax.xlane.f32.xlu0 %v2157
      %v2159 = vpop.xlane.xlu0 %2158
      %v2160 = vsel %vm1201, %v2095, -inf
      %2161 = vmax.xlane.f32.xlu0 %v2160
      %v2162 = vpop.xlane.xlu0 %2161
      %v2163 = vsel %vm1201, %v2098, -inf
      %2164 = vmax.xlane.f32.xlu0 %v2163
      %v2165 = vpop.xlane.xlu0 %2164
      %v2166 = vsel %vm1201, %v2142, -inf
      %2167 = vmax.xlane.f32.xlu0 %v2166
      %v2168 = vpop.xlane.xlu0 %2167
      %v2169 = vsel %vm1201, %v2145, -inf
      %2170 = vmax.xlane.f32.xlu0 %v2169
      %v2171 = vpop.xlane.xlu0 %2170
      %v2172 = vsub.f32 %v2001, %v2150
      %v2173 = vsub.f32 %v2004, %v2153
      %v2174 = vsub.f32 %v2048, %v2156
      %v2175 = vsub.f32 %v2051, %v2159
      %v2176 = vsub.f32 %v2095, %v2162
      %v2177 = vsub.f32 %v2098, %v2165
      %v2178 = vsub.f32 %v2142, %v2168
      %v2179 = vsub.f32 %v2145, %v2171
      %v2180 = vmul.f32 %v2172, 1.442695
      %v2181 = vpow.pop %v2180
      %v2182 = vmul.f32 %v2173, 1.442695
      %v2183 = vpow.pop %v2182
      %v2184 = vmul.f32 %v2174, 1.442695
      %v2185 = vpow.pop %v2184
      %v2186 = vmul.f32 %v2175, 1.442695
      %v2187 = vpow.pop %v2186
      %v2188 = vmul.f32 %v2176, 1.442695
      %v2189 = vpow.pop %v2188
      %v2190 = vmul.f32 %v2177, 1.442695
      %v2191 = vpow.pop %v2190
      %v2192 = vmul.f32 %v2178, 1.442695
      %v2193 = vpow.pop %v2192
      %v2194 = vmul.f32 %v2179, 1.442695
      %v2195 = vpow.pop %v2194
      %v2196 = vsel %vm1201, %v2181, 0.0
      %2197 = vadd.xlane.f32.xlu0 %v2196
      %v2198 = vpop.xlane.xlu0 %2197
      %v2199 = vsel %vm1201, %v2183, 0.0
      %2200 = vadd.xlane.f32.xlu0 %v2199
      %v2201 = vpop.xlane.xlu0 %2200
      %v2202 = vsel %vm1201, %v2185, 0.0
      %2203 = vadd.xlane.f32.xlu0 %v2202
      %v2204 = vpop.xlane.xlu0 %2203
      %v2205 = vsel %vm1201, %v2187, 0.0
      %2206 = vadd.xlane.f32.xlu0 %v2205
      %v2207 = vpop.xlane.xlu0 %2206
      %v2208 = vsel %vm1201, %v2189, 0.0
      %2209 = vadd.xlane.f32.xlu0 %v2208
      %v2210 = vpop.xlane.xlu0 %2209
      %v2211 = vsel %vm1201, %v2191, 0.0
      %2212 = vadd.xlane.f32.xlu0 %v2211
      %v2213 = vpop.xlane.xlu0 %2212
      %v2214 = vsel %vm1201, %v2193, 0.0
      %2215 = vadd.xlane.f32.xlu0 %v2214
      %v2216 = vpop.xlane.xlu0 %2215
      %v2217 = vsel %vm1201, %v2195, 0.0
      %2218 = vadd.xlane.f32.xlu0 %v2217
      %v2219 = vpop.xlane.xlu0 %2218
      %v2220 = vrcp.pop %v2198
      %v2221 = vrcp.pop %v2201
      %v2222 = vrcp.pop %v2204
      %v2223 = vrcp.pop %v2207
      %v2224 = vrcp.pop %v2210
      %v2225 = vrcp.pop %v2213
      %v2226 = vrcp.pop %v2216
      %v2227 = vrcp.pop %v2219
      %v2228 = vmul.f32 %v2181, %v2220
      %v2229 = vmul.f32 %v2183, %v2221
      %v2230 = vmul.f32 %v2185, %v2222
      %v2231 = vmul.f32 %v2187, %v2223
      %v2232 = vmul.f32 %v2189, %v2224
      %v2233 = vmul.f32 %v2191, %v2225
      %v2234 = vmul.f32 %v2193, %v2226
      %v2235 = vmul.f32 %v2195, %v2227
      %v2236 = vpack.c.bf16 %v2229, %v2228
      %v2237 = vpack.c.bf16 %v2231, %v2230
      %v2238 = vpack.c.bf16 %v2233, %v2232
      %v2239 = vpack.c.bf16 %v2235, %v2234
      %v2241 = vsel %vm1201, %v2236, 0
      %2243 = vmatprep.subr.bf16.mxu0 0
      %2244 = vmatpush1.bf16.msra.mxu0 %v1956
      %2245 = vmatprep.subr.bf16.mxu0 0
      %2246 = vmatpush1.bf16.msra.mxu0 0
      %2247 = vmatprep.subr.bf16.mxu0 0
      %2248 = vmatpush1.bf16.msra.mxu0 0
      %2249 = vmatprep.subr.bf16.mxu0 0
      %2250 = vmatpush1.bf16.msra.mxu0 0
      %2251 = vmatprep.subr.bf16.mxu0 0
      %2252 = vmatpush1.bf16.msra.mxu0 0
      %2253 = vmatprep.subr.bf16.mxu0 0
      %2254 = vmatpush1.bf16.msra.mxu0 0
      %2255 = vmatprep.subr.bf16.mxu0 0
      %2256 = vmatpush1.bf16.msra.mxu0 0
      %2257 = vmatprep.subr.bf16.mxu0 0
      %2258 = vmatpush1.bf16.msra.mxu0 0
      %2259 = vmatprep.subr.bf16.mxu0 0
      %2260 = vmatpush1.bf16.msra.mxu0 0
      %2261 = vmatprep.subr.bf16.mxu0 0
      %2262 = vmatpush1.bf16.msra.mxu0 0
      %2263 = vmatprep.subr.bf16.mxu0 0
      %2264 = vmatpush1.bf16.msra.mxu0 0
      %2265 = vmatprep.subr.bf16.mxu0 0
      %2266 = vmatpush1.bf16.msra.mxu0 0
      %2267 = vmatprep.subr.bf16.mxu0 0
      %2268 = vmatpush1.bf16.msra.mxu0 0
      %2269 = vmatprep.subr.bf16.mxu0 0
      %2270 = vmatpush1.bf16.msra.mxu0 0
      %2271 = vmatprep.subr.bf16.mxu0 0
      %2272 = vmatpush1.bf16.msra.mxu0 0
      %2273 = vmatprep.subr.bf16.mxu0 0
      %2274 = vmatpush1.bf16.msra.mxu0 0
      %2275 = vmatprep.mubr.bf16.mxu0 0
      %2276 = vmatmul.mubr.bf16.gmra.mrb[0].mxu0 %v2241
      %v2277 = vpop.f32.mrb[0].mxu0
      %v2278 = vadd.f32 0.0, %v2277
      %v2279 = vpop.f32.mrb[0].mxu0
      %v2280 = vpop.f32.mrb[0].mxu0
      %v2281 = vadd.f32 0.0, %v2280
      %v2282 = vpop.f32.mrb[0].mxu0
      %2283 = vdwg.mxu0
      %v2285 = vsel %vm1201, %v2237, 0
      %2287 = vmatprep.subr.bf16.mxu0 0
      %2288 = vmatpush1.bf16.msra.mxu0 %v1957
      %2289 = vmatprep.subr.bf16.mxu0 0
      %2290 = vmatpush1.bf16.msra.mxu0 0
      %2291 = vmatprep.subr.bf16.mxu0 0
      %2292 = vmatpush1.bf16.msra.mxu0 0
      %2293 = vmatprep.subr.bf16.mxu0 0
      %2294 = vmatpush1.bf16.msra.mxu0 0
      %2295 = vmatprep.subr.bf16.mxu0 0
      %2296 = vmatpush1.bf16.msra.mxu0 0
      %2297 = vmatprep.subr.bf16.mxu0 0
      %2298 = vmatpush1.bf16.msra.mxu0 0
      %2299 = vmatprep.subr.bf16.mxu0 0
      %2300 = vmatpush1.bf16.msra.mxu0 0
      %2301 = vmatprep.subr.bf16.mxu0 0
      %2302 = vmatpush1.bf16.msra.mxu0 0
      %2303 = vmatprep.subr.bf16.mxu0 0
      %2304 = vmatpush1.bf16.msra.mxu0 0
      %2305 = vmatprep.subr.bf16.mxu0 0
      %2306 = vmatpush1.bf16.msra.mxu0 0
      %2307 = vmatprep.subr.bf16.mxu0 0
      %2308 = vmatpush1.bf16.msra.mxu0 0
      %2309 = vmatprep.subr.bf16.mxu0 0
      %2310 = vmatpush1.bf16.msra.mxu0 0
      %2311 = vmatprep.subr.bf16.mxu0 0
      %2312 = vmatpush1.bf16.msra.mxu0 0
      %2313 = vmatprep.subr.bf16.mxu0 0
      %2314 = vmatpush1.bf16.msra.mxu0 0
      %2315 = vmatprep.subr.bf16.mxu0 0
      %2316 = vmatpush1.bf16.msra.mxu0 0
      %2317 = vmatprep.subr.bf16.mxu0 0
      %2318 = vmatpush1.bf16.msra.mxu0 0
      %2319 = vmatprep.mubr.bf16.mxu0 0
      %2320 = vmatmul.mubr.bf16.gmra.mrb[0].mxu0 %v2285
      %v2321 = vpop.f32.mrb[0].mxu0
      %v2322 = vadd.f32 0.0, %v2321
      %v2323 = vpop.f32.mrb[0].mxu0
      %v2324 = vpop.f32.mrb[0].mxu0
      %v2325 = vadd.f32 0.0, %v2324
      %v2326 = vpop.f32.mrb[0].mxu0
      %2327 = vdwg.mxu0
      %v2329 = vsel %vm1201, %v2238, 0
      %2331 = vmatprep.subr.bf16.mxu0 0
      %2332 = vmatpush1.bf16.msra.mxu0 %v1958
      %2333 = vmatprep.subr.bf16.mxu0 0
      %2334 = vmatpush1.bf16.msra.mxu0 0
      %2335 = vmatprep.subr.bf16.mxu0 0
      %2336 = vmatpush1.bf16.msra.mxu0 0
      %2337 = vmatprep.subr.bf16.mxu0 0
      %2338 = vmatpush1.bf16.msra.mxu0 0
      %2339 = vmatprep.subr.bf16.mxu0 0
      %2340 = vmatpush1.bf16.msra.mxu0 0
      %2341 = vmatprep.subr.bf16.mxu0 0
      %2342 = vmatpush1.bf16.msra.mxu0 0
      %2343 = vmatprep.subr.bf16.mxu0 0
      %2344 = vmatpush1.bf16.msra.mxu0 0
      %2345 = vmatprep.subr.bf16.mxu0 0
      %2346 = vmatpush1.bf16.msra.mxu0 0
      %2347 = vmatprep.subr.bf16.mxu0 0
      %2348 = vmatpush1.bf16.msra.mxu0 0
      %2349 = vmatprep.subr.bf16.mxu0 0
      %2350 = vmatpush1.bf16.msra.mxu0 0
      %2351 = vmatprep.subr.bf16.mxu0 0
      %2352 = vmatpush1.bf16.msra.mxu0 0
      %2353 = vmatprep.subr.bf16.mxu0 0
      %2354 = vmatpush1.bf16.msra.mxu0 0
      %2355 = vmatprep.subr.bf16.mxu0 0
      %2356 = vmatpush1.bf16.msra.mxu0 0
      %2357 = vmatprep.subr.bf16.mxu0 0
      %2358 = vmatpush1.bf16.msra.mxu0 0
      %2359 = vmatprep.subr.bf16.mxu0 0
      %2360 = vmatpush1.bf16.msra.mxu0 0
      %2361 = vmatprep.subr.bf16.mxu0 0
      %2362 = vmatpush1.bf16.msra.mxu0 0
      %2363 = vmatprep.mubr.bf16.mxu0 0
      %2364 = vmatmul.mubr.bf16.gmra.mrb[0].mxu0 %v2329
      %v2365 = vpop.f32.mrb[0].mxu0
      %v2366 = vadd.f32 0.0, %v2365
      %v2367 = vpop.f32.mrb[0].mxu0
      %v2368 = vpop.f32.mrb[0].mxu0
      %v2369 = vadd.f32 0.0, %v2368
      %v2370 = vpop.f32.mrb[0].mxu0
      %2371 = vdwg.mxu0
      %v2373 = vsel %vm1201, %v2239, 0
      %2375 = vmatprep.subr.bf16.mxu0 0
      %2376 = vmatpush1.bf16.msra.mxu0 %v1959
      %2377 = vmatprep.subr.bf16.mxu0 0
      %2378 = vmatpush1.bf16.msra.mxu0 0
      %2379 = vmatprep.subr.bf16.mxu0 0
      %2380 = vmatpush1.bf16.msra.mxu0 0
      %2381 = vmatprep.subr.bf16.mxu0 0
      %2382 = vmatpush1.bf16.msra.mxu0 0
      %2383 = vmatprep.subr.bf16.mxu0 0
      %2384 = vmatpush1.bf16.msra.mxu0 0
      %2385 = vmatprep.subr.bf16.mxu0 0
      %2386 = vmatpush1.bf16.msra.mxu0 0
      %2387 = vmatprep.subr.bf16.mxu0 0
      %2388 = vmatpush1.bf16.msra.mxu0 0
      %2389 = vmatprep.subr.bf16.mxu0 0
      %2390 = vmatpush1.bf16.msra.mxu0 0
      %2391 = vmatprep.subr.bf16.mxu0 0
      %2392 = vmatpush1.bf16.msra.mxu0 0
      %2393 = vmatprep.subr.bf16.mxu0 0
      %2394 = vmatpush1.bf16.msra.mxu0 0
      %2395 = vmatprep.subr.bf16.mxu0 0
      %2396 = vmatpush1.bf16.msra.mxu0 0
      %2397 = vmatprep.subr.bf16.mxu0 0
      %2398 = vmatpush1.bf16.msra.mxu0 0
      %2399 = vmatprep.subr.bf16.mxu0 0
      %2400 = vmatpush1.bf16.msra.mxu0 0
      %2401 = vmatprep.subr.bf16.mxu0 0
      %2402 = vmatpush1.bf16.msra.mxu0 0
      %2403 = vmatprep.subr.bf16.mxu0 0
      %2404 = vmatpush1.bf16.msra.mxu0 0
      %2405 = vmatprep.subr.bf16.mxu0 0
      %2406 = vmatpush1.bf16.msra.mxu0 0
      %2407 = vmatprep.mubr.bf16.mxu0 0
      %2408 = vmatmul.mubr.bf16.gmra.mrb[0].mxu0 %v2373
      %v2409 = vpop.f32.mrb[0].mxu0
      %v2410 = vadd.f32 0.0, %v2409
      %v2411 = vpop.f32.mrb[0].mxu0
      %v2412 = vpop.f32.mrb[0].mxu0
      %v2413 = vadd.f32 0.0, %v2412
      %v2414 = vpop.f32.mrb[0].mxu0
      %2415 = vdwg.mxu0
      %2418 = vrot.lane.b32.xlu0 %v2322, 8
      %v2419 = vpop.permute.xlu0 %2418
      %2420 = vrot.lane.b32.xlu0 %v2325, 8
      %v2421 = vpop.permute.xlu0 %2420
      %2426 = vrot.lane.b32.xlu0 %v2366, 16
      %v2427 = vpop.permute.xlu0 %2426
      %2428 = vrot.lane.b32.xlu0 %v2369, 16
      %v2429 = vpop.permute.xlu0 %2428
      %2434 = vrot.lane.b32.xlu0 %v2410, 24
      %v2435 = vpop.permute.xlu0 %2434
      %2436 = vrot.lane.b32.xlu0 %v2413, 24
      %v2437 = vpop.permute.xlu0 %2436
      %v2440 = vsel %vm1012, %v2278, %v2419
      %v2441 = vsel %vm1012, %v2281, %v2421
      %v2442 = vsel %vm1201, %v2440, %v2427
      %v2443 = vsel %vm1201, %v2441, %v2429
      %v2444 = vsel %vm1498, %v2442, %v2435
      %v2445 = vsel %vm1498, %v2443, %v2437
      %v2446 = vld [vmem:[%s634 + $0xc] sm:$0xf]
      %v2447 = vld [vmem:[%s634 + $0x1c] sm:$0xf]
      %v2448 = vld [vmem:[%s634 + $0x2c] sm:$0xf]
      %v2449 = vld [vmem:[%s634 + $0x3c] sm:$0xf]
      %v2450 = vpack.c.bf16 %v2445, %v2444
      %v2451 = vld [vmem:[%s638 + $0x3] sm:$0x1]
      %v2453 = vlaneseq
      %v2454 = vshrl.u32 %v2453, 7
      %v2455 = vsub.s32 0, %v2454
      %v2456 = vrot.slane %v2451, %v2455
      %v2462 = vunpack.c.l.b16 %v2446
      %v2463 = vunpack.c.l.b16 %v2447
      %v2464 = vunpack.c.l.b16 %v2448
      %v2465 = vunpack.c.l.b16 %v2449
      %v2466 = vpack.c.b16 %v2463, %v2462
      %v2467 = vpack.c.b16 %v2465, %v2464
      %v2471 = vsel %vm1525, %v2450, 0
      %2473 = vmatprep.subr.bf16.mxu0 0
      %2474 = vmatpush1.bf16.msra.mxu0 %v2466
      %2475 = vmatprep.subr.bf16.mxu0 0
      %2476 = vmatpush1.bf16.msra.mxu0 %v2467
      %2477 = vmatprep.subr.bf16.mxu0 0
      %2478 = vmatpush1.bf16.msra.mxu0 0
      %2479 = vmatprep.subr.bf16.mxu0 0
      %2480 = vmatpush1.bf16.msra.mxu0 0
      %2481 = vmatprep.subr.bf16.mxu0 0
      %2482 = vmatpush1.bf16.msra.mxu0 0
      %2483 = vmatprep.subr.bf16.mxu0 0
      %2484 = vmatpush1.bf16.msra.mxu0 0
      %2485 = vmatprep.subr.bf16.mxu0 0
      %2486 = vmatpush1.bf16.msra.mxu0 0
      %2487 = vmatprep.subr.bf16.mxu0 0
      %2488 = vmatpush1.bf16.msra.mxu0 0
      %2489 = vmatprep.subr.bf16.mxu0 0
      %2490 = vmatpush1.bf16.msra.mxu0 0
      %2491 = vmatprep.subr.bf16.mxu0 0
      %2492 = vmatpush1.bf16.msra.mxu0 0
      %2493 = vmatprep.subr.bf16.mxu0 0
      %2494 = vmatpush1.bf16.msra.mxu0 0
      %2495 = vmatprep.subr.bf16.mxu0 0
      %2496 = vmatpush1.bf16.msra.mxu0 0
      %2497 = vmatprep.subr.bf16.mxu0 0
      %2498 = vmatpush1.bf16.msra.mxu0 0
      %2499 = vmatprep.subr.bf16.mxu0 0
      %2500 = vmatpush1.bf16.msra.mxu0 0
      %2501 = vmatprep.subr.bf16.mxu0 0
      %2502 = vmatpush1.bf16.msra.mxu0 0
      %2503 = vmatprep.subr.bf16.mxu0 0
      %2504 = vmatpush1.bf16.msra.mxu0 0
      %2505 = vmatprep.mubr.bf16.mxu0 0
      %2506 = vmatmul.mubr.bf16.gmra.mrb[0].mxu0 %v2471
      %v2507 = vpop.f32.mrb[0].mxu0
      %v2508 = vadd.f32 %v2456, %v2507
      %v2509 = vpop.f32.mrb[0].mxu0
      %v2510 = vpop.f32.mrb[0].mxu0
      %v2511 = vadd.f32 %v2456, %v2510
      %v2512 = vpop.f32.mrb[0].mxu0
      %2513 = vdwg.mxu0
      %v2514 = vadd.f32 %v1614, %v2508
      %v2515 = vadd.f32 %v1615, %v2511
      %s2516 = scalar_lea.vmem %s658, 1
      %v2517 = vld [vmem:[%s2516] sm:$0x1]
      %s2518 = scalar_lea.vmem %s662, 1
      %v2519 = vld [vmem:[%s2518] sm:$0x1]
      %2520 = vadd.xlane.f32.xlu0 %v2514
      %v2521 = vpop.xlane.xlu0 %2520
      %2522 = vadd.xlane.f32.xlu0 %v2515
      %v2523 = vpop.xlane.xlu0 %2522
      %v2524 = vmul.f32 %v2514, %v2514
      %v2525 = vmul.f32 %v2515, %v2515
      %2526 = vadd.xlane.f32.xlu0 %v2524
      %v2527 = vpop.xlane.xlu0 %2526
      %2528 = vadd.xlane.f32.xlu0 %v2525
      %v2529 = vpop.xlane.xlu0 %2528
      %v2530 = vmul.f32 %v2521, 0.03125
      %v2531 = vmul.f32 %v2523, 0.03125
      %v2532 = vmul.f32 %v2527, 0.03125
      %v2533 = vmul.f32 %v2529, 0.03125
      %v2534 = vmul.f32 %v2530, %v2530
      %v2535 = vmul.f32 %v2531, %v2531
      %v2536 = vsub.f32 %v2532, %v2534
      %v2537 = vsub.f32 %v2533, %v2535
      %v2538 = vsub.f32 %v2514, %v2530
      %v2539 = vsub.f32 %v2515, %v2531
      %v2540 = vadd.f32 %v2536, 1e-05
      %v2541 = vadd.f32 %v2537, 1e-05
      %v2542 = vrsqrt.pop %v2540
      %v2543 = vrsqrt.pop %v2541
      %v2544 = vmul.f32 %v2538, %v2542
      %v2545 = vmul.f32 %v2539, %v2543
      %v2547 = vlaneseq
      %v2548 = vshrl.u32 %v2547, 7
      %v2549 = vsub.s32 0, %v2548
      %v2550 = vrot.slane %v2517, %v2549
      %v2552 = vmul.f32 %v2544, %v2550
      %v2553 = vmul.f32 %v2545, %v2550
      %v2555 = vlaneseq
      %v2556 = vshrl.u32 %v2555, 7
      %v2557 = vsub.s32 0, %v2556
      %v2558 = vrot.slane %v2519, %v2557
      %v2560 = vadd.f32 %v2552, %v2558
      %v2561 = vadd.f32 %v2553, %v2558
      %v2562 = vpack.c.bf16 %v2561, %v2560
      %v2563 = vld [vmem:[%s643] sm:$0xf]
      %v2564 = vld [vmem:[%s643 + $0x4] sm:$0xf]
      %v2565 = vld [vmem:[%s643 + $0x8] sm:$0xf]
      %v2566 = vld [vmem:[%s643 + $0xc] sm:$0xf]
      %v2567 = vld [vmem:[%s643 + $0x10] sm:$0xf]
      %v2568 = vld [vmem:[%s643 + $0x14] sm:$0xf]
      %v2569 = vld [vmem:[%s643 + $0x18] sm:$0xf]
      %v2570 = vld [vmem:[%s643 + $0x1c] sm:$0xf]
      %v2571 = vld [vmem:[%s643 + $0x20] sm:$0xf]
      %v2572 = vld [vmem:[%s643 + $0x24] sm:$0xf]
      %v2573 = vld [vmem:[%s643 + $0x28] sm:$0xf]
      %v2574 = vld [vmem:[%s643 + $0x2c] sm:$0xf]
      %v2575 = vld [vmem:[%s643 + $0x30] sm:$0xf]
      %v2576 = vld [vmem:[%s643 + $0x34] sm:$0xf]
      %v2577 = vld [vmem:[%s643 + $0x38] sm:$0xf]
      %v2578 = vld [vmem:[%s643 + $0x3c] sm:$0xf]
      %v2579 = vld [vmem:[%s646] sm:$0x1]
      %v2581 = vlaneseq
      %v2582 = vshrl.u32 %v2581, 7
      %v2583 = vsub.s32 0, %v2582
      %v2584 = vrot.slane %v2579, %v2583
      %v2602 = vunpack.c.l.b16 %v2563
      %v2603 = vunpack.c.l.b16 %v2564
      %v2604 = vunpack.c.l.b16 %v2565
      %v2605 = vunpack.c.l.b16 %v2566
      %v2606 = vunpack.c.l.b16 %v2567
      %v2607 = vunpack.c.l.b16 %v2568
      %v2608 = vunpack.c.l.b16 %v2569
      %v2609 = vunpack.c.l.b16 %v2570
      %v2610 = vunpack.c.l.b16 %v2571
      %v2611 = vunpack.c.l.b16 %v2572
      %v2612 = vunpack.c.l.b16 %v2573
      %v2613 = vunpack.c.l.b16 %v2574
      %v2614 = vunpack.c.l.b16 %v2575
      %v2615 = vunpack.c.l.b16 %v2576
      %v2616 = vunpack.c.l.b16 %v2577
      %v2617 = vunpack.c.l.b16 %v2578
      %v2618 = vpack.c.b16 %v2603, %v2602
      %v2619 = vpack.c.b16 %v2605, %v2604
      %v2620 = vpack.c.b16 %v2607, %v2606
      %v2621 = vpack.c.b16 %v2609, %v2608
      %v2622 = vpack.c.b16 %v2611, %v2610
      %v2623 = vpack.c.b16 %v2613, %v2612
      %v2624 = vpack.c.b16 %v2615, %v2614
      %v2625 = vpack.c.b16 %v2617, %v2616
      %2634 = vmatprep.subr.bf16.mxu0 0
      %2635 = vmatpush1.bf16.msra.mxu0 %v2618
      %2636 = vmatprep.subr.bf16.mxu0 0
      %2637 = vmatpush1.bf16.msra.mxu0 %v2619
      %2638 = vmatprep.subr.bf16.mxu0 0
      %2639 = vmatpush1.bf16.msra.mxu0 %v2620
      %2640 = vmatprep.subr.bf16.mxu0 0
      %2641 = vmatpush1.bf16.msra.mxu0 %v2621
      %2642 = vmatprep.subr.bf16.mxu0 0
      %2643 = vmatpush1.bf16.msra.mxu0 %v2622
      %2644 = vmatprep.subr.bf16.mxu0 0
      %2645 = vmatpush1.bf16.msra.mxu0 %v2623
      %2646 = vmatprep.subr.bf16.mxu0 0
      %2647 = vmatpush1.bf16.msra.mxu0 %v2624
      %2648 = vmatprep.subr.bf16.mxu0 0
      %2649 = vmatpush1.bf16.msra.mxu0 %v2625
      %2650 = vmatprep.subr.bf16.mxu0 0
      %2651 = vmatpush1.bf16.msra.mxu0 0
      %2652 = vmatprep.subr.bf16.mxu0 0
      %2653 = vmatpush1.bf16.msra.mxu0 0
      %2654 = vmatprep.subr.bf16.mxu0 0
      %2655 = vmatpush1.bf16.msra.mxu0 0
      %2656 = vmatprep.subr.bf16.mxu0 0
      %2657 = vmatpush1.bf16.msra.mxu0 0
      %2658 = vmatprep.subr.bf16.mxu0 0
      %2659 = vmatpush1.bf16.msra.mxu0 0
      %2660 = vmatprep.subr.bf16.mxu0 0
      %2661 = vmatpush1.bf16.msra.mxu0 0
      %2662 = vmatprep.subr.bf16.mxu0 0
      %2663 = vmatpush1.bf16.msra.mxu0 0
      %2664 = vmatprep.subr.bf16.mxu0 0
      %2665 = vmatpush1.bf16.msra.mxu0 0
      %2666 = vmatprep.mubr.bf16.mxu0 0
      %2667 = vmatmul.mubr.bf16.gmra.mrb[0].mxu0 %v2562
      %v2668 = vpop.f32.mrb[0].mxu0
      %v2669 = vadd.f32 %v2584, %v2668
      %v2670 = vpop.f32.mrb[0].mxu0
      %v2671 = vpop.f32.mrb[0].mxu0
      %v2672 = vadd.f32 %v2584, %v2671
      %v2673 = vpop.f32.mrb[0].mxu0
      %2674 = vdwg.mxu0
      %v2675 = vmax.f32 %v2669, 0.0
      %v2676 = vmax.f32 %v2672, 0.0
      %v2677 = vpack.c.bf16 %v2676, %v2675
      %v2678 = vld [vmem:[%s651] sm:$0xf]
      %v2679 = vld [vmem:[%s651 + $0x4] sm:$0xf]
      %v2680 = vld [vmem:[%s651 + $0x8] sm:$0xf]
      %v2681 = vld [vmem:[%s651 + $0xc] sm:$0xf]
      %v2682 = vld [vmem:[%s651 + $0x10] sm:$0xf]
      %v2683 = vld [vmem:[%s651 + $0x14] sm:$0xf]
      %v2684 = vld [vmem:[%s651 + $0x18] sm:$0xf]
      %v2685 = vld [vmem:[%s651 + $0x1c] sm:$0xf]
      %v2686 = vld [vmem:[%s651 + $0x20] sm:$0xf]
      %v2687 = vld [vmem:[%s651 + $0x24] sm:$0xf]
      %v2688 = vld [vmem:[%s651 + $0x28] sm:$0xf]
      %v2689 = vld [vmem:[%s651 + $0x2c] sm:$0xf]
      %v2690 = vld [vmem:[%s651 + $0x30] sm:$0xf]
      %v2691 = vld [vmem:[%s651 + $0x34] sm:$0xf]
      %v2692 = vld [vmem:[%s651 + $0x38] sm:$0xf]
      %v2693 = vld [vmem:[%s651 + $0x3c] sm:$0xf]
      %v2694 = vld [vmem:[%s654] sm:$0x1]
      %v2696 = vlaneseq
      %v2697 = vshrl.u32 %v2696, 7
      %v2698 = vsub.s32 0, %v2697
      %v2699 = vrot.slane %v2694, %v2698
      %v2717 = vunpack.c.l.b16 %v2678
      %v2718 = vunpack.c.l.b16 %v2679
      %v2719 = vunpack.c.l.b16 %v2680
      %v2720 = vunpack.c.l.b16 %v2681
      %v2721 = vunpack.c.l.b16 %v2682
      %v2722 = vunpack.c.l.b16 %v2683
      %v2723 = vunpack.c.l.b16 %v2684
      %v2724 = vunpack.c.l.b16 %v2685
      %v2725 = vunpack.c.l.b16 %v2686
      %v2726 = vunpack.c.l.b16 %v2687
      %v2727 = vunpack.c.l.b16 %v2688
      %v2728 = vunpack.c.l.b16 %v2689
      %v2729 = vunpack.c.l.b16 %v2690
      %v2730 = vunpack.c.l.b16 %v2691
      %v2731 = vunpack.c.l.b16 %v2692
      %v2732 = vunpack.c.l.b16 %v2693
      %v2733 = vpack.c.b16 %v2718, %v2717
      %v2734 = vpack.c.b16 %v2720, %v2719
      %v2735 = vpack.c.b16 %v2722, %v2721
      %v2736 = vpack.c.b16 %v2724, %v2723
      %v2737 = vpack.c.b16 %v2726, %v2725
      %v2738 = vpack.c.b16 %v2728, %v2727
      %v2739 = vpack.c.b16 %v2730, %v2729
      %v2740 = vpack.c.b16 %v2732, %v2731
      %2749 = vmatprep.subr.bf16.mxu0 0
      %2750 = vmatpush1.bf16.msra.mxu0 %v2733
      %2751 = vmatprep.subr.bf16.mxu0 0
      %2752 = vmatpush1.bf16.msra.mxu0 %v2734
      %2753 = vmatprep.subr.bf16.mxu0 0
      %2754 = vmatpush1.bf16.msra.mxu0 %v2735
      %2755 = vmatprep.subr.bf16.mxu0 0
      %2756 = vmatpush1.bf16.msra.mxu0 %v2736
      %2757 = vmatprep.subr.bf16.mxu0 0
      %2758 = vmatpush1.bf16.msra.mxu0 %v2737
      %2759 = vmatprep.subr.bf16.mxu0 0
      %2760 = vmatpush1.bf16.msra.mxu0 %v2738
      %2761 = vmatprep.subr.bf16.mxu0 0
      %2762 = vmatpush1.bf16.msra.mxu0 %v2739
      %2763 = vmatprep.subr.bf16.mxu0 0
      %2764 = vmatpush1.bf16.msra.mxu0 %v2740
      %2765 = vmatprep.subr.bf16.mxu0 0
      %2766 = vmatpush1.bf16.msra.mxu0 0
      %2767 = vmatprep.subr.bf16.mxu0 0
      %2768 = vmatpush1.bf16.msra.mxu0 0
      %2769 = vmatprep.subr.bf16.mxu0 0
      %2770 = vmatpush1.bf16.msra.mxu0 0
      %2771 = vmatprep.subr.bf16.mxu0 0
      %2772 = vmatpush1.bf16.msra.mxu0 0
      %2773 = vmatprep.subr.bf16.mxu0 0
      %2774 = vmatpush1.bf16.msra.mxu0 0
      %2775 = vmatprep.subr.bf16.mxu0 0
      %2776 = vmatpush1.bf16.msra.mxu0 0
      %2777 = vmatprep.subr.bf16.mxu0 0
      %2778 = vmatpush1.bf16.msra.mxu0 0
      %2779 = vmatprep.subr.bf16.mxu0 0
      %2780 = vmatpush1.bf16.msra.mxu0 0
      %2781 = vmatprep.mubr.bf16.mxu0 0
      %2782 = vmatmul.mubr.bf16.gmra.mrb[0].mxu0 %v2677
      %v2783 = vpop.f32.mrb[0].mxu0
      %v2784 = vadd.f32 %v2699, %v2783
      %v2785 = vpop.f32.mrb[0].mxu0
      %v2786 = vpop.f32.mrb[0].mxu0
      %v2787 = vadd.f32 %v2699, %v2786
      %v2788 = vpop.f32.mrb[0].mxu0
      %2789 = vdwg.mxu0
      %v2790 = vadd.f32 %v2560, %v2784
      %v2791 = vadd.f32 %v2561, %v2787
      %s2792 = scalar_lea.vmem %s658, 2
      %v2793 = vld [vmem:[%s2792] sm:$0x1]
      %s2794 = scalar_lea.vmem %s662, 2
      %v2795 = vld [vmem:[%s2794] sm:$0x1]
      %2796 = vadd.xlane.f32.xlu0 %v2790
      %v2797 = vpop.xlane.xlu0 %2796
      %2798 = vadd.xlane.f32.xlu0 %v2791
      %v2799 = vpop.xlane.xlu0 %2798
      %v2800 = vmul.f32 %v2790, %v2790
      %v2801 = vmul.f32 %v2791, %v2791
      %2802 = vadd.xlane.f32.xlu0 %v2800
      %v2803 = vpop.xlane.xlu0 %2802
      %2804 = vadd.xlane.f32.xlu0 %v2801
      %v2805 = vpop.xlane.xlu0 %2804
      %v2806 = vmul.f32 %v2797, 0.03125
      %v2807 = vmul.f32 %v2799, 0.03125
      %v2808 = vmul.f32 %v2803, 0.03125
      %v2809 = vmul.f32 %v2805, 0.03125
      %v2810 = vmul.f32 %v2806, %v2806
      %v2811 = vmul.f32 %v2807, %v2807
      %v2812 = vsub.f32 %v2808, %v2810
      %v2813 = vsub.f32 %v2809, %v2811
      %v2814 = vsub.f32 %v2790, %v2806
      %v2815 = vsub.f32 %v2791, %v2807
      %v2816 = vadd.f32 %v2812, 1e-05
      %v2817 = vadd.f32 %v2813, 1e-05
      %v2818 = vrsqrt.pop %v2816
      %v2819 = vrsqrt.pop %v2817
      %v2820 = vmul.f32 %v2814, %v2818
      %v2821 = vmul.f32 %v2815, %v2819
      %v2823 = vlaneseq
      %v2824 = vshrl.u32 %v2823, 7
      %v2825 = vsub.s32 0, %v2824
      %v2826 = vrot.slane %v2793, %v2825
      %v2828 = vmul.f32 %v2820, %v2826
      %v2829 = vmul.f32 %v2821, %v2826
      %v2831 = vlaneseq
      %v2832 = vshrl.u32 %v2831, 7
      %v2833 = vsub.s32 0, %v2832
      %v2834 = vrot.slane %v2795, %v2833
      %v2836 = vadd.f32 %v2828, %v2834
      %v2837 = vadd.f32 %v2829, %v2834
      %2838 = vst [vmem:[#allocation2] sm:$0xff] %v2836
      %2839 = vst [vmem:[#allocation2 + $0x8] sm:$0xff] %v2837
      %p2840 = scmp.eq.s32.totalorder %s27, 1
      // Predicated region
      $region89: #{forward.1} parent=83 // pred_check
        %p2841 = pneg %p2840
      $region90: #{forward.1} parent=83 // pred_check_branch
        %2843 = sbr.rel (%p2841) target = $region92
      $region91: #{forward.1} parent=83 // pred_region
        %v2844 = vld [vmem:[%s14] sm:$0x1]
        %v2845 = vld [vmem:[%s15] sm:$0x1]
        %2846 = vadd.xlane.f32.xlu0 %v2836
        %v2847 = vpop.xlane.xlu0 %2846
        %2848 = vadd.xlane.f32.xlu0 %v2837
        %v2849 = vpop.xlane.xlu0 %2848
        %v2850 = vmul.f32 %v2836, %v2836
        %v2851 = vmul.f32 %v2837, %v2837
        %2852 = vadd.xlane.f32.xlu0 %v2850
        %v2853 = vpop.xlane.xlu0 %2852
        %2854 = vadd.xlane.f32.xlu0 %v2851
        %v2855 = vpop.xlane.xlu0 %2854
        %v2856 = vmul.f32 %v2847, 0.03125
        %v2857 = vmul.f32 %v2849, 0.03125
        %v2858 = vmul.f32 %v2853, 0.03125
        %v2859 = vmul.f32 %v2855, 0.03125
        %v2860 = vmul.f32 %v2856, %v2856
        %v2861 = vmul.f32 %v2857, %v2857
        %v2862 = vsub.f32 %v2858, %v2860
        %v2863 = vsub.f32 %v2859, %v2861
        %v2864 = vsub.f32 %v2836, %v2856
        %v2865 = vsub.f32 %v2837, %v2857
        %v2866 = vadd.f32 %v2862, 1e-05
        %v2867 = vadd.f32 %v2863, 1e-05
        %v2868 = vrsqrt.pop %v2866
        %v2869 = vrsqrt.pop %v2867
        %v2870 = vmul.f32 %v2864, %v2868
        %v2871 = vmul.f32 %v2865, %v2869
        %v2873 = vlaneseq
        %v2874 = vshrl.u32 %v2873, 7
        %v2875 = vsub.s32 0, %v2874
        %v2876 = vrot.slane %v2844, %v2875
        %v2878 = vmul.f32 %v2870, %v2876
        %v2879 = vmul.f32 %v2871, %v2876
        %v2881 = vlaneseq
        %v2882 = vshrl.u32 %v2881, 7
        %v2883 = vsub.s32 0, %v2882
        %v2884 = vrot.slane %v2845, %v2883
        %v2886 = vadd.f32 %v2878, %v2884
        %v2887 = vadd.f32 %v2879, %v2884
        %2888 = vst [vmem:[%s16] sm:$0xff] %v2886
        %2889 = vst [vmem:[%s16 + $0x8] sm:$0xff] %v2887
      $region92: #{forward.1} parent=83 // pred_fallthru
        _
      // Predicated region
      $region93: #{forward.1} parent=83 // pred_check
        %p2890 = pneg %p426
      $region94: #{forward.1} parent=83 // pred_check_branch
        %2892 = sbr.rel (%p2890) target = $region96
      $region95: #{forward.1} parent=83 // pred_region
        _
      $region96: #{forward.1} parent=83 // pred_fallthru
        _
      // Predicated region
      $region97: #{forward.1} parent=83 // pred_check
        %p2893 = pneg %p426
      $region98: #{forward.1} parent=83 // pred_check_branch
        %2895 = sbr.rel (%p2893) target = $region100
      $region99: #{forward.1} parent=83 // pred_region
        _
      $region100: #{forward.1} parent=83 // pred_fallthru
        _
    $region84: #{forward.1} parent=5 // pred_fallthru
      _
    %p2896 = scmp.le.s32.totalorder 2, %s22
    // Predicated region
    $region101: #{forward.1} parent=5 // pred_check
      %p2897 = pneg %p2896
    $region102: #{forward.1} parent=5 // pred_check_branch
      %2899 = sbr.rel (%p2897) target = $region104
    $region103: #{forward.1} parent=5 // pred_region
      %s2900 = ssub.s32 %s22, 2
    $region104: #{forward.1} parent=5 // pred_fallthru
      _
  $region6: #{forward.1} parent=0 // loop_footer
    %s26 = sadd.s32 1, %s22
  $region7: #{forward.1} parent=0 // loop_footer_branch
    %21 = sbr.rel target = $region3
  $region8: #{forward.1} parent=0 // loop_exit
    _

</llo_original>
